<compile_context>
chip_gen: v7x
topology: tpu7x:2x2x1
jax: 0.10.0
libtpu: 0.0.40
codegen_flags: <defaults>
</compile_context>

<pallas_src>
import math

import jax
import jax.numpy as jnp
from jax import lax
from jax.experimental import pallas as pl
from jax.experimental.pallas import tpu as pltpu

# ------------------------- config (small, consistent with the module) -------
VOCAB = 100
HIDDEN = 32
N_HEADS = 2
HEAD_DIM = HIDDEN // N_HEADS
N_LAYERS = 2
FFN = 64
MAX_POS = 32
NUM_LABELS = 19          # BertForTokenClassification(..., num_labels=19) / CRF(num_labels)
LN_EPS = 1e-12

VMEM = pltpu.MemorySpace.VMEM


def _erf(x):
    # Abramowitz & Stegun 7.1.26 (max abs err ~1.5e-7).  Used instead of lax.erf so the
    # kernel only needs exp on the transcendental path.
    a1, a2, a3, a4, a5 = 0.254829592, -0.284496736, 1.421413741, -1.453152027, 1.061405429
    p = 0.3275911
    sgn = jnp.where(x >= 0.0, 1.0, -1.0)
    ax = jnp.abs(x)
    t = 1.0 / (1.0 + p * ax)
    poly = ((((a5 * t + a4) * t + a3) * t + a2) * t + a1) * t
    return sgn * (1.0 - poly * jnp.exp(-ax * ax))


# ----------------------------- the fused forward kernel ----------------------
def _bert_ner_kernel(x_ref, mask_ref, labels_ref,
                     embg_ref, embb_ref,
                     wqkv_ref, bqkv_ref, wo_ref, bo_ref, ln1g_ref, ln1b_ref,
                     w1_ref, b1_ref, w2_ref, b2_ref, ln2g_ref, ln2b_ref,
                     clsw_ref, clsb_ref, crfs_ref, crfe_ref, crft_ref,
                     logits_ref, llh_ref, tags_ref):
    B, S = mask_ref.shape
    L = crft_ref.shape[0]
    scale = 1.0 / math.sqrt(HEAD_DIM)
    bf16 = jnp.bfloat16
    f32 = jnp.float32

    def layernorm(h, g, b):
        mu = jnp.mean(h, axis=-1, keepdims=True)
        var = jnp.mean(jnp.square(h - mu), axis=-1, keepdims=True)
        return (h - mu) * lax.rsqrt(var + LN_EPS) * g + b

    def dense(a, w_bf16, bias):  # bf16 operands (cast once), f32 accumulation on the MXU
        return jnp.dot(a.astype(bf16), w_bf16, preferred_element_type=f32) + bias

    mask = mask_ref[...]                                     # [B, S] f32 (also gates CRF)
    attn_bias = ((1.0 - mask) * -10000.0)[:, None, :]        # [B, 1, S], hoisted

    # ---- embeddings LayerNorm (dropout = identity in eval mode) ----
    h = layernorm(x_ref[...], embg_ref[...], embb_ref[...])  # [B*S, H]

    # ---- transformer encoder layers ----
    for l in range(N_LAYERS):
        # fused QKV projection: one [B*S, H] x [H, 3H] matmul
        qkv = dense(h, wqkv_ref[l], bqkv_ref[l])             # [B*S, 3H] f32
        ctx_heads = []
        for hd in range(N_HEADS):                            # nH=2, short unrolled loop
            qo = hd * HEAD_DIM
            ko = HIDDEN + hd * HEAD_DIM
            vo = 2 * HIDDEN + hd * HEAD_DIM
            q = qkv[:, qo:qo + HEAD_DIM].reshape(B, S, HEAD_DIM).astype(bf16)
            k = qkv[:, ko:ko + HEAD_DIM].reshape(B, S, HEAD_DIM).astype(bf16)
            v = qkv[:, vo:vo + HEAD_DIM].reshape(B, S, HEAD_DIM).astype(bf16)
            s = jnp.einsum("bqd,bkd->bqk", q, k, preferred_element_type=f32) * scale
            s = s + attn_bias
            m = jnp.max(s, axis=-1, keepdims=True)
            p = jnp.exp(s - m)
            # divide moved to the EUP reciprocal slot (off the serial VPU chain)
            p = p * pl.reciprocal(jnp.sum(p, axis=-1, keepdims=True), approx=True)
            ctx_heads.append(
                jnp.einsum("bqk,bkd->bqd", p.astype(bf16), v, preferred_element_type=f32))
        # concatenated heads -> ONE output projection per layer, bias added once
        ctx = jnp.concatenate(ctx_heads, axis=-1).reshape(B * S, HIDDEN)
        attn_out = jnp.dot(ctx.astype(bf16), wo_ref[l],
                           preferred_element_type=f32) + bo_ref[l]
        h = layernorm(attn_out + h, ln1g_ref[l], ln1b_ref[l])

        ff = dense(h, w1_ref[l], b1_ref[l])
        ff = 0.5 * ff * (1.0 + _erf(ff * (1.0 / math.sqrt(2.0))))   # BERT erf-GELU
        ff = dense(ff, w2_ref[l], b2_ref[l])
        h = layernorm(ff + h, ln2g_ref[l], ln2b_ref[l])

    # ---- token-classification head (stored 2-D; wrapper reshapes to [B,S,L]) ----
    emis2 = dense(h, clsw_ref[...], clsb_ref[...])            # [B*S, L] f32
    logits_ref[...] = emis2
    emis = emis2.reshape(B, S, L)

    # ---- CRF: fused log-likelihood + Viterbi forward pass (torchcrf semantics) ----
    # Assumes mask[:, 0] == 1 for every sequence (torchcrf asserts this).
    labels = labels_ref[...]                                  # [B, S] int32
    start = crfs_ref[...]                                     # [1, L]
    end = crfe_ref[...]                                       # [1, L]
    trans = crft_ref[...]                                     # [L, L]

    iota_bl_f = lax.broadcasted_iota(jnp.int32, (B, L), 1).astype(f32)
    iota_bll_f = lax.broadcasted_iota(jnp.int32, (B, L, L), 1).astype(f32)
    # all label one-hots built once, outside the sequential chain
    oh_all = (lax.broadcasted_iota(jnp.int32, (B, S, L), 2)
              == labels[:, :, None]).astype(f32)              # [B, S, L]

    e0 = emis[:, 0, :]
    oh_prev = oh_all[:, 0, :]
    num = jnp.sum((start + e0) * oh_prev, axis=1, keepdims=True)   # [B, 1] gold-path score
    last_oh = oh_prev
    fscore = start + e0                                       # log-sum-exp forward  [B, L]
    vscore = fscore                                           # Viterbi forward      [B, L]
    history = []

    for t in range(1, S):
        oh_t = oh_all[:, t, :]                                # [B, L]
        e_t = emis[:, t, :]                                   # [B, L]
        m_t = mask[:, t][:, None]                             # [B, 1]
        valid = m_t > 0.0

        # gold-path numerator: tiny MXU dot + one lane reduce
        trans_s = jnp.sum(jnp.dot(oh_prev, trans, preferred_element_type=f32) * oh_t,
                          axis=1, keepdims=True)
        emis_s = jnp.sum(e_t * oh_t, axis=1, keepdims=True)
        num = num + (trans_s + emis_s) * m_t
        last_oh = jnp.where(valid, oh_t, last_oh)
        oh_prev = oh_t

        # shared lattice increment for both recursions
        te = trans[None, :, :] + e_t[:, None, :]              # [B, L, L]

        # partition function (log-sum-exp over previous tag)
        lat_f = fscore[:, :, None] + te
        mx = jnp.max(lat_f, axis=1)                           # [B, L]
        ls = jnp.log(jnp.sum(jnp.exp(lat_f - mx[:, None, :]), axis=1)) + mx
        fscore = jnp.where(valid, ls, fscore)

        # Viterbi (max over previous tag) + first-max backpointers
        lat_v = vscore[:, :, None] + te
        v_max = jnp.max(lat_v, axis=1)                        # [B, L]
        bp = jnp.min(jnp.where(lat_v >= v_max[:, None, :], iota_bll_f, float(L)), axis=1)
        vscore = jnp.where(valid, v_max, vscore)
        history.append(jnp.where(valid, bp, iota_bl_f))       # identity map at padded steps

    num = num + jnp.sum(end * last_oh, axis=1, keepdims=True)
    fscore = fscore + end
    mxf = jnp.max(fscore, axis=-1, keepdims=True)
    denom = jnp.log(jnp.sum(jnp.exp(fscore - mxf), axis=-1, keepdims=True)) + mxf
    llh_ref[...] = num - denom                                # [B, 1]

    # ---- Viterbi termination & backtrace ----
    vscore = vscore + end
    best = jnp.max(vscore, axis=1, keepdims=True)
    cur = jnp.min(jnp.where(vscore >= best, iota_bl_f, float(L)), axis=1)   # [B]
    cols = [None] * S
    cols[S - 1] = cur
    for t in range(S - 1, 0, -1):
        hist = history[t - 1]                                 # [B, L]
        sel = (iota_bl_f == cur[:, None]).astype(f32)
        cur = jnp.sum(sel * hist, axis=1)
        cols[t - 1] = cur
    tags = jnp.concatenate([c[:, None] for c in cols], axis=1)   # [B, S] (exact small ints)
    tags_ref[...] = tags.astype(jnp.int32)


# ------------------------------ parameters -----------------------------------
def init_params(key):
    keys = jax.random.split(key, 16)
    ki = iter(keys)

    def nrm(shape):
        return 0.02 * jax.random.normal(next(ki), shape, jnp.float32)

    def unif(shape):  # torchcrf initializes uniform(-0.1, 0.1)
        return jax.random.uniform(next(ki), shape, jnp.float32, -0.1, 0.1)

    return {
        "word_emb": nrm((VOCAB, HIDDEN)),
        "pos_emb": nrm((MAX_POS, HIDDEN)),
        "type_emb": nrm((2, HIDDEN)),
        "emb_ln_g": jnp.ones((1, HIDDEN), jnp.float32),
        "emb_ln_b": jnp.zeros((1, HIDDEN), jnp.float32),
        # fused QKV weight: wq | wk | wv along the output dim (head-major inside each)
        "wqkv": nrm((N_LAYERS, HIDDEN, 3 * HIDDEN)),
        "bqkv": jnp.zeros((N_LAYERS, 1, 3 * HIDDEN), jnp.float32),
        "wo": nrm((N_LAYERS, HIDDEN, HIDDEN)),
        "bo": jnp.zeros((N_LAYERS, 1, HIDDEN), jnp.float32),
        "ln1_g": jnp.ones((N_LAYERS, 1, HIDDEN), jnp.float32),
        "ln1_b": jnp.zeros((N_LAYERS, 1, HIDDEN), jnp.float32),
        "w1": nrm((N_LAYERS, HIDDEN, FFN)),
        "b1": jnp.zeros((N_LAYERS, 1, FFN), jnp.float32),
        "w2": nrm((N_LAYERS, FFN, HIDDEN)),
        "b2": jnp.zeros((N_LAYERS, 1, HIDDEN), jnp.float32),
        "ln2_g": jnp.ones((N_LAYERS, 1, HIDDEN), jnp.float32),
        "ln2_b": jnp.zeros((N_LAYERS, 1, HIDDEN), jnp.float32),
        "cls_w": nrm((HIDDEN, NUM_LABELS)),
        "cls_b": jnp.zeros((1, NUM_LABELS), jnp.float32),
        "crf_start": unif((1, NUM_LABELS)),
        "crf_end": unif((1, NUM_LABELS)),
        "crf_trans": unif((NUM_LABELS, NUM_LABELS)),
    }


# ------------------------------ model forward --------------------------------
class ModelOutput:
    def __init__(self, logits, labels, loss=None):
        self.logits = logits
        self.labels = labels
        self.loss = loss


@jax.jit
def _bert_ner_jit(params, input_ids, attention_mask, labels):
    B, S = input_ids.shape
    # Embedding gather stays in XLA (single fused HLO); everything after it runs
    # inside one Pallas kernel.
    x = (params["word_emb"][input_ids]
         + params["pos_emb"][jnp.arange(S)][None, :, :]
         + params["type_emb"][0][None, None, :]).reshape(B * S, HIDDEN)
    mask_f = attention_mask.astype(jnp.float32)
    bf16 = jnp.bfloat16

    args = (x.astype(jnp.float32), mask_f, labels.astype(jnp.int32),
            params["emb_ln_g"], params["emb_ln_b"],
            params["wqkv"].astype(bf16), params["bqkv"],
            params["wo"].astype(bf16), params["bo"],
            params["ln1_g"], params["ln1_b"],
            params["w1"].astype(bf16), params["b1"],
            params["w2"].astype(bf16), params["b2"],
            params["ln2_g"], params["ln2_b"],
            params["cls_w"].astype(bf16), params["cls_b"],
            params["crf_start"], params["crf_end"], params["crf_trans"])

    out_shape = (jax.ShapeDtypeStruct((B * S, NUM_LABELS), jnp.float32),  # logits (2-D slab)
                 jax.ShapeDtypeStruct((B, 1), jnp.float32),               # CRF log-lik
                 jax.ShapeDtypeStruct((B, S), jnp.int32))                 # Viterbi tags

    flops = int(
        N_LAYERS * (2 * B * S * HIDDEN * 3 * HIDDEN      # fused QKV
                    + 4 * B * S * S * HIDDEN             # QK^T + PV
                    + 2 * B * S * HIDDEN * HIDDEN        # output proj (single matmul)
                    + 4 * B * S * HIDDEN * FFN)          # FFN
        + 2 * B * S * HIDDEN * NUM_LABELS                # classifier
        + 8 * B * S * NUM_LABELS * NUM_LABELS)           # CRF lattice + gold-path dots
    transcendentals = int(N_LAYERS * (2 * B * S * S + B * S * FFN)
                          + 2 * B * S * NUM_LABELS * NUM_LABELS)
    bytes_accessed = int(sum(a.size * a.dtype.itemsize for a in args)
                         + sum(math.prod(o.shape) * jnp.dtype(o.dtype).itemsize
                               for o in out_shape))

    # TODO(synk): at production sizes add a "parallel" grid axis over batch/token tiles
    # (uses v7x's 2nd TensorCore) and stream per-layer weights from pl.ANY/HBM with
    # emit_pipeline -- the all-resident-VMEM design only scales on 128 MiB parts.
    logits2d, llh, decoded = pl.pallas_call(
        _bert_ner_kernel,
        out_shape=out_shape,
        in_specs=[pl.BlockSpec(memory_space=VMEM)] * len(args),
        out_specs=tuple(pl.BlockSpec(memory_space=VMEM) for _ in range(3)),
        cost_estimate=pl.CostEstimate(flops=flops,
                                      transcendentals=transcendentals,
                                      bytes_accessed=bytes_accessed),
    )(*args)

    logits = logits2d.reshape(B, S, NUM_LABELS)
    loss = -jnp.mean(llh)   # crf(..., reduction='mean'), negated
    return logits, decoded, loss


def bert_ner_forward(params, input_ids, attention_mask, labels=None):
    lbl = labels if labels is not None else jnp.zeros(input_ids.shape, jnp.int32)
    _raw_logits, decoded, loss = _bert_ner_jit(params, input_ids, attention_mask, lbl)
    # TODO(synk): torchcrf.decode returns variable-length Python lists; `decoded` is a
    # padded [B, S] int32 array, valid only where attention_mask == 1 (and, like the
    # original module, the .logits field carries the decoded tags, not raw logits).
    return ModelOutput(decoded, labels, loss if labels is not None else None)


# ------------------------------ main ------------------------------------------
if __name__ == "__main__":
    key = jax.random.PRNGKey(0)
    pkey, ikey, lkey = jax.random.split(key, 3)
    params = init_params(pkey)

    B, S = 2, 8
    input_ids = jax.random.randint(ikey, (B, S), 0, VOCAB, dtype=jnp.int32)
    attention_mask = jnp.array([[1, 1, 1, 1, 1, 1, 1, 1],
                                [1, 1, 1, 1, 1, 0, 0, 0]], dtype=jnp.int32)
    labels = jax.random.randint(lkey, (B, S), 0, NUM_LABELS, dtype=jnp.int32)

    out = bert_ner_forward(params, input_ids, attention_mask, labels)
    jax.block_until_ready((out.logits, out.loss))
    print("KERNEL_OK")
</pallas_src>

<mosaic_0001>
module attributes {stable_mosaic.version = 11 : i64} {
  func.func @_bert_ner_kernel(%arg0: memref<16x32xf32, #tpu.memory_space<vmem>>, %arg1: memref<2x8xf32, #tpu.memory_space<vmem>>, %arg2: memref<2x8xi32, #tpu.memory_space<vmem>>, %arg3: memref<1x32xf32, #tpu.memory_space<vmem>>, %arg4: memref<1x32xf32, #tpu.memory_space<vmem>>, %arg5: memref<2x32x96xbf16, #tpu.memory_space<vmem>>, %arg6: memref<2x1x96xf32, #tpu.memory_space<vmem>>, %arg7: memref<2x32x32xbf16, #tpu.memory_space<vmem>>, %arg8: memref<2x1x32xf32, #tpu.memory_space<vmem>>, %arg9: memref<2x1x32xf32, #tpu.memory_space<vmem>>, %arg10: memref<2x1x32xf32, #tpu.memory_space<vmem>>, %arg11: memref<2x32x64xbf16, #tpu.memory_space<vmem>>, %arg12: memref<2x1x64xf32, #tpu.memory_space<vmem>>, %arg13: memref<2x64x32xbf16, #tpu.memory_space<vmem>>, %arg14: memref<2x1x32xf32, #tpu.memory_space<vmem>>, %arg15: memref<2x1x32xf32, #tpu.memory_space<vmem>>, %arg16: memref<2x1x32xf32, #tpu.memory_space<vmem>>, %arg17: memref<32x19xbf16, #tpu.memory_space<vmem>>, %arg18: memref<1x19xf32, #tpu.memory_space<vmem>>, %arg19: memref<1x19xf32, #tpu.memory_space<vmem>>, %arg20: memref<1x19xf32, #tpu.memory_space<vmem>>, %arg21: memref<19x19xf32, #tpu.memory_space<vmem>>, %arg22: memref<16x19xf32, #tpu.memory_space<vmem>>, %arg23: memref<2x1xf32, #tpu.memory_space<vmem>>, %arg24: memref<2x8xi32, #tpu.memory_space<vmem>>) attributes {dimension_semantics = [], scalar_prefetch = 0 : i64, scratch_operands = 0 : i64, tpu.core_type = #tpu.core_type<tc>} {
    %c0 = arith.constant 0 : index
    %c0_0 = arith.constant 0 : index
    %0 = vector.load %arg1[%c0, %c0_0] : memref<2x8xf32, #tpu.memory_space<vmem>>, vector<2x8xf32>
    %cst = arith.constant 1.000000e+00 : f32
    %1 = vector.broadcast %cst : f32 to vector<2x8xf32>
    %2 = arith.subf %1, %0 : vector<2x8xf32>
    %cst_1 = arith.constant -1.000000e+04 : f32
    %3 = vector.broadcast %cst_1 : f32 to vector<2x8xf32>
    %4 = arith.mulf %2, %3 : vector<2x8xf32>
    %5 = vector.shape_cast %4 : vector<2x8xf32> to vector<2x1x8xf32>
    %c0_2 = arith.constant 0 : index
    %c0_3 = arith.constant 0 : index
    %6 = vector.load %arg0[%c0_2, %c0_3] : memref<16x32xf32, #tpu.memory_space<vmem>>, vector<16x32xf32>
    %c0_4 = arith.constant 0 : index
    %c0_5 = arith.constant 0 : index
    %7 = vector.load %arg3[%c0_4, %c0_5] : memref<1x32xf32, #tpu.memory_space<vmem>>, vector<1x32xf32>
    %c0_6 = arith.constant 0 : index
    %c0_7 = arith.constant 0 : index
    %8 = vector.load %arg4[%c0_6, %c0_7] : memref<1x32xf32, #tpu.memory_space<vmem>>, vector<1x32xf32>
    %cst_8 = arith.constant dense<0.000000e+00> : vector<16xf32>
    %9 = vector.multi_reduction <add>, %6, %cst_8 [1] : vector<16x32xf32> to vector<16xf32>
    %10 = vector.shape_cast %9 : vector<16xf32> to vector<16x1xf32>
    %cst_9 = arith.constant 3.200000e+01 : f32
    %11 = vector.broadcast %cst_9 : f32 to vector<16x1xf32>
    %12 = arith.divf %10, %11 : vector<16x1xf32>
    %13 = vector.broadcast %12 : vector<16x1xf32> to vector<16x32xf32>
    %14 = arith.subf %6, %13 : vector<16x32xf32>
    %15 = arith.mulf %14, %14 : vector<16x32xf32>
    %cst_10 = arith.constant dense<0.000000e+00> : vector<16xf32>
    %16 = vector.multi_reduction <add>, %15, %cst_10 [1] : vector<16x32xf32> to vector<16xf32>
    %17 = vector.shape_cast %16 : vector<16xf32> to vector<16x1xf32>
    %cst_11 = arith.constant 3.200000e+01 : f32
    %18 = vector.broadcast %cst_11 : f32 to vector<16x1xf32>
    %19 = arith.divf %17, %18 : vector<16x1xf32>
    %20 = vector.broadcast %12 : vector<16x1xf32> to vector<16x32xf32>
    %21 = arith.subf %6, %20 : vector<16x32xf32>
    %cst_12 = arith.constant 9.99999996E-13 : f32
    %22 = vector.broadcast %cst_12 : f32 to vector<16x1xf32>
    %23 = arith.addf %19, %22 : vector<16x1xf32>
    %24 = math.rsqrt %23 : vector<16x1xf32>
    %25 = vector.broadcast %24 : vector<16x1xf32> to vector<16x32xf32>
    %26 = arith.mulf %21, %25 : vector<16x32xf32>
    %27 = vector.broadcast %7 : vector<1x32xf32> to vector<16x32xf32>
    %28 = arith.mulf %26, %27 : vector<16x32xf32>
    %29 = vector.broadcast %8 : vector<1x32xf32> to vector<16x32xf32>
    %30 = arith.addf %28, %29 : vector<16x32xf32>
    %c0_13 = arith.constant 0 : index
    %c0_14 = arith.constant 0 : index
    %c0_15 = arith.constant 0 : index
    %31 = vector.load %arg5[%c0_13, %c0_14, %c0_15] : memref<2x32x96xbf16, #tpu.memory_space<vmem>>, vector<1x32x96xbf16>
    %32 = vector.shape_cast %31 : vector<1x32x96xbf16> to vector<32x96xbf16>
    %c0_16 = arith.constant 0 : index
    %c0_17 = arith.constant 0 : index
    %c0_18 = arith.constant 0 : index
    %33 = vector.load %arg6[%c0_16, %c0_17, %c0_18] : memref<2x1x96xf32, #tpu.memory_space<vmem>>, vector<1x1x96xf32>
    %34 = vector.shape_cast %33 : vector<1x1x96xf32> to vector<1x96xf32>
    %35 = arith.truncf %30 : vector<16x32xf32> to vector<16x32xbf16>
    %cst_19 = arith.constant dense<0.000000e+00> : vector<16x96xf32>
    %36 = tpu.matmul %35, %32, %cst_19 {dimension_numbers = #tpu.dot_dimension_numbers<[1], [0], [0], [1], [0, 0, 1, 1], [], []>} : vector<16x32xbf16>, vector<32x96xbf16>, vector<16x96xf32> -> vector<16x96xf32>
    %37 = vector.broadcast %34 : vector<1x96xf32> to vector<16x96xf32>
    %38 = arith.addf %36, %37 : vector<16x96xf32>
    %39 = vector.extract_strided_slice %38 {offsets = [0, 0], sizes = [16, 16], strides = [1, 1]} : vector<16x96xf32> to vector<16x16xf32>
    %40 = vector.shape_cast %39 : vector<16x16xf32> to vector<2x8x16xf32>
    %41 = arith.truncf %40 : vector<2x8x16xf32> to vector<2x8x16xbf16>
    %42 = vector.extract_strided_slice %38 {offsets = [0, 32], sizes = [16, 16], strides = [1, 1]} : vector<16x96xf32> to vector<16x16xf32>
    %43 = vector.shape_cast %42 : vector<16x16xf32> to vector<2x8x16xf32>
    %44 = arith.truncf %43 : vector<2x8x16xf32> to vector<2x8x16xbf16>
    %45 = vector.extract_strided_slice %38 {offsets = [0, 64], sizes = [16, 16], strides = [1, 1]} : vector<16x96xf32> to vector<16x16xf32>
    %46 = vector.shape_cast %45 : vector<16x16xf32> to vector<2x8x16xf32>
    %47 = arith.truncf %46 : vector<2x8x16xf32> to vector<2x8x16xbf16>
    "tpu.trace_start"() <{level = 10 : i32, message = "bqd,bkd->bqk"}> : () -> ()
    %cst_20 = arith.constant dense<0.000000e+00> : vector<2x8x8xf32>
    %48 = tpu.matmul %41, %44, %cst_20 {dimension_numbers = #tpu.dot_dimension_numbers<[2], [2], [1], [1], [0, 0, 0, 1, 1, 1], [0], [0]>} : vector<2x8x16xbf16>, vector<2x8x16xbf16>, vector<2x8x8xf32> -> vector<2x8x8xf32>
    "tpu.trace_stop"() : () -> ()
    %cst_21 = arith.constant 2.500000e-01 : f32
    %49 = vector.broadcast %cst_21 : f32 to vector<2x8x8xf32>
    %50 = arith.mulf %48, %49 : vector<2x8x8xf32>
    %51 = vector.broadcast %5 : vector<2x1x8xf32> to vector<2x8x8xf32>
    %52 = arith.addf %50, %51 : vector<2x8x8xf32>
    %cst_22 = arith.constant dense<0xFF800000> : vector<2x8xf32>
    %53 = vector.multi_reduction <maximumf>, %52, %cst_22 [2] : vector<2x8x8xf32> to vector<2x8xf32>
    %54 = vector.shape_cast %53 : vector<2x8xf32> to vector<2x8x1xf32>
    %55 = vector.broadcast %54 : vector<2x8x1xf32> to vector<2x8x8xf32>
    %56 = arith.subf %52, %55 : vector<2x8x8xf32>
    %57 = math.exp %56 : vector<2x8x8xf32>
    %cst_23 = arith.constant dense<0.000000e+00> : vector<2x8xf32>
    %58 = vector.multi_reduction <add>, %57, %cst_23 [2] : vector<2x8x8xf32> to vector<2x8xf32>
    %59 = vector.shape_cast %58 : vector<2x8xf32> to vector<2x8x1xf32>
    %60 = tpu.reciprocal %59 {approx = true} : vector<2x8x1xf32> -> vector<2x8x1xf32>
    %61 = vector.broadcast %60 : vector<2x8x1xf32> to vector<2x8x8xf32>
    %62 = arith.mulf %57, %61 : vector<2x8x8xf32>
    %63 = arith.truncf %62 : vector<2x8x8xf32> to vector<2x8x8xbf16>
    "tpu.trace_start"() <{level = 10 : i32, message = "bqk,bkd->bqd"}> : () -> ()
    %cst_24 = arith.constant dense<0.000000e+00> : vector<2x8x16xf32>
    %64 = tpu.matmul %63, %47, %cst_24 {dimension_numbers = #tpu.dot_dimension_numbers<[2], [1], [1], [2], [0, 0, 0, 1, 1, 2], [0], [0]>} : vector<2x8x8xbf16>, vector<2x8x16xbf16>, vector<2x8x16xf32> -> vector<2x8x16xf32>
    "tpu.trace_stop"() : () -> ()
    %65 = vector.extract_strided_slice %38 {offsets = [0, 16], sizes = [16, 16], strides = [1, 1]} : vector<16x96xf32> to vector<16x16xf32>
    %66 = vector.shape_cast %65 : vector<16x16xf32> to vector<2x8x16xf32>
    %67 = arith.truncf %66 : vector<2x8x16xf32> to vector<2x8x16xbf16>
    %68 = vector.extract_strided_slice %38 {offsets = [0, 48], sizes = [16, 16], strides = [1, 1]} : vector<16x96xf32> to vector<16x16xf32>
    %69 = vector.shape_cast %68 : vector<16x16xf32> to vector<2x8x16xf32>
    %70 = arith.truncf %69 : vector<2x8x16xf32> to vector<2x8x16xbf16>
    %71 = vector.extract_strided_slice %38 {offsets = [0, 80], sizes = [16, 16], strides = [1, 1]} : vector<16x96xf32> to vector<16x16xf32>
    %72 = vector.shape_cast %71 : vector<16x16xf32> to vector<2x8x16xf32>
    %73 = arith.truncf %72 : vector<2x8x16xf32> to vector<2x8x16xbf16>
    "tpu.trace_start"() <{level = 10 : i32, message = "bqd,bkd->bqk"}> : () -> ()
    %cst_25 = arith.constant dense<0.000000e+00> : vector<2x8x8xf32>
    %74 = tpu.matmul %67, %70, %cst_25 {dimension_numbers = #tpu.dot_dimension_numbers<[2], [2], [1], [1], [0, 0, 0, 1, 1, 1], [0], [0]>} : vector<2x8x16xbf16>, vector<2x8x16xbf16>, vector<2x8x8xf32> -> vector<2x8x8xf32>
    "tpu.trace_stop"() : () -> ()
    %cst_26 = arith.constant 2.500000e-01 : f32
    %75 = vector.broadcast %cst_26 : f32 to vector<2x8x8xf32>
    %76 = arith.mulf %74, %75 : vector<2x8x8xf32>
    %77 = vector.broadcast %5 : vector<2x1x8xf32> to vector<2x8x8xf32>
    %78 = arith.addf %76, %77 : vector<2x8x8xf32>
    %cst_27 = arith.constant dense<0xFF800000> : vector<2x8xf32>
    %79 = vector.multi_reduction <maximumf>, %78, %cst_27 [2] : vector<2x8x8xf32> to vector<2x8xf32>
    %80 = vector.shape_cast %79 : vector<2x8xf32> to vector<2x8x1xf32>
    %81 = vector.broadcast %80 : vector<2x8x1xf32> to vector<2x8x8xf32>
    %82 = arith.subf %78, %81 : vector<2x8x8xf32>
    %83 = math.exp %82 : vector<2x8x8xf32>
    %cst_28 = arith.constant dense<0.000000e+00> : vector<2x8xf32>
    %84 = vector.multi_reduction <add>, %83, %cst_28 [2] : vector<2x8x8xf32> to vector<2x8xf32>
    %85 = vector.shape_cast %84 : vector<2x8xf32> to vector<2x8x1xf32>
    %86 = tpu.reciprocal %85 {approx = true} : vector<2x8x1xf32> -> vector<2x8x1xf32>
    %87 = vector.broadcast %86 : vector<2x8x1xf32> to vector<2x8x8xf32>
    %88 = arith.mulf %83, %87 : vector<2x8x8xf32>
    %89 = arith.truncf %88 : vector<2x8x8xf32> to vector<2x8x8xbf16>
    "tpu.trace_start"() <{level = 10 : i32, message = "bqk,bkd->bqd"}> : () -> ()
    %cst_29 = arith.constant dense<0.000000e+00> : vector<2x8x16xf32>
    %90 = tpu.matmul %89, %73, %cst_29 {dimension_numbers = #tpu.dot_dimension_numbers<[2], [1], [1], [2], [0, 0, 0, 1, 1, 2], [0], [0]>} : vector<2x8x8xbf16>, vector<2x8x16xbf16>, vector<2x8x16xf32> -> vector<2x8x16xf32>
    "tpu.trace_stop"() : () -> ()
    %91 = tpu.concatenate %64, %90 in 2 : vector<2x8x16xf32>, vector<2x8x16xf32> -> vector<2x8x32xf32>
    %92 = vector.shape_cast %91 : vector<2x8x32xf32> to vector<16x32xf32>
    %93 = arith.truncf %92 : vector<16x32xf32> to vector<16x32xbf16>
    %c0_30 = arith.constant 0 : index
    %c0_31 = arith.constant 0 : index
    %c0_32 = arith.constant 0 : index
    %94 = vector.load %arg7[%c0_30, %c0_31, %c0_32] : memref<2x32x32xbf16, #tpu.memory_space<vmem>>, vector<1x32x32xbf16>
    %95 = vector.shape_cast %94 : vector<1x32x32xbf16> to vector<32x32xbf16>
    %cst_33 = arith.constant dense<0.000000e+00> : vector<16x32xf32>
    %96 = tpu.matmul %93, %95, %cst_33 {dimension_numbers = #tpu.dot_dimension_numbers<[1], [0], [0], [1], [0, 0, 1, 1], [], []>} : vector<16x32xbf16>, vector<32x32xbf16>, vector<16x32xf32> -> vector<16x32xf32>
    %c0_34 = arith.constant 0 : index
    %c0_35 = arith.constant 0 : index
    %c0_36 = arith.constant 0 : index
    %97 = vector.load %arg8[%c0_34, %c0_35, %c0_36] : memref<2x1x32xf32, #tpu.memory_space<vmem>>, vector<1x1x32xf32>
    %98 = vector.shape_cast %97 : vector<1x1x32xf32> to vector<1x32xf32>
    %99 = vector.broadcast %98 : vector<1x32xf32> to vector<16x32xf32>
    %100 = arith.addf %96, %99 : vector<16x32xf32>
    %101 = arith.addf %100, %30 : vector<16x32xf32>
    %c0_37 = arith.constant 0 : index
    %c0_38 = arith.constant 0 : index
    %c0_39 = arith.constant 0 : index
    %102 = vector.load %arg9[%c0_37, %c0_38, %c0_39] : memref<2x1x32xf32, #tpu.memory_space<vmem>>, vector<1x1x32xf32>
    %103 = vector.shape_cast %102 : vector<1x1x32xf32> to vector<1x32xf32>
    %c0_40 = arith.constant 0 : index
    %c0_41 = arith.constant 0 : index
    %c0_42 = arith.constant 0 : index
    %104 = vector.load %arg10[%c0_40, %c0_41, %c0_42] : memref<2x1x32xf32, #tpu.memory_space<vmem>>, vector<1x1x32xf32>
    %105 = vector.shape_cast %104 : vector<1x1x32xf32> to vector<1x32xf32>
    %cst_43 = arith.constant dense<0.000000e+00> : vector<16xf32>
    %106 = vector.multi_reduction <add>, %101, %cst_43 [1] : vector<16x32xf32> to vector<16xf32>
    %107 = vector.shape_cast %106 : vector<16xf32> to vector<16x1xf32>
    %cst_44 = arith.constant 3.200000e+01 : f32
    %108 = vector.broadcast %cst_44 : f32 to vector<16x1xf32>
    %109 = arith.divf %107, %108 : vector<16x1xf32>
    %110 = vector.broadcast %109 : vector<16x1xf32> to vector<16x32xf32>
    %111 = arith.subf %101, %110 : vector<16x32xf32>
    %112 = arith.mulf %111, %111 : vector<16x32xf32>
    %cst_45 = arith.constant dense<0.000000e+00> : vector<16xf32>
    %113 = vector.multi_reduction <add>, %112, %cst_45 [1] : vector<16x32xf32> to vector<16xf32>
    %114 = vector.shape_cast %113 : vector<16xf32> to vector<16x1xf32>
    %cst_46 = arith.constant 3.200000e+01 : f32
    %115 = vector.broadcast %cst_46 : f32 to vector<16x1xf32>
    %116 = arith.divf %114, %115 : vector<16x1xf32>
    %117 = vector.broadcast %109 : vector<16x1xf32> to vector<16x32xf32>
    %118 = arith.subf %101, %117 : vector<16x32xf32>
    %cst_47 = arith.constant 9.99999996E-13 : f32
    %119 = vector.broadcast %cst_47 : f32 to vector<16x1xf32>
    %120 = arith.addf %116, %119 : vector<16x1xf32>
    %121 = math.rsqrt %120 : vector<16x1xf32>
    %122 = vector.broadcast %121 : vector<16x1xf32> to vector<16x32xf32>
    %123 = arith.mulf %118, %122 : vector<16x32xf32>
    %124 = vector.broadcast %103 : vector<1x32xf32> to vector<16x32xf32>
    %125 = arith.mulf %123, %124 : vector<16x32xf32>
    %126 = vector.broadcast %105 : vector<1x32xf32> to vector<16x32xf32>
    %127 = arith.addf %125, %126 : vector<16x32xf32>
    %c0_48 = arith.constant 0 : index
    %c0_49 = arith.constant 0 : index
    %c0_50 = arith.constant 0 : index
    %128 = vector.load %arg11[%c0_48, %c0_49, %c0_50] : memref<2x32x64xbf16, #tpu.memory_space<vmem>>, vector<1x32x64xbf16>
    %129 = vector.shape_cast %128 : vector<1x32x64xbf16> to vector<32x64xbf16>
    %c0_51 = arith.constant 0 : index
    %c0_52 = arith.constant 0 : index
    %c0_53 = arith.constant 0 : index
    %130 = vector.load %arg12[%c0_51, %c0_52, %c0_53] : memref<2x1x64xf32, #tpu.memory_space<vmem>>, vector<1x1x64xf32>
    %131 = vector.shape_cast %130 : vector<1x1x64xf32> to vector<1x64xf32>
    %132 = arith.truncf %127 : vector<16x32xf32> to vector<16x32xbf16>
    %cst_54 = arith.constant dense<0.000000e+00> : vector<16x64xf32>
    %133 = tpu.matmul %132, %129, %cst_54 {dimension_numbers = #tpu.dot_dimension_numbers<[1], [0], [0], [1], [0, 0, 1, 1], [], []>} : vector<16x32xbf16>, vector<32x64xbf16>, vector<16x64xf32> -> vector<16x64xf32>
    %134 = vector.broadcast %131 : vector<1x64xf32> to vector<16x64xf32>
    %135 = arith.addf %133, %134 : vector<16x64xf32>
    %cst_55 = arith.constant 5.000000e-01 : f32
    %136 = vector.broadcast %cst_55 : f32 to vector<16x64xf32>
    %137 = arith.mulf %136, %135 : vector<16x64xf32>
    %cst_56 = arith.constant 0.707106769 : f32
    %138 = vector.broadcast %cst_56 : f32 to vector<16x64xf32>
    %139 = arith.mulf %135, %138 : vector<16x64xf32>
    %cst_57 = arith.constant 0.000000e+00 : f32
    %140 = vector.broadcast %cst_57 : f32 to vector<16x64xf32>
    %141 = arith.cmpf oge, %139, %140 : vector<16x64xf32>
    %cst_58 = arith.constant 1.000000e+00 : f32
    %cst_59 = arith.constant -1.000000e+00 : f32
    %142 = vector.broadcast %cst_58 : f32 to vector<16x64xf32>
    %143 = vector.broadcast %cst_59 : f32 to vector<16x64xf32>
    %144 = arith.select %141, %142, %143 : vector<16x64xi1>, vector<16x64xf32>
    %145 = math.absf %139 : vector<16x64xf32>
    %cst_60 = arith.constant 0.327591091 : f32
    %146 = vector.broadcast %cst_60 : f32 to vector<16x64xf32>
    %147 = arith.mulf %146, %145 : vector<16x64xf32>
    %cst_61 = arith.constant 1.000000e+00 : f32
    %148 = vector.broadcast %cst_61 : f32 to vector<16x64xf32>
    %149 = arith.addf %148, %147 : vector<16x64xf32>
    %cst_62 = arith.constant 1.000000e+00 : f32
    %150 = vector.broadcast %cst_62 : f32 to vector<16x64xf32>
    %151 = arith.divf %150, %149 : vector<16x64xf32>
    %cst_63 = arith.constant 1.06140542 : f32
    %152 = vector.broadcast %cst_63 : f32 to vector<16x64xf32>
    %153 = arith.mulf %152, %151 : vector<16x64xf32>
    %cst_64 = arith.constant -1.45315206 : f32
    %154 = vector.broadcast %cst_64 : f32 to vector<16x64xf32>
    %155 = arith.addf %153, %154 : vector<16x64xf32>
    %156 = arith.mulf %155, %151 : vector<16x64xf32>
    %cst_65 = arith.constant 1.42141378 : f32
    %157 = vector.broadcast %cst_65 : f32 to vector<16x64xf32>
    %158 = arith.addf %156, %157 : vector<16x64xf32>
    %159 = arith.mulf %158, %151 : vector<16x64xf32>
    %cst_66 = arith.constant -0.284496725 : f32
    %160 = vector.broadcast %cst_66 : f32 to vector<16x64xf32>
    %161 = arith.addf %159, %160 : vector<16x64xf32>
    %162 = arith.mulf %161, %151 : vector<16x64xf32>
    %cst_67 = arith.constant 0.254829586 : f32
    %163 = vector.broadcast %cst_67 : f32 to vector<16x64xf32>
    %164 = arith.addf %162, %163 : vector<16x64xf32>
    %165 = arith.mulf %164, %151 : vector<16x64xf32>
    %cst_68 = arith.constant 0.000000e+00 : f32
    %166 = vector.broadcast %cst_68 : f32 to vector<16x64xf32>
    %167 = arith.subf %166, %145 : vector<16x64xf32>
    %168 = arith.mulf %167, %145 : vector<16x64xf32>
    %169 = math.exp %168 : vector<16x64xf32>
    %170 = arith.mulf %165, %169 : vector<16x64xf32>
    %cst_69 = arith.constant 1.000000e+00 : f32
    %171 = vector.broadcast %cst_69 : f32 to vector<16x64xf32>
    %172 = arith.subf %171, %170 : vector<16x64xf32>
    %173 = arith.mulf %144, %172 : vector<16x64xf32>
    %cst_70 = arith.constant 1.000000e+00 : f32
    %174 = vector.broadcast %cst_70 : f32 to vector<16x64xf32>
    %175 = arith.addf %174, %173 : vector<16x64xf32>
    %176 = arith.mulf %137, %175 : vector<16x64xf32>
    %c0_71 = arith.constant 0 : index
    %c0_72 = arith.constant 0 : index
    %c0_73 = arith.constant 0 : index
    %177 = vector.load %arg13[%c0_71, %c0_72, %c0_73] : memref<2x64x32xbf16, #tpu.memory_space<vmem>>, vector<1x64x32xbf16>
    %178 = vector.shape_cast %177 : vector<1x64x32xbf16> to vector<64x32xbf16>
    %c0_74 = arith.constant 0 : index
    %c0_75 = arith.constant 0 : index
    %c0_76 = arith.constant 0 : index
    %179 = vector.load %arg14[%c0_74, %c0_75, %c0_76] : memref<2x1x32xf32, #tpu.memory_space<vmem>>, vector<1x1x32xf32>
    %180 = vector.shape_cast %179 : vector<1x1x32xf32> to vector<1x32xf32>
    %181 = arith.truncf %176 : vector<16x64xf32> to vector<16x64xbf16>
    %cst_77 = arith.constant dense<0.000000e+00> : vector<16x32xf32>
    %182 = tpu.matmul %181, %178, %cst_77 {dimension_numbers = #tpu.dot_dimension_numbers<[1], [0], [0], [1], [0, 0, 1, 1], [], []>} : vector<16x64xbf16>, vector<64x32xbf16>, vector<16x32xf32> -> vector<16x32xf32>
    %183 = vector.broadcast %180 : vector<1x32xf32> to vector<16x32xf32>
    %184 = arith.addf %182, %183 : vector<16x32xf32>
    %185 = arith.addf %184, %127 : vector<16x32xf32>
    %c0_78 = arith.constant 0 : index
    %c0_79 = arith.constant 0 : index
    %c0_80 = arith.constant 0 : index
    %186 = vector.load %arg15[%c0_78, %c0_79, %c0_80] : memref<2x1x32xf32, #tpu.memory_space<vmem>>, vector<1x1x32xf32>
    %187 = vector.shape_cast %186 : vector<1x1x32xf32> to vector<1x32xf32>
    %c0_81 = arith.constant 0 : index
    %c0_82 = arith.constant 0 : index
    %c0_83 = arith.constant 0 : index
    %188 = vector.load %arg16[%c0_81, %c0_82, %c0_83] : memref<2x1x32xf32, #tpu.memory_space<vmem>>, vector<1x1x32xf32>
    %189 = vector.shape_cast %188 : vector<1x1x32xf32> to vector<1x32xf32>
    %cst_84 = arith.constant dense<0.000000e+00> : vector<16xf32>
    %190 = vector.multi_reduction <add>, %185, %cst_84 [1] : vector<16x32xf32> to vector<16xf32>
    %191 = vector.shape_cast %190 : vector<16xf32> to vector<16x1xf32>
    %cst_85 = arith.constant 3.200000e+01 : f32
    %192 = vector.broadcast %cst_85 : f32 to vector<16x1xf32>
    %193 = arith.divf %191, %192 : vector<16x1xf32>
    %194 = vector.broadcast %193 : vector<16x1xf32> to vector<16x32xf32>
    %195 = arith.subf %185, %194 : vector<16x32xf32>
    %196 = arith.mulf %195, %195 : vector<16x32xf32>
    %cst_86 = arith.constant dense<0.000000e+00> : vector<16xf32>
    %197 = vector.multi_reduction <add>, %196, %cst_86 [1] : vector<16x32xf32> to vector<16xf32>
    %198 = vector.shape_cast %197 : vector<16xf32> to vector<16x1xf32>
    %cst_87 = arith.constant 3.200000e+01 : f32
    %199 = vector.broadcast %cst_87 : f32 to vector<16x1xf32>
    %200 = arith.divf %198, %199 : vector<16x1xf32>
    %201 = vector.broadcast %193 : vector<16x1xf32> to vector<16x32xf32>
    %202 = arith.subf %185, %201 : vector<16x32xf32>
    %cst_88 = arith.constant 9.99999996E-13 : f32
    %203 = vector.broadcast %cst_88 : f32 to vector<16x1xf32>
    %204 = arith.addf %200, %203 : vector<16x1xf32>
    %205 = math.rsqrt %204 : vector<16x1xf32>
    %206 = vector.broadcast %205 : vector<16x1xf32> to vector<16x32xf32>
    %207 = arith.mulf %202, %206 : vector<16x32xf32>
    %208 = vector.broadcast %187 : vector<1x32xf32> to vector<16x32xf32>
    %209 = arith.mulf %207, %208 : vector<16x32xf32>
    %210 = vector.broadcast %189 : vector<1x32xf32> to vector<16x32xf32>
    %211 = arith.addf %209, %210 : vector<16x32xf32>
    %c1 = arith.constant 1 : index
    %c0_89 = arith.constant 0 : index
    %c0_90 = arith.constant 0 : index
    %212 = vector.load %arg5[%c1, %c0_89, %c0_90] : memref<2x32x96xbf16, #tpu.memory_space<vmem>>, vector<1x32x96xbf16>
    %213 = vector.shape_cast %212 : vector<1x32x96xbf16> to vector<32x96xbf16>
    %c1_91 = arith.constant 1 : index
    %c0_92 = arith.constant 0 : index
    %c0_93 = arith.constant 0 : index
    %214 = vector.load %arg6[%c1_91, %c0_92, %c0_93] : memref<2x1x96xf32, #tpu.memory_space<vmem>>, vector<1x1x96xf32>
    %215 = vector.shape_cast %214 : vector<1x1x96xf32> to vector<1x96xf32>
    %216 = arith.truncf %211 : vector<16x32xf32> to vector<16x32xbf16>
    %cst_94 = arith.constant dense<0.000000e+00> : vector<16x96xf32>
    %217 = tpu.matmul %216, %213, %cst_94 {dimension_numbers = #tpu.dot_dimension_numbers<[1], [0], [0], [1], [0, 0, 1, 1], [], []>} : vector<16x32xbf16>, vector<32x96xbf16>, vector<16x96xf32> -> vector<16x96xf32>
    %218 = vector.broadcast %215 : vector<1x96xf32> to vector<16x96xf32>
    %219 = arith.addf %217, %218 : vector<16x96xf32>
    %220 = vector.extract_strided_slice %219 {offsets = [0, 0], sizes = [16, 16], strides = [1, 1]} : vector<16x96xf32> to vector<16x16xf32>
    %221 = vector.shape_cast %220 : vector<16x16xf32> to vector<2x8x16xf32>
    %222 = arith.truncf %221 : vector<2x8x16xf32> to vector<2x8x16xbf16>
    %223 = vector.extract_strided_slice %219 {offsets = [0, 32], sizes = [16, 16], strides = [1, 1]} : vector<16x96xf32> to vector<16x16xf32>
    %224 = vector.shape_cast %223 : vector<16x16xf32> to vector<2x8x16xf32>
    %225 = arith.truncf %224 : vector<2x8x16xf32> to vector<2x8x16xbf16>
    %226 = vector.extract_strided_slice %219 {offsets = [0, 64], sizes = [16, 16], strides = [1, 1]} : vector<16x96xf32> to vector<16x16xf32>
    %227 = vector.shape_cast %226 : vector<16x16xf32> to vector<2x8x16xf32>
    %228 = arith.truncf %227 : vector<2x8x16xf32> to vector<2x8x16xbf16>
    "tpu.trace_start"() <{level = 10 : i32, message = "bqd,bkd->bqk"}> : () -> ()
    %cst_95 = arith.constant dense<0.000000e+00> : vector<2x8x8xf32>
    %229 = tpu.matmul %222, %225, %cst_95 {dimension_numbers = #tpu.dot_dimension_numbers<[2], [2], [1], [1], [0, 0, 0, 1, 1, 1], [0], [0]>} : vector<2x8x16xbf16>, vector<2x8x16xbf16>, vector<2x8x8xf32> -> vector<2x8x8xf32>
    "tpu.trace_stop"() : () -> ()
    %cst_96 = arith.constant 2.500000e-01 : f32
    %230 = vector.broadcast %cst_96 : f32 to vector<2x8x8xf32>
    %231 = arith.mulf %229, %230 : vector<2x8x8xf32>
    %232 = vector.broadcast %5 : vector<2x1x8xf32> to vector<2x8x8xf32>
    %233 = arith.addf %231, %232 : vector<2x8x8xf32>
    %cst_97 = arith.constant dense<0xFF800000> : vector<2x8xf32>
    %234 = vector.multi_reduction <maximumf>, %233, %cst_97 [2] : vector<2x8x8xf32> to vector<2x8xf32>
    %235 = vector.shape_cast %234 : vector<2x8xf32> to vector<2x8x1xf32>
    %236 = vector.broadcast %235 : vector<2x8x1xf32> to vector<2x8x8xf32>
    %237 = arith.subf %233, %236 : vector<2x8x8xf32>
    %238 = math.exp %237 : vector<2x8x8xf32>
    %cst_98 = arith.constant dense<0.000000e+00> : vector<2x8xf32>
    %239 = vector.multi_reduction <add>, %238, %cst_98 [2] : vector<2x8x8xf32> to vector<2x8xf32>
    %240 = vector.shape_cast %239 : vector<2x8xf32> to vector<2x8x1xf32>
    %241 = tpu.reciprocal %240 {approx = true} : vector<2x8x1xf32> -> vector<2x8x1xf32>
    %242 = vector.broadcast %241 : vector<2x8x1xf32> to vector<2x8x8xf32>
    %243 = arith.mulf %238, %242 : vector<2x8x8xf32>
    %244 = arith.truncf %243 : vector<2x8x8xf32> to vector<2x8x8xbf16>
    "tpu.trace_start"() <{level = 10 : i32, message = "bqk,bkd->bqd"}> : () -> ()
    %cst_99 = arith.constant dense<0.000000e+00> : vector<2x8x16xf32>
    %245 = tpu.matmul %244, %228, %cst_99 {dimension_numbers = #tpu.dot_dimension_numbers<[2], [1], [1], [2], [0, 0, 0, 1, 1, 2], [0], [0]>} : vector<2x8x8xbf16>, vector<2x8x16xbf16>, vector<2x8x16xf32> -> vector<2x8x16xf32>
    "tpu.trace_stop"() : () -> ()
    %246 = vector.extract_strided_slice %219 {offsets = [0, 16], sizes = [16, 16], strides = [1, 1]} : vector<16x96xf32> to vector<16x16xf32>
    %247 = vector.shape_cast %246 : vector<16x16xf32> to vector<2x8x16xf32>
    %248 = arith.truncf %247 : vector<2x8x16xf32> to vector<2x8x16xbf16>
    %249 = vector.extract_strided_slice %219 {offsets = [0, 48], sizes = [16, 16], strides = [1, 1]} : vector<16x96xf32> to vector<16x16xf32>
    %250 = vector.shape_cast %249 : vector<16x16xf32> to vector<2x8x16xf32>
    %251 = arith.truncf %250 : vector<2x8x16xf32> to vector<2x8x16xbf16>
    %252 = vector.extract_strided_slice %219 {offsets = [0, 80], sizes = [16, 16], strides = [1, 1]} : vector<16x96xf32> to vector<16x16xf32>
    %253 = vector.shape_cast %252 : vector<16x16xf32> to vector<2x8x16xf32>
    %254 = arith.truncf %253 : vector<2x8x16xf32> to vector<2x8x16xbf16>
    "tpu.trace_start"() <{level = 10 : i32, message = "bqd,bkd->bqk"}> : () -> ()
    %cst_100 = arith.constant dense<0.000000e+00> : vector<2x8x8xf32>
    %255 = tpu.matmul %248, %251, %cst_100 {dimension_numbers = #tpu.dot_dimension_numbers<[2], [2], [1], [1], [0, 0, 0, 1, 1, 1], [0], [0]>} : vector<2x8x16xbf16>, vector<2x8x16xbf16>, vector<2x8x8xf32> -> vector<2x8x8xf32>
    "tpu.trace_stop"() : () -> ()
    %cst_101 = arith.constant 2.500000e-01 : f32
    %256 = vector.broadcast %cst_101 : f32 to vector<2x8x8xf32>
    %257 = arith.mulf %255, %256 : vector<2x8x8xf32>
    %258 = vector.broadcast %5 : vector<2x1x8xf32> to vector<2x8x8xf32>
    %259 = arith.addf %257, %258 : vector<2x8x8xf32>
    %cst_102 = arith.constant dense<0xFF800000> : vector<2x8xf32>
    %260 = vector.multi_reduction <maximumf>, %259, %cst_102 [2] : vector<2x8x8xf32> to vector<2x8xf32>
    %261 = vector.shape_cast %260 : vector<2x8xf32> to vector<2x8x1xf32>
    %262 = vector.broadcast %261 : vector<2x8x1xf32> to vector<2x8x8xf32>
    %263 = arith.subf %259, %262 : vector<2x8x8xf32>
    %264 = math.exp %263 : vector<2x8x8xf32>
    %cst_103 = arith.constant dense<0.000000e+00> : vector<2x8xf32>
    %265 = vector.multi_reduction <add>, %264, %cst_103 [2] : vector<2x8x8xf32> to vector<2x8xf32>
    %266 = vector.shape_cast %265 : vector<2x8xf32> to vector<2x8x1xf32>
    %267 = tpu.reciprocal %266 {approx = true} : vector<2x8x1xf32> -> vector<2x8x1xf32>
    %268 = vector.broadcast %267 : vector<2x8x1xf32> to vector<2x8x8xf32>
    %269 = arith.mulf %264, %268 : vector<2x8x8xf32>
    %270 = arith.truncf %269 : vector<2x8x8xf32> to vector<2x8x8xbf16>
    "tpu.trace_start"() <{level = 10 : i32, message = "bqk,bkd->bqd"}> : () -> ()
    %cst_104 = arith.constant dense<0.000000e+00> : vector<2x8x16xf32>
    %271 = tpu.matmul %270, %254, %cst_104 {dimension_numbers = #tpu.dot_dimension_numbers<[2], [1], [1], [2], [0, 0, 0, 1, 1, 2], [0], [0]>} : vector<2x8x8xbf16>, vector<2x8x16xbf16>, vector<2x8x16xf32> -> vector<2x8x16xf32>
    "tpu.trace_stop"() : () -> ()
    %272 = tpu.concatenate %245, %271 in 2 : vector<2x8x16xf32>, vector<2x8x16xf32> -> vector<2x8x32xf32>
    %273 = vector.shape_cast %272 : vector<2x8x32xf32> to vector<16x32xf32>
    %274 = arith.truncf %273 : vector<16x32xf32> to vector<16x32xbf16>
    %c1_105 = arith.constant 1 : index
    %c0_106 = arith.constant 0 : index
    %c0_107 = arith.constant 0 : index
    %275 = vector.load %arg7[%c1_105, %c0_106, %c0_107] : memref<2x32x32xbf16, #tpu.memory_space<vmem>>, vector<1x32x32xbf16>
    %276 = vector.shape_cast %275 : vector<1x32x32xbf16> to vector<32x32xbf16>
    %cst_108 = arith.constant dense<0.000000e+00> : vector<16x32xf32>
    %277 = tpu.matmul %274, %276, %cst_108 {dimension_numbers = #tpu.dot_dimension_numbers<[1], [0], [0], [1], [0, 0, 1, 1], [], []>} : vector<16x32xbf16>, vector<32x32xbf16>, vector<16x32xf32> -> vector<16x32xf32>
    %c1_109 = arith.constant 1 : index
    %c0_110 = arith.constant 0 : index
    %c0_111 = arith.constant 0 : index
    %278 = vector.load %arg8[%c1_109, %c0_110, %c0_111] : memref<2x1x32xf32, #tpu.memory_space<vmem>>, vector<1x1x32xf32>
    %279 = vector.shape_cast %278 : vector<1x1x32xf32> to vector<1x32xf32>
    %280 = vector.broadcast %279 : vector<1x32xf32> to vector<16x32xf32>
    %281 = arith.addf %277, %280 : vector<16x32xf32>
    %282 = arith.addf %281, %211 : vector<16x32xf32>
    %c1_112 = arith.constant 1 : index
    %c0_113 = arith.constant 0 : index
    %c0_114 = arith.constant 0 : index
    %283 = vector.load %arg9[%c1_112, %c0_113, %c0_114] : memref<2x1x32xf32, #tpu.memory_space<vmem>>, vector<1x1x32xf32>
    %284 = vector.shape_cast %283 : vector<1x1x32xf32> to vector<1x32xf32>
    %c1_115 = arith.constant 1 : index
    %c0_116 = arith.constant 0 : index
    %c0_117 = arith.constant 0 : index
    %285 = vector.load %arg10[%c1_115, %c0_116, %c0_117] : memref<2x1x32xf32, #tpu.memory_space<vmem>>, vector<1x1x32xf32>
    %286 = vector.shape_cast %285 : vector<1x1x32xf32> to vector<1x32xf32>
    %cst_118 = arith.constant dense<0.000000e+00> : vector<16xf32>
    %287 = vector.multi_reduction <add>, %282, %cst_118 [1] : vector<16x32xf32> to vector<16xf32>
    %288 = vector.shape_cast %287 : vector<16xf32> to vector<16x1xf32>
    %cst_119 = arith.constant 3.200000e+01 : f32
    %289 = vector.broadcast %cst_119 : f32 to vector<16x1xf32>
    %290 = arith.divf %288, %289 : vector<16x1xf32>
    %291 = vector.broadcast %290 : vector<16x1xf32> to vector<16x32xf32>
    %292 = arith.subf %282, %291 : vector<16x32xf32>
    %293 = arith.mulf %292, %292 : vector<16x32xf32>
    %cst_120 = arith.constant dense<0.000000e+00> : vector<16xf32>
    %294 = vector.multi_reduction <add>, %293, %cst_120 [1] : vector<16x32xf32> to vector<16xf32>
    %295 = vector.shape_cast %294 : vector<16xf32> to vector<16x1xf32>
    %cst_121 = arith.constant 3.200000e+01 : f32
    %296 = vector.broadcast %cst_121 : f32 to vector<16x1xf32>
    %297 = arith.divf %295, %296 : vector<16x1xf32>
    %298 = vector.broadcast %290 : vector<16x1xf32> to vector<16x32xf32>
    %299 = arith.subf %282, %298 : vector<16x32xf32>
    %cst_122 = arith.constant 9.99999996E-13 : f32
    %300 = vector.broadcast %cst_122 : f32 to vector<16x1xf32>
    %301 = arith.addf %297, %300 : vector<16x1xf32>
    %302 = math.rsqrt %301 : vector<16x1xf32>
    %303 = vector.broadcast %302 : vector<16x1xf32> to vector<16x32xf32>
    %304 = arith.mulf %299, %303 : vector<16x32xf32>
    %305 = vector.broadcast %284 : vector<1x32xf32> to vector<16x32xf32>
    %306 = arith.mulf %304, %305 : vector<16x32xf32>
    %307 = vector.broadcast %286 : vector<1x32xf32> to vector<16x32xf32>
    %308 = arith.addf %306, %307 : vector<16x32xf32>
    %c1_123 = arith.constant 1 : index
    %c0_124 = arith.constant 0 : index
    %c0_125 = arith.constant 0 : index
    %309 = vector.load %arg11[%c1_123, %c0_124, %c0_125] : memref<2x32x64xbf16, #tpu.memory_space<vmem>>, vector<1x32x64xbf16>
    %310 = vector.shape_cast %309 : vector<1x32x64xbf16> to vector<32x64xbf16>
    %c1_126 = arith.constant 1 : index
    %c0_127 = arith.constant 0 : index
    %c0_128 = arith.constant 0 : index
    %311 = vector.load %arg12[%c1_126, %c0_127, %c0_128] : memref<2x1x64xf32, #tpu.memory_space<vmem>>, vector<1x1x64xf32>
    %312 = vector.shape_cast %311 : vector<1x1x64xf32> to vector<1x64xf32>
    %313 = arith.truncf %308 : vector<16x32xf32> to vector<16x32xbf16>
    %cst_129 = arith.constant dense<0.000000e+00> : vector<16x64xf32>
    %314 = tpu.matmul %313, %310, %cst_129 {dimension_numbers = #tpu.dot_dimension_numbers<[1], [0], [0], [1], [0, 0, 1, 1], [], []>} : vector<16x32xbf16>, vector<32x64xbf16>, vector<16x64xf32> -> vector<16x64xf32>
    %315 = vector.broadcast %312 : vector<1x64xf32> to vector<16x64xf32>
    %316 = arith.addf %314, %315 : vector<16x64xf32>
    %cst_130 = arith.constant 5.000000e-01 : f32
    %317 = vector.broadcast %cst_130 : f32 to vector<16x64xf32>
    %318 = arith.mulf %317, %316 : vector<16x64xf32>
    %cst_131 = arith.constant 0.707106769 : f32
    %319 = vector.broadcast %cst_131 : f32 to vector<16x64xf32>
    %320 = arith.mulf %316, %319 : vector<16x64xf32>
    %cst_132 = arith.constant 0.000000e+00 : f32
    %321 = vector.broadcast %cst_132 : f32 to vector<16x64xf32>
    %322 = arith.cmpf oge, %320, %321 : vector<16x64xf32>
    %cst_133 = arith.constant 1.000000e+00 : f32
    %cst_134 = arith.constant -1.000000e+00 : f32
    %323 = vector.broadcast %cst_133 : f32 to vector<16x64xf32>
    %324 = vector.broadcast %cst_134 : f32 to vector<16x64xf32>
    %325 = arith.select %322, %323, %324 : vector<16x64xi1>, vector<16x64xf32>
    %326 = math.absf %320 : vector<16x64xf32>
    %cst_135 = arith.constant 0.327591091 : f32
    %327 = vector.broadcast %cst_135 : f32 to vector<16x64xf32>
    %328 = arith.mulf %327, %326 : vector<16x64xf32>
    %cst_136 = arith.constant 1.000000e+00 : f32
    %329 = vector.broadcast %cst_136 : f32 to vector<16x64xf32>
    %330 = arith.addf %329, %328 : vector<16x64xf32>
    %cst_137 = arith.constant 1.000000e+00 : f32
    %331 = vector.broadcast %cst_137 : f32 to vector<16x64xf32>
    %332 = arith.divf %331, %330 : vector<16x64xf32>
    %cst_138 = arith.constant 1.06140542 : f32
    %333 = vector.broadcast %cst_138 : f32 to vector<16x64xf32>
    %334 = arith.mulf %333, %332 : vector<16x64xf32>
    %cst_139 = arith.constant -1.45315206 : f32
    %335 = vector.broadcast %cst_139 : f32 to vector<16x64xf32>
    %336 = arith.addf %334, %335 : vector<16x64xf32>
    %337 = arith.mulf %336, %332 : vector<16x64xf32>
    %cst_140 = arith.constant 1.42141378 : f32
    %338 = vector.broadcast %cst_140 : f32 to vector<16x64xf32>
    %339 = arith.addf %337, %338 : vector<16x64xf32>
    %340 = arith.mulf %339, %332 : vector<16x64xf32>
    %cst_141 = arith.constant -0.284496725 : f32
    %341 = vector.broadcast %cst_141 : f32 to vector<16x64xf32>
    %342 = arith.addf %340, %341 : vector<16x64xf32>
    %343 = arith.mulf %342, %332 : vector<16x64xf32>
    %cst_142 = arith.constant 0.254829586 : f32
    %344 = vector.broadcast %cst_142 : f32 to vector<16x64xf32>
    %345 = arith.addf %343, %344 : vector<16x64xf32>
    %346 = arith.mulf %345, %332 : vector<16x64xf32>
    %cst_143 = arith.constant 0.000000e+00 : f32
    %347 = vector.broadcast %cst_143 : f32 to vector<16x64xf32>
    %348 = arith.subf %347, %326 : vector<16x64xf32>
    %349 = arith.mulf %348, %326 : vector<16x64xf32>
    %350 = math.exp %349 : vector<16x64xf32>
    %351 = arith.mulf %346, %350 : vector<16x64xf32>
    %cst_144 = arith.constant 1.000000e+00 : f32
    %352 = vector.broadcast %cst_144 : f32 to vector<16x64xf32>
    %353 = arith.subf %352, %351 : vector<16x64xf32>
    %354 = arith.mulf %325, %353 : vector<16x64xf32>
    %cst_145 = arith.constant 1.000000e+00 : f32
    %355 = vector.broadcast %cst_145 : f32 to vector<16x64xf32>
    %356 = arith.addf %355, %354 : vector<16x64xf32>
    %357 = arith.mulf %318, %356 : vector<16x64xf32>
    %c1_146 = arith.constant 1 : index
    %c0_147 = arith.constant 0 : index
    %c0_148 = arith.constant 0 : index
    %358 = vector.load %arg13[%c1_146, %c0_147, %c0_148] : memref<2x64x32xbf16, #tpu.memory_space<vmem>>, vector<1x64x32xbf16>
    %359 = vector.shape_cast %358 : vector<1x64x32xbf16> to vector<64x32xbf16>
    %c1_149 = arith.constant 1 : index
    %c0_150 = arith.constant 0 : index
    %c0_151 = arith.constant 0 : index
    %360 = vector.load %arg14[%c1_149, %c0_150, %c0_151] : memref<2x1x32xf32, #tpu.memory_space<vmem>>, vector<1x1x32xf32>
    %361 = vector.shape_cast %360 : vector<1x1x32xf32> to vector<1x32xf32>
    %362 = arith.truncf %357 : vector<16x64xf32> to vector<16x64xbf16>
    %cst_152 = arith.constant dense<0.000000e+00> : vector<16x32xf32>
    %363 = tpu.matmul %362, %359, %cst_152 {dimension_numbers = #tpu.dot_dimension_numbers<[1], [0], [0], [1], [0, 0, 1, 1], [], []>} : vector<16x64xbf16>, vector<64x32xbf16>, vector<16x32xf32> -> vector<16x32xf32>
    %364 = vector.broadcast %361 : vector<1x32xf32> to vector<16x32xf32>
    %365 = arith.addf %363, %364 : vector<16x32xf32>
    %366 = arith.addf %365, %308 : vector<16x32xf32>
    %c1_153 = arith.constant 1 : index
    %c0_154 = arith.constant 0 : index
    %c0_155 = arith.constant 0 : index
    %367 = vector.load %arg15[%c1_153, %c0_154, %c0_155] : memref<2x1x32xf32, #tpu.memory_space<vmem>>, vector<1x1x32xf32>
    %368 = vector.shape_cast %367 : vector<1x1x32xf32> to vector<1x32xf32>
    %c1_156 = arith.constant 1 : index
    %c0_157 = arith.constant 0 : index
    %c0_158 = arith.constant 0 : index
    %369 = vector.load %arg16[%c1_156, %c0_157, %c0_158] : memref<2x1x32xf32, #tpu.memory_space<vmem>>, vector<1x1x32xf32>
    %370 = vector.shape_cast %369 : vector<1x1x32xf32> to vector<1x32xf32>
    %cst_159 = arith.constant dense<0.000000e+00> : vector<16xf32>
    %371 = vector.multi_reduction <add>, %366, %cst_159 [1] : vector<16x32xf32> to vector<16xf32>
    %372 = vector.shape_cast %371 : vector<16xf32> to vector<16x1xf32>
    %cst_160 = arith.constant 3.200000e+01 : f32
    %373 = vector.broadcast %cst_160 : f32 to vector<16x1xf32>
    %374 = arith.divf %372, %373 : vector<16x1xf32>
    %375 = vector.broadcast %374 : vector<16x1xf32> to vector<16x32xf32>
    %376 = arith.subf %366, %375 : vector<16x32xf32>
    %377 = arith.mulf %376, %376 : vector<16x32xf32>
    %cst_161 = arith.constant dense<0.000000e+00> : vector<16xf32>
    %378 = vector.multi_reduction <add>, %377, %cst_161 [1] : vector<16x32xf32> to vector<16xf32>
    %379 = vector.shape_cast %378 : vector<16xf32> to vector<16x1xf32>
    %cst_162 = arith.constant 3.200000e+01 : f32
    %380 = vector.broadcast %cst_162 : f32 to vector<16x1xf32>
    %381 = arith.divf %379, %380 : vector<16x1xf32>
    %382 = vector.broadcast %374 : vector<16x1xf32> to vector<16x32xf32>
    %383 = arith.subf %366, %382 : vector<16x32xf32>
    %cst_163 = arith.constant 9.99999996E-13 : f32
    %384 = vector.broadcast %cst_163 : f32 to vector<16x1xf32>
    %385 = arith.addf %381, %384 : vector<16x1xf32>
    %386 = math.rsqrt %385 : vector<16x1xf32>
    %387 = vector.broadcast %386 : vector<16x1xf32> to vector<16x32xf32>
    %388 = arith.mulf %383, %387 : vector<16x32xf32>
    %389 = vector.broadcast %368 : vector<1x32xf32> to vector<16x32xf32>
    %390 = arith.mulf %388, %389 : vector<16x32xf32>
    %391 = vector.broadcast %370 : vector<1x32xf32> to vector<16x32xf32>
    %392 = arith.addf %390, %391 : vector<16x32xf32>
    %c0_164 = arith.constant 0 : index
    %c0_165 = arith.constant 0 : index
    %393 = vector.load %arg17[%c0_164, %c0_165] : memref<32x19xbf16, #tpu.memory_space<vmem>>, vector<32x19xbf16>
    %c0_166 = arith.constant 0 : index
    %c0_167 = arith.constant 0 : index
    %394 = vector.load %arg18[%c0_166, %c0_167] : memref<1x19xf32, #tpu.memory_space<vmem>>, vector<1x19xf32>
    %395 = arith.truncf %392 : vector<16x32xf32> to vector<16x32xbf16>
    %cst_168 = arith.constant dense<0.000000e+00> : vector<16x19xf32>
    %396 = tpu.matmul %395, %393, %cst_168 {dimension_numbers = #tpu.dot_dimension_numbers<[1], [0], [0], [1], [0, 0, 1, 1], [], []>} : vector<16x32xbf16>, vector<32x19xbf16>, vector<16x19xf32> -> vector<16x19xf32>
    %397 = vector.broadcast %394 : vector<1x19xf32> to vector<16x19xf32>
    %398 = arith.addf %396, %397 : vector<16x19xf32>
    %c0_169 = arith.constant 0 : index
    %c0_170 = arith.constant 0 : index
    %399 = vector.load %arg22[%c0_169, %c0_170] : memref<16x19xf32, #tpu.memory_space<vmem>>, vector<16x19xf32>
    tpu.vector_store %arg22[%c0_169, %c0_170], %398 {strides = array<i32>} : memref<16x19xf32, #tpu.memory_space<vmem>>, vector<16x19xf32>,
    %400 = vector.shape_cast %398 : vector<16x19xf32> to vector<2x8x19xf32>
    %c0_171 = arith.constant 0 : index
    %c0_172 = arith.constant 0 : index
    %401 = vector.load %arg2[%c0_171, %c0_172] : memref<2x8xi32, #tpu.memory_space<vmem>>, vector<2x8xi32>
    %c0_173 = arith.constant 0 : index
    %c0_174 = arith.constant 0 : index
    %402 = vector.load %arg19[%c0_173, %c0_174] : memref<1x19xf32, #tpu.memory_space<vmem>>, vector<1x19xf32>
    %c0_175 = arith.constant 0 : index
    %c0_176 = arith.constant 0 : index
    %403 = vector.load %arg20[%c0_175, %c0_176] : memref<1x19xf32, #tpu.memory_space<vmem>>, vector<1x19xf32>
    %c0_177 = arith.constant 0 : index
    %c0_178 = arith.constant 0 : index
    %404 = vector.load %arg21[%c0_177, %c0_178] : memref<19x19xf32, #tpu.memory_space<vmem>>, vector<19x19xf32>
    %405 = tpu.iota {dimensions = array<i32: 1>} : vector<2x19xi32>
    %406 = arith.sitofp %405 : vector<2x19xi32> to vector<2x19xf32>
    %407 = tpu.iota {dimensions = array<i32: 1>} : vector<2x19x19xi32>
    %408 = arith.sitofp %407 : vector<2x19x19xi32> to vector<2x19x19xf32>
    %409 = tpu.iota {dimensions = array<i32: 2>} : vector<2x8x19xi32>
    %410 = vector.shape_cast %401 : vector<2x8xi32> to vector<2x8x1xi32>
    %411 = vector.broadcast %410 : vector<2x8x1xi32> to vector<2x8x19xi32>
    %412 = arith.cmpi eq, %409, %411 : vector<2x8x19xi32>
    %413 = arith.extui %412 : vector<2x8x19xi1> to vector<2x8x19xi32>
    %414 = arith.sitofp %413 : vector<2x8x19xi32> to vector<2x8x19xf32>
    %415 = vector.extract_strided_slice %400 {offsets = [0, 0, 0], sizes = [2, 1, 19], strides = [1, 1, 1]} : vector<2x8x19xf32> to vector<2x1x19xf32>
    %416 = vector.shape_cast %415 : vector<2x1x19xf32> to vector<2x19xf32>
    %417 = vector.extract_strided_slice %414 {offsets = [0, 0, 0], sizes = [2, 1, 19], strides = [1, 1, 1]} : vector<2x8x19xf32> to vector<2x1x19xf32>
    %418 = vector.shape_cast %417 : vector<2x1x19xf32> to vector<2x19xf32>
    %419 = vector.broadcast %402 : vector<1x19xf32> to vector<2x19xf32>
    %420 = arith.addf %419, %416 : vector<2x19xf32>
    %421 = arith.mulf %420, %418 : vector<2x19xf32>
    %cst_179 = arith.constant dense<0.000000e+00> : vector<2xf32>
    %422 = vector.multi_reduction <add>, %421, %cst_179 [1] : vector<2x19xf32> to vector<2xf32>
    %423 = vector.shape_cast %422 : vector<2xf32> to vector<2x1xf32>
    %424 = vector.broadcast %402 : vector<1x19xf32> to vector<2x19xf32>
    %425 = arith.addf %424, %416 : vector<2x19xf32>
    %426 = vector.extract_strided_slice %414 {offsets = [0, 1, 0], sizes = [2, 1, 19], strides = [1, 1, 1]} : vector<2x8x19xf32> to vector<2x1x19xf32>
    %427 = vector.shape_cast %426 : vector<2x1x19xf32> to vector<2x19xf32>
    %428 = vector.extract_strided_slice %400 {offsets = [0, 1, 0], sizes = [2, 1, 19], strides = [1, 1, 1]} : vector<2x8x19xf32> to vector<2x1x19xf32>
    %429 = vector.shape_cast %428 : vector<2x1x19xf32> to vector<2x19xf32>
    %430 = vector.extract_strided_slice %0 {offsets = [0, 1], sizes = [2, 1], strides = [1, 1]} : vector<2x8xf32> to vector<2x1xf32>
    %431 = vector.shape_cast %430 : vector<2x1xf32> to vector<2xf32>
    %432 = vector.shape_cast %431 : vector<2xf32> to vector<2x1xf32>
    %cst_180 = arith.constant 0.000000e+00 : f32
    %433 = vector.broadcast %cst_180 : f32 to vector<2x1xf32>
    %434 = arith.cmpf ogt, %432, %433 : vector<2x1xf32>
    %cst_181 = arith.constant dense<0.000000e+00> : vector<2x19xf32>
    %435 = tpu.matmul %418, %404, %cst_181 {dimension_numbers = #tpu.dot_dimension_numbers<[1], [0], [0], [1], [0, 0, 1, 1], [], []>} : vector<2x19xf32>, vector<19x19xf32>, vector<2x19xf32> -> vector<2x19xf32>
    %436 = arith.mulf %435, %427 : vector<2x19xf32>
    %cst_182 = arith.constant dense<0.000000e+00> : vector<2xf32>
    %437 = vector.multi_reduction <add>, %436, %cst_182 [1] : vector<2x19xf32> to vector<2xf32>
    %438 = vector.shape_cast %437 : vector<2xf32> to vector<2x1xf32>
    %439 = arith.mulf %429, %427 : vector<2x19xf32>
    %cst_183 = arith.constant dense<0.000000e+00> : vector<2xf32>
    %440 = vector.multi_reduction <add>, %439, %cst_183 [1] : vector<2x19xf32> to vector<2xf32>
    %441 = vector.shape_cast %440 : vector<2xf32> to vector<2x1xf32>
    %442 = arith.addf %438, %441 : vector<2x1xf32>
    %443 = arith.mulf %442, %432 : vector<2x1xf32>
    %444 = arith.addf %423, %443 : vector<2x1xf32>
    %445 = vector.shape_cast %434 : vector<2x1xi1> to vector<2x1xi1>
    %446 = vector.broadcast %445 : vector<2x1xi1> to vector<2x19xi1>
    %447 = arith.select %446, %427, %418 : vector<2x19xi1>, vector<2x19xf32>
    %448 = vector.shape_cast %404 : vector<19x19xf32> to vector<1x19x19xf32>
    %449 = vector.shape_cast %429 : vector<2x19xf32> to vector<2x1x19xf32>
    %450 = vector.broadcast %448 : vector<1x19x19xf32> to vector<2x19x19xf32>
    %451 = vector.broadcast %449 : vector<2x1x19xf32> to vector<2x19x19xf32>
    %452 = arith.addf %450, %451 : vector<2x19x19xf32>
    %453 = vector.shape_cast %425 : vector<2x19xf32> to vector<2x19x1xf32>
    %454 = vector.broadcast %453 : vector<2x19x1xf32> to vector<2x19x19xf32>
    %455 = arith.addf %454, %452 : vector<2x19x19xf32>
    %cst_184 = arith.constant dense<0xFF800000> : vector<2x19xf32>
    %456 = vector.multi_reduction <maximumf>, %455, %cst_184 [1] : vector<2x19x19xf32> to vector<2x19xf32>
    %457 = vector.shape_cast %456 : vector<2x19xf32> to vector<2x1x19xf32>
    %458 = vector.broadcast %457 : vector<2x1x19xf32> to vector<2x19x19xf32>
    %459 = arith.subf %455, %458 : vector<2x19x19xf32>
    %460 = math.exp %459 : vector<2x19x19xf32>
    %cst_185 = arith.constant dense<0.000000e+00> : vector<2x19xf32>
    %461 = vector.multi_reduction <add>, %460, %cst_185 [1] : vector<2x19x19xf32> to vector<2x19xf32>
    %462 = math.log %461 : vector<2x19xf32>
    %463 = arith.addf %462, %456 : vector<2x19xf32>
    %464 = vector.shape_cast %434 : vector<2x1xi1> to vector<2x1xi1>
    %465 = vector.broadcast %464 : vector<2x1xi1> to vector<2x19xi1>
    %466 = arith.select %465, %463, %425 : vector<2x19xi1>, vector<2x19xf32>
    %467 = vector.shape_cast %425 : vector<2x19xf32> to vector<2x19x1xf32>
    %468 = vector.broadcast %467 : vector<2x19x1xf32> to vector<2x19x19xf32>
    %469 = arith.addf %468, %452 : vector<2x19x19xf32>
    %cst_186 = arith.constant dense<0xFF800000> : vector<2x19xf32>
    %470 = vector.multi_reduction <maximumf>, %469, %cst_186 [1] : vector<2x19x19xf32> to vector<2x19xf32>
    %471 = vector.shape_cast %470 : vector<2x19xf32> to vector<2x1x19xf32>
    %472 = vector.broadcast %471 : vector<2x1x19xf32> to vector<2x19x19xf32>
    %473 = arith.cmpf oge, %469, %472 : vector<2x19x19xf32>
    %cst_187 = arith.constant 1.900000e+01 : f32
    %474 = vector.broadcast %cst_187 : f32 to vector<2x19x19xf32>
    %475 = arith.select %473, %408, %474 : vector<2x19x19xi1>, vector<2x19x19xf32>
    %cst_188 = arith.constant dense<0x7F800000> : vector<2x19xf32>
    %476 = vector.multi_reduction <minimumf>, %475, %cst_188 [1] : vector<2x19x19xf32> to vector<2x19xf32>
    %477 = vector.shape_cast %434 : vector<2x1xi1> to vector<2x1xi1>
    %478 = vector.broadcast %477 : vector<2x1xi1> to vector<2x19xi1>
    %479 = arith.select %478, %470, %425 : vector<2x19xi1>, vector<2x19xf32>
    %480 = vector.shape_cast %434 : vector<2x1xi1> to vector<2x1xi1>
    %481 = vector.broadcast %480 : vector<2x1xi1> to vector<2x19xi1>
    %482 = arith.select %481, %476, %406 : vector<2x19xi1>, vector<2x19xf32>
    %483 = vector.extract_strided_slice %414 {offsets = [0, 2, 0], sizes = [2, 1, 19], strides = [1, 1, 1]} : vector<2x8x19xf32> to vector<2x1x19xf32>
    %484 = vector.shape_cast %483 : vector<2x1x19xf32> to vector<2x19xf32>
    %485 = vector.extract_strided_slice %400 {offsets = [0, 2, 0], sizes = [2, 1, 19], strides = [1, 1, 1]} : vector<2x8x19xf32> to vector<2x1x19xf32>
    %486 = vector.shape_cast %485 : vector<2x1x19xf32> to vector<2x19xf32>
    %487 = vector.extract_strided_slice %0 {offsets = [0, 2], sizes = [2, 1], strides = [1, 1]} : vector<2x8xf32> to vector<2x1xf32>
    %488 = vector.shape_cast %487 : vector<2x1xf32> to vector<2xf32>
    %489 = vector.shape_cast %488 : vector<2xf32> to vector<2x1xf32>
    %cst_189 = arith.constant 0.000000e+00 : f32
    %490 = vector.broadcast %cst_189 : f32 to vector<2x1xf32>
    %491 = arith.cmpf ogt, %489, %490 : vector<2x1xf32>
    %cst_190 = arith.constant dense<0.000000e+00> : vector<2x19xf32>
    %492 = tpu.matmul %427, %404, %cst_190 {dimension_numbers = #tpu.dot_dimension_numbers<[1], [0], [0], [1], [0, 0, 1, 1], [], []>} : vector<2x19xf32>, vector<19x19xf32>, vector<2x19xf32> -> vector<2x19xf32>
    %493 = arith.mulf %492, %484 : vector<2x19xf32>
    %cst_191 = arith.constant dense<0.000000e+00> : vector<2xf32>
    %494 = vector.multi_reduction <add>, %493, %cst_191 [1] : vector<2x19xf32> to vector<2xf32>
    %495 = vector.shape_cast %494 : vector<2xf32> to vector<2x1xf32>
    %496 = arith.mulf %486, %484 : vector<2x19xf32>
    %cst_192 = arith.constant dense<0.000000e+00> : vector<2xf32>
    %497 = vector.multi_reduction <add>, %496, %cst_192 [1] : vector<2x19xf32> to vector<2xf32>
    %498 = vector.shape_cast %497 : vector<2xf32> to vector<2x1xf32>
    %499 = arith.addf %495, %498 : vector<2x1xf32>
    %500 = arith.mulf %499, %489 : vector<2x1xf32>
    %501 = arith.addf %444, %500 : vector<2x1xf32>
    %502 = vector.shape_cast %491 : vector<2x1xi1> to vector<2x1xi1>
    %503 = vector.broadcast %502 : vector<2x1xi1> to vector<2x19xi1>
    %504 = arith.select %503, %484, %447 : vector<2x19xi1>, vector<2x19xf32>
    %505 = vector.shape_cast %404 : vector<19x19xf32> to vector<1x19x19xf32>
    %506 = vector.shape_cast %486 : vector<2x19xf32> to vector<2x1x19xf32>
    %507 = vector.broadcast %505 : vector<1x19x19xf32> to vector<2x19x19xf32>
    %508 = vector.broadcast %506 : vector<2x1x19xf32> to vector<2x19x19xf32>
    %509 = arith.addf %507, %508 : vector<2x19x19xf32>
    %510 = vector.shape_cast %466 : vector<2x19xf32> to vector<2x19x1xf32>
    %511 = vector.broadcast %510 : vector<2x19x1xf32> to vector<2x19x19xf32>
    %512 = arith.addf %511, %509 : vector<2x19x19xf32>
    %cst_193 = arith.constant dense<0xFF800000> : vector<2x19xf32>
    %513 = vector.multi_reduction <maximumf>, %512, %cst_193 [1] : vector<2x19x19xf32> to vector<2x19xf32>
    %514 = vector.shape_cast %513 : vector<2x19xf32> to vector<2x1x19xf32>
    %515 = vector.broadcast %514 : vector<2x1x19xf32> to vector<2x19x19xf32>
    %516 = arith.subf %512, %515 : vector<2x19x19xf32>
    %517 = math.exp %516 : vector<2x19x19xf32>
    %cst_194 = arith.constant dense<0.000000e+00> : vector<2x19xf32>
    %518 = vector.multi_reduction <add>, %517, %cst_194 [1] : vector<2x19x19xf32> to vector<2x19xf32>
    %519 = math.log %518 : vector<2x19xf32>
    %520 = arith.addf %519, %513 : vector<2x19xf32>
    %521 = vector.shape_cast %491 : vector<2x1xi1> to vector<2x1xi1>
    %522 = vector.broadcast %521 : vector<2x1xi1> to vector<2x19xi1>
    %523 = arith.select %522, %520, %466 : vector<2x19xi1>, vector<2x19xf32>
    %524 = vector.shape_cast %479 : vector<2x19xf32> to vector<2x19x1xf32>
    %525 = vector.broadcast %524 : vector<2x19x1xf32> to vector<2x19x19xf32>
    %526 = arith.addf %525, %509 : vector<2x19x19xf32>
    %cst_195 = arith.constant dense<0xFF800000> : vector<2x19xf32>
    %527 = vector.multi_reduction <maximumf>, %526, %cst_195 [1] : vector<2x19x19xf32> to vector<2x19xf32>
    %528 = vector.shape_cast %527 : vector<2x19xf32> to vector<2x1x19xf32>
    %529 = vector.broadcast %528 : vector<2x1x19xf32> to vector<2x19x19xf32>
    %530 = arith.cmpf oge, %526, %529 : vector<2x19x19xf32>
    %cst_196 = arith.constant 1.900000e+01 : f32
    %531 = vector.broadcast %cst_196 : f32 to vector<2x19x19xf32>
    %532 = arith.select %530, %408, %531 : vector<2x19x19xi1>, vector<2x19x19xf32>
    %cst_197 = arith.constant dense<0x7F800000> : vector<2x19xf32>
    %533 = vector.multi_reduction <minimumf>, %532, %cst_197 [1] : vector<2x19x19xf32> to vector<2x19xf32>
    %534 = vector.shape_cast %491 : vector<2x1xi1> to vector<2x1xi1>
    %535 = vector.broadcast %534 : vector<2x1xi1> to vector<2x19xi1>
    %536 = arith.select %535, %527, %479 : vector<2x19xi1>, vector<2x19xf32>
    %537 = vector.shape_cast %491 : vector<2x1xi1> to vector<2x1xi1>
    %538 = vector.broadcast %537 : vector<2x1xi1> to vector<2x19xi1>
    %539 = arith.select %538, %533, %406 : vector<2x19xi1>, vector<2x19xf32>
    %540 = vector.extract_strided_slice %414 {offsets = [0, 3, 0], sizes = [2, 1, 19], strides = [1, 1, 1]} : vector<2x8x19xf32> to vector<2x1x19xf32>
    %541 = vector.shape_cast %540 : vector<2x1x19xf32> to vector<2x19xf32>
    %542 = vector.extract_strided_slice %400 {offsets = [0, 3, 0], sizes = [2, 1, 19], strides = [1, 1, 1]} : vector<2x8x19xf32> to vector<2x1x19xf32>
    %543 = vector.shape_cast %542 : vector<2x1x19xf32> to vector<2x19xf32>
    %544 = vector.extract_strided_slice %0 {offsets = [0, 3], sizes = [2, 1], strides = [1, 1]} : vector<2x8xf32> to vector<2x1xf32>
    %545 = vector.shape_cast %544 : vector<2x1xf32> to vector<2xf32>
    %546 = vector.shape_cast %545 : vector<2xf32> to vector<2x1xf32>
    %cst_198 = arith.constant 0.000000e+00 : f32
    %547 = vector.broadcast %cst_198 : f32 to vector<2x1xf32>
    %548 = arith.cmpf ogt, %546, %547 : vector<2x1xf32>
    %cst_199 = arith.constant dense<0.000000e+00> : vector<2x19xf32>
    %549 = tpu.matmul %484, %404, %cst_199 {dimension_numbers = #tpu.dot_dimension_numbers<[1], [0], [0], [1], [0, 0, 1, 1], [], []>} : vector<2x19xf32>, vector<19x19xf32>, vector<2x19xf32> -> vector<2x19xf32>
    %550 = arith.mulf %549, %541 : vector<2x19xf32>
    %cst_200 = arith.constant dense<0.000000e+00> : vector<2xf32>
    %551 = vector.multi_reduction <add>, %550, %cst_200 [1] : vector<2x19xf32> to vector<2xf32>
    %552 = vector.shape_cast %551 : vector<2xf32> to vector<2x1xf32>
    %553 = arith.mulf %543, %541 : vector<2x19xf32>
    %cst_201 = arith.constant dense<0.000000e+00> : vector<2xf32>
    %554 = vector.multi_reduction <add>, %553, %cst_201 [1] : vector<2x19xf32> to vector<2xf32>
    %555 = vector.shape_cast %554 : vector<2xf32> to vector<2x1xf32>
    %556 = arith.addf %552, %555 : vector<2x1xf32>
    %557 = arith.mulf %556, %546 : vector<2x1xf32>
    %558 = arith.addf %501, %557 : vector<2x1xf32>
    %559 = vector.shape_cast %548 : vector<2x1xi1> to vector<2x1xi1>
    %560 = vector.broadcast %559 : vector<2x1xi1> to vector<2x19xi1>
    %561 = arith.select %560, %541, %504 : vector<2x19xi1>, vector<2x19xf32>
    %562 = vector.shape_cast %404 : vector<19x19xf32> to vector<1x19x19xf32>
    %563 = vector.shape_cast %543 : vector<2x19xf32> to vector<2x1x19xf32>
    %564 = vector.broadcast %562 : vector<1x19x19xf32> to vector<2x19x19xf32>
    %565 = vector.broadcast %563 : vector<2x1x19xf32> to vector<2x19x19xf32>
    %566 = arith.addf %564, %565 : vector<2x19x19xf32>
    %567 = vector.shape_cast %523 : vector<2x19xf32> to vector<2x19x1xf32>
    %568 = vector.broadcast %567 : vector<2x19x1xf32> to vector<2x19x19xf32>
    %569 = arith.addf %568, %566 : vector<2x19x19xf32>
    %cst_202 = arith.constant dense<0xFF800000> : vector<2x19xf32>
    %570 = vector.multi_reduction <maximumf>, %569, %cst_202 [1] : vector<2x19x19xf32> to vector<2x19xf32>
    %571 = vector.shape_cast %570 : vector<2x19xf32> to vector<2x1x19xf32>
    %572 = vector.broadcast %571 : vector<2x1x19xf32> to vector<2x19x19xf32>
    %573 = arith.subf %569, %572 : vector<2x19x19xf32>
    %574 = math.exp %573 : vector<2x19x19xf32>
    %cst_203 = arith.constant dense<0.000000e+00> : vector<2x19xf32>
    %575 = vector.multi_reduction <add>, %574, %cst_203 [1] : vector<2x19x19xf32> to vector<2x19xf32>
    %576 = math.log %575 : vector<2x19xf32>
    %577 = arith.addf %576, %570 : vector<2x19xf32>
    %578 = vector.shape_cast %548 : vector<2x1xi1> to vector<2x1xi1>
    %579 = vector.broadcast %578 : vector<2x1xi1> to vector<2x19xi1>
    %580 = arith.select %579, %577, %523 : vector<2x19xi1>, vector<2x19xf32>
    %581 = vector.shape_cast %536 : vector<2x19xf32> to vector<2x19x1xf32>
    %582 = vector.broadcast %581 : vector<2x19x1xf32> to vector<2x19x19xf32>
    %583 = arith.addf %582, %566 : vector<2x19x19xf32>
    %cst_204 = arith.constant dense<0xFF800000> : vector<2x19xf32>
    %584 = vector.multi_reduction <maximumf>, %583, %cst_204 [1] : vector<2x19x19xf32> to vector<2x19xf32>
    %585 = vector.shape_cast %584 : vector<2x19xf32> to vector<2x1x19xf32>
    %586 = vector.broadcast %585 : vector<2x1x19xf32> to vector<2x19x19xf32>
    %587 = arith.cmpf oge, %583, %586 : vector<2x19x19xf32>
    %cst_205 = arith.constant 1.900000e+01 : f32
    %588 = vector.broadcast %cst_205 : f32 to vector<2x19x19xf32>
    %589 = arith.select %587, %408, %588 : vector<2x19x19xi1>, vector<2x19x19xf32>
    %cst_206 = arith.constant dense<0x7F800000> : vector<2x19xf32>
    %590 = vector.multi_reduction <minimumf>, %589, %cst_206 [1] : vector<2x19x19xf32> to vector<2x19xf32>
    %591 = vector.shape_cast %548 : vector<2x1xi1> to vector<2x1xi1>
    %592 = vector.broadcast %591 : vector<2x1xi1> to vector<2x19xi1>
    %593 = arith.select %592, %584, %536 : vector<2x19xi1>, vector<2x19xf32>
    %594 = vector.shape_cast %548 : vector<2x1xi1> to vector<2x1xi1>
    %595 = vector.broadcast %594 : vector<2x1xi1> to vector<2x19xi1>
    %596 = arith.select %595, %590, %406 : vector<2x19xi1>, vector<2x19xf32>
    %597 = vector.extract_strided_slice %414 {offsets = [0, 4, 0], sizes = [2, 1, 19], strides = [1, 1, 1]} : vector<2x8x19xf32> to vector<2x1x19xf32>
    %598 = vector.shape_cast %597 : vector<2x1x19xf32> to vector<2x19xf32>
    %599 = vector.extract_strided_slice %400 {offsets = [0, 4, 0], sizes = [2, 1, 19], strides = [1, 1, 1]} : vector<2x8x19xf32> to vector<2x1x19xf32>
    %600 = vector.shape_cast %599 : vector<2x1x19xf32> to vector<2x19xf32>
    %601 = vector.extract_strided_slice %0 {offsets = [0, 4], sizes = [2, 1], strides = [1, 1]} : vector<2x8xf32> to vector<2x1xf32>
    %602 = vector.shape_cast %601 : vector<2x1xf32> to vector<2xf32>
    %603 = vector.shape_cast %602 : vector<2xf32> to vector<2x1xf32>
    %cst_207 = arith.constant 0.000000e+00 : f32
    %604 = vector.broadcast %cst_207 : f32 to vector<2x1xf32>
    %605 = arith.cmpf ogt, %603, %604 : vector<2x1xf32>
    %cst_208 = arith.constant dense<0.000000e+00> : vector<2x19xf32>
    %606 = tpu.matmul %541, %404, %cst_208 {dimension_numbers = #tpu.dot_dimension_numbers<[1], [0], [0], [1], [0, 0, 1, 1], [], []>} : vector<2x19xf32>, vector<19x19xf32>, vector<2x19xf32> -> vector<2x19xf32>
    %607 = arith.mulf %606, %598 : vector<2x19xf32>
    %cst_209 = arith.constant dense<0.000000e+00> : vector<2xf32>
    %608 = vector.multi_reduction <add>, %607, %cst_209 [1] : vector<2x19xf32> to vector<2xf32>
    %609 = vector.shape_cast %608 : vector<2xf32> to vector<2x1xf32>
    %610 = arith.mulf %600, %598 : vector<2x19xf32>
    %cst_210 = arith.constant dense<0.000000e+00> : vector<2xf32>
    %611 = vector.multi_reduction <add>, %610, %cst_210 [1] : vector<2x19xf32> to vector<2xf32>
    %612 = vector.shape_cast %611 : vector<2xf32> to vector<2x1xf32>
    %613 = arith.addf %609, %612 : vector<2x1xf32>
    %614 = arith.mulf %613, %603 : vector<2x1xf32>
    %615 = arith.addf %558, %614 : vector<2x1xf32>
    %616 = vector.shape_cast %605 : vector<2x1xi1> to vector<2x1xi1>
    %617 = vector.broadcast %616 : vector<2x1xi1> to vector<2x19xi1>
    %618 = arith.select %617, %598, %561 : vector<2x19xi1>, vector<2x19xf32>
    %619 = vector.shape_cast %404 : vector<19x19xf32> to vector<1x19x19xf32>
    %620 = vector.shape_cast %600 : vector<2x19xf32> to vector<2x1x19xf32>
    %621 = vector.broadcast %619 : vector<1x19x19xf32> to vector<2x19x19xf32>
    %622 = vector.broadcast %620 : vector<2x1x19xf32> to vector<2x19x19xf32>
    %623 = arith.addf %621, %622 : vector<2x19x19xf32>
    %624 = vector.shape_cast %580 : vector<2x19xf32> to vector<2x19x1xf32>
    %625 = vector.broadcast %624 : vector<2x19x1xf32> to vector<2x19x19xf32>
    %626 = arith.addf %625, %623 : vector<2x19x19xf32>
    %cst_211 = arith.constant dense<0xFF800000> : vector<2x19xf32>
    %627 = vector.multi_reduction <maximumf>, %626, %cst_211 [1] : vector<2x19x19xf32> to vector<2x19xf32>
    %628 = vector.shape_cast %627 : vector<2x19xf32> to vector<2x1x19xf32>
    %629 = vector.broadcast %628 : vector<2x1x19xf32> to vector<2x19x19xf32>
    %630 = arith.subf %626, %629 : vector<2x19x19xf32>
    %631 = math.exp %630 : vector<2x19x19xf32>
    %cst_212 = arith.constant dense<0.000000e+00> : vector<2x19xf32>
    %632 = vector.multi_reduction <add>, %631, %cst_212 [1] : vector<2x19x19xf32> to vector<2x19xf32>
    %633 = math.log %632 : vector<2x19xf32>
    %634 = arith.addf %633, %627 : vector<2x19xf32>
    %635 = vector.shape_cast %605 : vector<2x1xi1> to vector<2x1xi1>
    %636 = vector.broadcast %635 : vector<2x1xi1> to vector<2x19xi1>
    %637 = arith.select %636, %634, %580 : vector<2x19xi1>, vector<2x19xf32>
    %638 = vector.shape_cast %593 : vector<2x19xf32> to vector<2x19x1xf32>
    %639 = vector.broadcast %638 : vector<2x19x1xf32> to vector<2x19x19xf32>
    %640 = arith.addf %639, %623 : vector<2x19x19xf32>
    %cst_213 = arith.constant dense<0xFF800000> : vector<2x19xf32>
    %641 = vector.multi_reduction <maximumf>, %640, %cst_213 [1] : vector<2x19x19xf32> to vector<2x19xf32>
    %642 = vector.shape_cast %641 : vector<2x19xf32> to vector<2x1x19xf32>
    %643 = vector.broadcast %642 : vector<2x1x19xf32> to vector<2x19x19xf32>
    %644 = arith.cmpf oge, %640, %643 : vector<2x19x19xf32>
    %cst_214 = arith.constant 1.900000e+01 : f32
    %645 = vector.broadcast %cst_214 : f32 to vector<2x19x19xf32>
    %646 = arith.select %644, %408, %645 : vector<2x19x19xi1>, vector<2x19x19xf32>
    %cst_215 = arith.constant dense<0x7F800000> : vector<2x19xf32>
    %647 = vector.multi_reduction <minimumf>, %646, %cst_215 [1] : vector<2x19x19xf32> to vector<2x19xf32>
    %648 = vector.shape_cast %605 : vector<2x1xi1> to vector<2x1xi1>
    %649 = vector.broadcast %648 : vector<2x1xi1> to vector<2x19xi1>
    %650 = arith.select %649, %641, %593 : vector<2x19xi1>, vector<2x19xf32>
    %651 = vector.shape_cast %605 : vector<2x1xi1> to vector<2x1xi1>
    %652 = vector.broadcast %651 : vector<2x1xi1> to vector<2x19xi1>
    %653 = arith.select %652, %647, %406 : vector<2x19xi1>, vector<2x19xf32>
    %654 = vector.extract_strided_slice %414 {offsets = [0, 5, 0], sizes = [2, 1, 19], strides = [1, 1, 1]} : vector<2x8x19xf32> to vector<2x1x19xf32>
    %655 = vector.shape_cast %654 : vector<2x1x19xf32> to vector<2x19xf32>
    %656 = vector.extract_strided_slice %400 {offsets = [0, 5, 0], sizes = [2, 1, 19], strides = [1, 1, 1]} : vector<2x8x19xf32> to vector<2x1x19xf32>
    %657 = vector.shape_cast %656 : vector<2x1x19xf32> to vector<2x19xf32>
    %658 = vector.extract_strided_slice %0 {offsets = [0, 5], sizes = [2, 1], strides = [1, 1]} : vector<2x8xf32> to vector<2x1xf32>
    %659 = vector.shape_cast %658 : vector<2x1xf32> to vector<2xf32>
    %660 = vector.shape_cast %659 : vector<2xf32> to vector<2x1xf32>
    %cst_216 = arith.constant 0.000000e+00 : f32
    %661 = vector.broadcast %cst_216 : f32 to vector<2x1xf32>
    %662 = arith.cmpf ogt, %660, %661 : vector<2x1xf32>
    %cst_217 = arith.constant dense<0.000000e+00> : vector<2x19xf32>
    %663 = tpu.matmul %598, %404, %cst_217 {dimension_numbers = #tpu.dot_dimension_numbers<[1], [0], [0], [1], [0, 0, 1, 1], [], []>} : vector<2x19xf32>, vector<19x19xf32>, vector<2x19xf32> -> vector<2x19xf32>
    %664 = arith.mulf %663, %655 : vector<2x19xf32>
    %cst_218 = arith.constant dense<0.000000e+00> : vector<2xf32>
    %665 = vector.multi_reduction <add>, %664, %cst_218 [1] : vector<2x19xf32> to vector<2xf32>
    %666 = vector.shape_cast %665 : vector<2xf32> to vector<2x1xf32>
    %667 = arith.mulf %657, %655 : vector<2x19xf32>
    %cst_219 = arith.constant dense<0.000000e+00> : vector<2xf32>
    %668 = vector.multi_reduction <add>, %667, %cst_219 [1] : vector<2x19xf32> to vector<2xf32>
    %669 = vector.shape_cast %668 : vector<2xf32> to vector<2x1xf32>
    %670 = arith.addf %666, %669 : vector<2x1xf32>
    %671 = arith.mulf %670, %660 : vector<2x1xf32>
    %672 = arith.addf %615, %671 : vector<2x1xf32>
    %673 = vector.shape_cast %662 : vector<2x1xi1> to vector<2x1xi1>
    %674 = vector.broadcast %673 : vector<2x1xi1> to vector<2x19xi1>
    %675 = arith.select %674, %655, %618 : vector<2x19xi1>, vector<2x19xf32>
    %676 = vector.shape_cast %404 : vector<19x19xf32> to vector<1x19x19xf32>
    %677 = vector.shape_cast %657 : vector<2x19xf32> to vector<2x1x19xf32>
    %678 = vector.broadcast %676 : vector<1x19x19xf32> to vector<2x19x19xf32>
    %679 = vector.broadcast %677 : vector<2x1x19xf32> to vector<2x19x19xf32>
    %680 = arith.addf %678, %679 : vector<2x19x19xf32>
    %681 = vector.shape_cast %637 : vector<2x19xf32> to vector<2x19x1xf32>
    %682 = vector.broadcast %681 : vector<2x19x1xf32> to vector<2x19x19xf32>
    %683 = arith.addf %682, %680 : vector<2x19x19xf32>
    %cst_220 = arith.constant dense<0xFF800000> : vector<2x19xf32>
    %684 = vector.multi_reduction <maximumf>, %683, %cst_220 [1] : vector<2x19x19xf32> to vector<2x19xf32>
    %685 = vector.shape_cast %684 : vector<2x19xf32> to vector<2x1x19xf32>
    %686 = vector.broadcast %685 : vector<2x1x19xf32> to vector<2x19x19xf32>
    %687 = arith.subf %683, %686 : vector<2x19x19xf32>
    %688 = math.exp %687 : vector<2x19x19xf32>
    %cst_221 = arith.constant dense<0.000000e+00> : vector<2x19xf32>
    %689 = vector.multi_reduction <add>, %688, %cst_221 [1] : vector<2x19x19xf32> to vector<2x19xf32>
    %690 = math.log %689 : vector<2x19xf32>
    %691 = arith.addf %690, %684 : vector<2x19xf32>
    %692 = vector.shape_cast %662 : vector<2x1xi1> to vector<2x1xi1>
    %693 = vector.broadcast %692 : vector<2x1xi1> to vector<2x19xi1>
    %694 = arith.select %693, %691, %637 : vector<2x19xi1>, vector<2x19xf32>
    %695 = vector.shape_cast %650 : vector<2x19xf32> to vector<2x19x1xf32>
    %696 = vector.broadcast %695 : vector<2x19x1xf32> to vector<2x19x19xf32>
    %697 = arith.addf %696, %680 : vector<2x19x19xf32>
    %cst_222 = arith.constant dense<0xFF800000> : vector<2x19xf32>
    %698 = vector.multi_reduction <maximumf>, %697, %cst_222 [1] : vector<2x19x19xf32> to vector<2x19xf32>
    %699 = vector.shape_cast %698 : vector<2x19xf32> to vector<2x1x19xf32>
    %700 = vector.broadcast %699 : vector<2x1x19xf32> to vector<2x19x19xf32>
    %701 = arith.cmpf oge, %697, %700 : vector<2x19x19xf32>
    %cst_223 = arith.constant 1.900000e+01 : f32
    %702 = vector.broadcast %cst_223 : f32 to vector<2x19x19xf32>
    %703 = arith.select %701, %408, %702 : vector<2x19x19xi1>, vector<2x19x19xf32>
    %cst_224 = arith.constant dense<0x7F800000> : vector<2x19xf32>
    %704 = vector.multi_reduction <minimumf>, %703, %cst_224 [1] : vector<2x19x19xf32> to vector<2x19xf32>
    %705 = vector.shape_cast %662 : vector<2x1xi1> to vector<2x1xi1>
    %706 = vector.broadcast %705 : vector<2x1xi1> to vector<2x19xi1>
    %707 = arith.select %706, %698, %650 : vector<2x19xi1>, vector<2x19xf32>
    %708 = vector.shape_cast %662 : vector<2x1xi1> to vector<2x1xi1>
    %709 = vector.broadcast %708 : vector<2x1xi1> to vector<2x19xi1>
    %710 = arith.select %709, %704, %406 : vector<2x19xi1>, vector<2x19xf32>
    %711 = vector.extract_strided_slice %414 {offsets = [0, 6, 0], sizes = [2, 1, 19], strides = [1, 1, 1]} : vector<2x8x19xf32> to vector<2x1x19xf32>
    %712 = vector.shape_cast %711 : vector<2x1x19xf32> to vector<2x19xf32>
    %713 = vector.extract_strided_slice %400 {offsets = [0, 6, 0], sizes = [2, 1, 19], strides = [1, 1, 1]} : vector<2x8x19xf32> to vector<2x1x19xf32>
    %714 = vector.shape_cast %713 : vector<2x1x19xf32> to vector<2x19xf32>
    %715 = vector.extract_strided_slice %0 {offsets = [0, 6], sizes = [2, 1], strides = [1, 1]} : vector<2x8xf32> to vector<2x1xf32>
    %716 = vector.shape_cast %715 : vector<2x1xf32> to vector<2xf32>
    %717 = vector.shape_cast %716 : vector<2xf32> to vector<2x1xf32>
    %cst_225 = arith.constant 0.000000e+00 : f32
    %718 = vector.broadcast %cst_225 : f32 to vector<2x1xf32>
    %719 = arith.cmpf ogt, %717, %718 : vector<2x1xf32>
    %cst_226 = arith.constant dense<0.000000e+00> : vector<2x19xf32>
    %720 = tpu.matmul %655, %404, %cst_226 {dimension_numbers = #tpu.dot_dimension_numbers<[1], [0], [0], [1], [0, 0, 1, 1], [], []>} : vector<2x19xf32>, vector<19x19xf32>, vector<2x19xf32> -> vector<2x19xf32>
    %721 = arith.mulf %720, %712 : vector<2x19xf32>
    %cst_227 = arith.constant dense<0.000000e+00> : vector<2xf32>
    %722 = vector.multi_reduction <add>, %721, %cst_227 [1] : vector<2x19xf32> to vector<2xf32>
    %723 = vector.shape_cast %722 : vector<2xf32> to vector<2x1xf32>
    %724 = arith.mulf %714, %712 : vector<2x19xf32>
    %cst_228 = arith.constant dense<0.000000e+00> : vector<2xf32>
    %725 = vector.multi_reduction <add>, %724, %cst_228 [1] : vector<2x19xf32> to vector<2xf32>
    %726 = vector.shape_cast %725 : vector<2xf32> to vector<2x1xf32>
    %727 = arith.addf %723, %726 : vector<2x1xf32>
    %728 = arith.mulf %727, %717 : vector<2x1xf32>
    %729 = arith.addf %672, %728 : vector<2x1xf32>
    %730 = vector.shape_cast %719 : vector<2x1xi1> to vector<2x1xi1>
    %731 = vector.broadcast %730 : vector<2x1xi1> to vector<2x19xi1>
    %732 = arith.select %731, %712, %675 : vector<2x19xi1>, vector<2x19xf32>
    %733 = vector.shape_cast %404 : vector<19x19xf32> to vector<1x19x19xf32>
    %734 = vector.shape_cast %714 : vector<2x19xf32> to vector<2x1x19xf32>
    %735 = vector.broadcast %733 : vector<1x19x19xf32> to vector<2x19x19xf32>
    %736 = vector.broadcast %734 : vector<2x1x19xf32> to vector<2x19x19xf32>
    %737 = arith.addf %735, %736 : vector<2x19x19xf32>
    %738 = vector.shape_cast %694 : vector<2x19xf32> to vector<2x19x1xf32>
    %739 = vector.broadcast %738 : vector<2x19x1xf32> to vector<2x19x19xf32>
    %740 = arith.addf %739, %737 : vector<2x19x19xf32>
    %cst_229 = arith.constant dense<0xFF800000> : vector<2x19xf32>
    %741 = vector.multi_reduction <maximumf>, %740, %cst_229 [1] : vector<2x19x19xf32> to vector<2x19xf32>
    %742 = vector.shape_cast %741 : vector<2x19xf32> to vector<2x1x19xf32>
    %743 = vector.broadcast %742 : vector<2x1x19xf32> to vector<2x19x19xf32>
    %744 = arith.subf %740, %743 : vector<2x19x19xf32>
    %745 = math.exp %744 : vector<2x19x19xf32>
    %cst_230 = arith.constant dense<0.000000e+00> : vector<2x19xf32>
    %746 = vector.multi_reduction <add>, %745, %cst_230 [1] : vector<2x19x19xf32> to vector<2x19xf32>
    %747 = math.log %746 : vector<2x19xf32>
    %748 = arith.addf %747, %741 : vector<2x19xf32>
    %749 = vector.shape_cast %719 : vector<2x1xi1> to vector<2x1xi1>
    %750 = vector.broadcast %749 : vector<2x1xi1> to vector<2x19xi1>
    %751 = arith.select %750, %748, %694 : vector<2x19xi1>, vector<2x19xf32>
    %752 = vector.shape_cast %707 : vector<2x19xf32> to vector<2x19x1xf32>
    %753 = vector.broadcast %752 : vector<2x19x1xf32> to vector<2x19x19xf32>
    %754 = arith.addf %753, %737 : vector<2x19x19xf32>
    %cst_231 = arith.constant dense<0xFF800000> : vector<2x19xf32>
    %755 = vector.multi_reduction <maximumf>, %754, %cst_231 [1] : vector<2x19x19xf32> to vector<2x19xf32>
    %756 = vector.shape_cast %755 : vector<2x19xf32> to vector<2x1x19xf32>
    %757 = vector.broadcast %756 : vector<2x1x19xf32> to vector<2x19x19xf32>
    %758 = arith.cmpf oge, %754, %757 : vector<2x19x19xf32>
    %cst_232 = arith.constant 1.900000e+01 : f32
    %759 = vector.broadcast %cst_232 : f32 to vector<2x19x19xf32>
    %760 = arith.select %758, %408, %759 : vector<2x19x19xi1>, vector<2x19x19xf32>
    %cst_233 = arith.constant dense<0x7F800000> : vector<2x19xf32>
    %761 = vector.multi_reduction <minimumf>, %760, %cst_233 [1] : vector<2x19x19xf32> to vector<2x19xf32>
    %762 = vector.shape_cast %719 : vector<2x1xi1> to vector<2x1xi1>
    %763 = vector.broadcast %762 : vector<2x1xi1> to vector<2x19xi1>
    %764 = arith.select %763, %755, %707 : vector<2x19xi1>, vector<2x19xf32>
    %765 = vector.shape_cast %719 : vector<2x1xi1> to vector<2x1xi1>
    %766 = vector.broadcast %765 : vector<2x1xi1> to vector<2x19xi1>
    %767 = arith.select %766, %761, %406 : vector<2x19xi1>, vector<2x19xf32>
    %768 = vector.extract_strided_slice %414 {offsets = [0, 7, 0], sizes = [2, 1, 19], strides = [1, 1, 1]} : vector<2x8x19xf32> to vector<2x1x19xf32>
    %769 = vector.shape_cast %768 : vector<2x1x19xf32> to vector<2x19xf32>
    %770 = vector.extract_strided_slice %400 {offsets = [0, 7, 0], sizes = [2, 1, 19], strides = [1, 1, 1]} : vector<2x8x19xf32> to vector<2x1x19xf32>
    %771 = vector.shape_cast %770 : vector<2x1x19xf32> to vector<2x19xf32>
    %772 = vector.extract_strided_slice %0 {offsets = [0, 7], sizes = [2, 1], strides = [1, 1]} : vector<2x8xf32> to vector<2x1xf32>
    %773 = vector.shape_cast %772 : vector<2x1xf32> to vector<2xf32>
    %774 = vector.shape_cast %773 : vector<2xf32> to vector<2x1xf32>
    %cst_234 = arith.constant 0.000000e+00 : f32
    %775 = vector.broadcast %cst_234 : f32 to vector<2x1xf32>
    %776 = arith.cmpf ogt, %774, %775 : vector<2x1xf32>
    %cst_235 = arith.constant dense<0.000000e+00> : vector<2x19xf32>
    %777 = tpu.matmul %712, %404, %cst_235 {dimension_numbers = #tpu.dot_dimension_numbers<[1], [0], [0], [1], [0, 0, 1, 1], [], []>} : vector<2x19xf32>, vector<19x19xf32>, vector<2x19xf32> -> vector<2x19xf32>
    %778 = arith.mulf %777, %769 : vector<2x19xf32>
    %cst_236 = arith.constant dense<0.000000e+00> : vector<2xf32>
    %779 = vector.multi_reduction <add>, %778, %cst_236 [1] : vector<2x19xf32> to vector<2xf32>
    %780 = vector.shape_cast %779 : vector<2xf32> to vector<2x1xf32>
    %781 = arith.mulf %771, %769 : vector<2x19xf32>
    %cst_237 = arith.constant dense<0.000000e+00> : vector<2xf32>
    %782 = vector.multi_reduction <add>, %781, %cst_237 [1] : vector<2x19xf32> to vector<2xf32>
    %783 = vector.shape_cast %782 : vector<2xf32> to vector<2x1xf32>
    %784 = arith.addf %780, %783 : vector<2x1xf32>
    %785 = arith.mulf %784, %774 : vector<2x1xf32>
    %786 = arith.addf %729, %785 : vector<2x1xf32>
    %787 = vector.shape_cast %776 : vector<2x1xi1> to vector<2x1xi1>
    %788 = vector.broadcast %787 : vector<2x1xi1> to vector<2x19xi1>
    %789 = arith.select %788, %769, %732 : vector<2x19xi1>, vector<2x19xf32>
    %790 = vector.shape_cast %404 : vector<19x19xf32> to vector<1x19x19xf32>
    %791 = vector.shape_cast %771 : vector<2x19xf32> to vector<2x1x19xf32>
    %792 = vector.broadcast %790 : vector<1x19x19xf32> to vector<2x19x19xf32>
    %793 = vector.broadcast %791 : vector<2x1x19xf32> to vector<2x19x19xf32>
    %794 = arith.addf %792, %793 : vector<2x19x19xf32>
    %795 = vector.shape_cast %751 : vector<2x19xf32> to vector<2x19x1xf32>
    %796 = vector.broadcast %795 : vector<2x19x1xf32> to vector<2x19x19xf32>
    %797 = arith.addf %796, %794 : vector<2x19x19xf32>
    %cst_238 = arith.constant dense<0xFF800000> : vector<2x19xf32>
    %798 = vector.multi_reduction <maximumf>, %797, %cst_238 [1] : vector<2x19x19xf32> to vector<2x19xf32>
    %799 = vector.shape_cast %798 : vector<2x19xf32> to vector<2x1x19xf32>
    %800 = vector.broadcast %799 : vector<2x1x19xf32> to vector<2x19x19xf32>
    %801 = arith.subf %797, %800 : vector<2x19x19xf32>
    %802 = math.exp %801 : vector<2x19x19xf32>
    %cst_239 = arith.constant dense<0.000000e+00> : vector<2x19xf32>
    %803 = vector.multi_reduction <add>, %802, %cst_239 [1] : vector<2x19x19xf32> to vector<2x19xf32>
    %804 = math.log %803 : vector<2x19xf32>
    %805 = arith.addf %804, %798 : vector<2x19xf32>
    %806 = vector.shape_cast %776 : vector<2x1xi1> to vector<2x1xi1>
    %807 = vector.broadcast %806 : vector<2x1xi1> to vector<2x19xi1>
    %808 = arith.select %807, %805, %751 : vector<2x19xi1>, vector<2x19xf32>
    %809 = vector.shape_cast %764 : vector<2x19xf32> to vector<2x19x1xf32>
    %810 = vector.broadcast %809 : vector<2x19x1xf32> to vector<2x19x19xf32>
    %811 = arith.addf %810, %794 : vector<2x19x19xf32>
    %cst_240 = arith.constant dense<0xFF800000> : vector<2x19xf32>
    %812 = vector.multi_reduction <maximumf>, %811, %cst_240 [1] : vector<2x19x19xf32> to vector<2x19xf32>
    %813 = vector.shape_cast %812 : vector<2x19xf32> to vector<2x1x19xf32>
    %814 = vector.broadcast %813 : vector<2x1x19xf32> to vector<2x19x19xf32>
    %815 = arith.cmpf oge, %811, %814 : vector<2x19x19xf32>
    %cst_241 = arith.constant 1.900000e+01 : f32
    %816 = vector.broadcast %cst_241 : f32 to vector<2x19x19xf32>
    %817 = arith.select %815, %408, %816 : vector<2x19x19xi1>, vector<2x19x19xf32>
    %cst_242 = arith.constant dense<0x7F800000> : vector<2x19xf32>
    %818 = vector.multi_reduction <minimumf>, %817, %cst_242 [1] : vector<2x19x19xf32> to vector<2x19xf32>
    %819 = vector.shape_cast %776 : vector<2x1xi1> to vector<2x1xi1>
    %820 = vector.broadcast %819 : vector<2x1xi1> to vector<2x19xi1>
    %821 = arith.select %820, %812, %764 : vector<2x19xi1>, vector<2x19xf32>
    %822 = vector.shape_cast %776 : vector<2x1xi1> to vector<2x1xi1>
    %823 = vector.broadcast %822 : vector<2x1xi1> to vector<2x19xi1>
    %824 = arith.select %823, %818, %406 : vector<2x19xi1>, vector<2x19xf32>
    %825 = vector.broadcast %403 : vector<1x19xf32> to vector<2x19xf32>
    %826 = arith.mulf %825, %789 : vector<2x19xf32>
    %cst_243 = arith.constant dense<0.000000e+00> : vector<2xf32>
    %827 = vector.multi_reduction <add>, %826, %cst_243 [1] : vector<2x19xf32> to vector<2xf32>
    %828 = vector.shape_cast %827 : vector<2xf32> to vector<2x1xf32>
    %829 = arith.addf %786, %828 : vector<2x1xf32>
    %830 = vector.broadcast %403 : vector<1x19xf32> to vector<2x19xf32>
    %831 = arith.addf %808, %830 : vector<2x19xf32>
    %cst_244 = arith.constant dense<0xFF800000> : vector<2xf32>
    %832 = vector.multi_reduction <maximumf>, %831, %cst_244 [1] : vector<2x19xf32> to vector<2xf32>
    %833 = vector.shape_cast %832 : vector<2xf32> to vector<2x1xf32>
    %834 = vector.broadcast %833 : vector<2x1xf32> to vector<2x19xf32>
    %835 = arith.subf %831, %834 : vector<2x19xf32>
    %836 = math.exp %835 : vector<2x19xf32>
    %cst_245 = arith.constant dense<0.000000e+00> : vector<2xf32>
    %837 = vector.multi_reduction <add>, %836, %cst_245 [1] : vector<2x19xf32> to vector<2xf32>
    %838 = vector.shape_cast %837 : vector<2xf32> to vector<2x1xf32>
    %839 = math.log %838 : vector<2x1xf32>
    %840 = arith.addf %839, %833 : vector<2x1xf32>
    %841 = arith.subf %829, %840 : vector<2x1xf32>
    %c0_246 = arith.constant 0 : index
    %c0_247 = arith.constant 0 : index
    %842 = vector.load %arg23[%c0_246, %c0_247] : memref<2x1xf32, #tpu.memory_space<vmem>>, vector<2x1xf32>
    tpu.vector_store %arg23[%c0_246, %c0_247], %841 {strides = array<i32>} : memref<2x1xf32, #tpu.memory_space<vmem>>, vector<2x1xf32>,
    %843 = vector.broadcast %403 : vector<1x19xf32> to vector<2x19xf32>
    %844 = arith.addf %821, %843 : vector<2x19xf32>
    %cst_248 = arith.constant dense<0xFF800000> : vector<2xf32>
    %845 = vector.multi_reduction <maximumf>, %844, %cst_248 [1] : vector<2x19xf32> to vector<2xf32>
    %846 = vector.shape_cast %845 : vector<2xf32> to vector<2x1xf32>
    %847 = vector.broadcast %846 : vector<2x1xf32> to vector<2x19xf32>
    %848 = arith.cmpf oge, %844, %847 : vector<2x19xf32>
    %cst_249 = arith.constant 1.900000e+01 : f32
    %849 = vector.broadcast %cst_249 : f32 to vector<2x19xf32>
    %850 = arith.select %848, %406, %849 : vector<2x19xi1>, vector<2x19xf32>
    %cst_250 = arith.constant dense<0x7F800000> : vector<2xf32>
    %851 = vector.multi_reduction <minimumf>, %850, %cst_250 [1] : vector<2x19xf32> to vector<2xf32>
    %852 = vector.shape_cast %851 : vector<2xf32> to vector<2x1xf32>
    %853 = vector.broadcast %852 : vector<2x1xf32> to vector<2x19xf32>
    %854 = arith.cmpf oeq, %406, %853 : vector<2x19xf32>
    %855 = arith.extui %854 : vector<2x19xi1> to vector<2x19xi32>
    %856 = arith.sitofp %855 : vector<2x19xi32> to vector<2x19xf32>
    %857 = arith.mulf %856, %824 : vector<2x19xf32>
    %cst_251 = arith.constant dense<0.000000e+00> : vector<2xf32>
    %858 = vector.multi_reduction <add>, %857, %cst_251 [1] : vector<2x19xf32> to vector<2xf32>
    %859 = vector.shape_cast %858 : vector<2xf32> to vector<2x1xf32>
    %860 = vector.broadcast %859 : vector<2x1xf32> to vector<2x19xf32>
    %861 = arith.cmpf oeq, %406, %860 : vector<2x19xf32>
    %862 = arith.extui %861 : vector<2x19xi1> to vector<2x19xi32>
    %863 = arith.sitofp %862 : vector<2x19xi32> to vector<2x19xf32>
    %864 = arith.mulf %863, %767 : vector<2x19xf32>
    %cst_252 = arith.constant dense<0.000000e+00> : vector<2xf32>
    %865 = vector.multi_reduction <add>, %864, %cst_252 [1] : vector<2x19xf32> to vector<2xf32>
    %866 = vector.shape_cast %865 : vector<2xf32> to vector<2x1xf32>
    %867 = vector.broadcast %866 : vector<2x1xf32> to vector<2x19xf32>
    %868 = arith.cmpf oeq, %406, %867 : vector<2x19xf32>
    %869 = arith.extui %868 : vector<2x19xi1> to vector<2x19xi32>
    %870 = arith.sitofp %869 : vector<2x19xi32> to vector<2x19xf32>
    %871 = arith.mulf %870, %710 : vector<2x19xf32>
    %cst_253 = arith.constant dense<0.000000e+00> : vector<2xf32>
    %872 = vector.multi_reduction <add>, %871, %cst_253 [1] : vector<2x19xf32> to vector<2xf32>
    %873 = vector.shape_cast %872 : vector<2xf32> to vector<2x1xf32>
    %874 = vector.broadcast %873 : vector<2x1xf32> to vector<2x19xf32>
    %875 = arith.cmpf oeq, %406, %874 : vector<2x19xf32>
    %876 = arith.extui %875 : vector<2x19xi1> to vector<2x19xi32>
    %877 = arith.sitofp %876 : vector<2x19xi32> to vector<2x19xf32>
    %878 = arith.mulf %877, %653 : vector<2x19xf32>
    %cst_254 = arith.constant dense<0.000000e+00> : vector<2xf32>
    %879 = vector.multi_reduction <add>, %878, %cst_254 [1] : vector<2x19xf32> to vector<2xf32>
    %880 = vector.shape_cast %879 : vector<2xf32> to vector<2x1xf32>
    %881 = vector.broadcast %880 : vector<2x1xf32> to vector<2x19xf32>
    %882 = arith.cmpf oeq, %406, %881 : vector<2x19xf32>
    %883 = arith.extui %882 : vector<2x19xi1> to vector<2x19xi32>
    %884 = arith.sitofp %883 : vector<2x19xi32> to vector<2x19xf32>
    %885 = arith.mulf %884, %596 : vector<2x19xf32>
    %cst_255 = arith.constant dense<0.000000e+00> : vector<2xf32>
    %886 = vector.multi_reduction <add>, %885, %cst_255 [1] : vector<2x19xf32> to vector<2xf32>
    %887 = vector.shape_cast %886 : vector<2xf32> to vector<2x1xf32>
    %888 = vector.broadcast %887 : vector<2x1xf32> to vector<2x19xf32>
    %889 = arith.cmpf oeq, %406, %888 : vector<2x19xf32>
    %890 = arith.extui %889 : vector<2x19xi1> to vector<2x19xi32>
    %891 = arith.sitofp %890 : vector<2x19xi32> to vector<2x19xf32>
    %892 = arith.mulf %891, %539 : vector<2x19xf32>
    %cst_256 = arith.constant dense<0.000000e+00> : vector<2xf32>
    %893 = vector.multi_reduction <add>, %892, %cst_256 [1] : vector<2x19xf32> to vector<2xf32>
    %894 = vector.shape_cast %893 : vector<2xf32> to vector<2x1xf32>
    %895 = vector.broadcast %894 : vector<2x1xf32> to vector<2x19xf32>
    %896 = arith.cmpf oeq, %406, %895 : vector<2x19xf32>
    %897 = arith.extui %896 : vector<2x19xi1> to vector<2x19xi32>
    %898 = arith.sitofp %897 : vector<2x19xi32> to vector<2x19xf32>
    %899 = arith.mulf %898, %482 : vector<2x19xf32>
    %cst_257 = arith.constant dense<0.000000e+00> : vector<2xf32>
    %900 = vector.multi_reduction <add>, %899, %cst_257 [1] : vector<2x19xf32> to vector<2xf32>
    %901 = vector.shape_cast %900 : vector<2xf32> to vector<2x1xf32>
    %902 = vector.shape_cast %893 : vector<2xf32> to vector<2x1xf32>
    %903 = vector.shape_cast %886 : vector<2xf32> to vector<2x1xf32>
    %904 = vector.shape_cast %879 : vector<2xf32> to vector<2x1xf32>
    %905 = vector.shape_cast %872 : vector<2xf32> to vector<2x1xf32>
    %906 = vector.shape_cast %865 : vector<2xf32> to vector<2x1xf32>
    %907 = vector.shape_cast %858 : vector<2xf32> to vector<2x1xf32>
    %908 = vector.shape_cast %851 : vector<2xf32> to vector<2x1xf32>
    %909 = tpu.concatenate %901, %902, %903, %904, %905, %906, %907, %908 in 1 : vector<2x1xf32>, vector<2x1xf32>, vector<2x1xf32>, vector<2x1xf32>, vector<2x1xf32>, vector<2x1xf32>, vector<2x1xf32>, vector<2x1xf32> -> vector<2x8xf32>
    %910 = arith.fptosi %909 : vector<2x8xf32> to vector<2x8xi32>
    %c0_258 = arith.constant 0 : index
    %c0_259 = arith.constant 0 : index
    %911 = vector.load %arg24[%c0_258, %c0_259] : memref<2x8xi32, #tpu.memory_space<vmem>>, vector<2x8xi32>
    tpu.vector_store %arg24[%c0_258, %c0_259], %910 {strides = array<i32>} : memref<2x8xi32, #tpu.memory_space<vmem>>, vector<2x8xi32>,
    return
  }
}

</mosaic_0001>

<llo_original>
// kernel: _bert_ner_jit.1
$region0: #{_bert_ner_jit.1}
  #allocation0 [shape = 'u32[]', space=smem, size = 0x4, offset = 0x4, fixed_abs, tag = 'smem constant byte address 0x4 - core index']
  #allocation1 [shape = 'u32[144,128]{1,0:T(1,128)}', space=vmem, size = 0x12000, scoped, tag = 'internal scratch']
  %s0 = inlined_call_operand.vmem [shape: f32[16,32], index: 0, kind: input, shape index: {}]
  %s1 = inlined_call_operand.vmem [shape: f32[2,8], index: 1, kind: input, shape index: {}]
  %s2 = inlined_call_operand.vmem [shape: s32[2,8], index: 2, kind: input, shape index: {}]
  %s3 = inlined_call_operand.vmem [shape: f32[1,32], index: 3, kind: input, shape index: {}]
  %s4 = inlined_call_operand.vmem [shape: f32[1,32], index: 4, kind: input, shape index: {}]
  %s5 = inlined_call_operand.vmem [shape: bf16[2,32,96], index: 5, kind: input, shape index: {}]
  %s6 = inlined_call_operand.vmem [shape: f32[2,1,96], index: 6, kind: input, shape index: {}]
  %s7 = inlined_call_operand.vmem [shape: bf16[2,32,32], index: 7, kind: input, shape index: {}]
  %s8 = inlined_call_operand.vmem [shape: f32[2,1,32], index: 8, kind: input, shape index: {}]
  %s9 = inlined_call_operand.vmem [shape: f32[2,1,32], index: 9, kind: input, shape index: {}]
  %s10 = inlined_call_operand.vmem [shape: f32[2,1,32], index: 10, kind: input, shape index: {}]
  %s11 = inlined_call_operand.vmem [shape: bf16[2,32,64], index: 11, kind: input, shape index: {}]
  %s12 = inlined_call_operand.vmem [shape: f32[2,1,64], index: 12, kind: input, shape index: {}]
  %s13 = inlined_call_operand.vmem [shape: bf16[2,64,32], index: 13, kind: input, shape index: {}]
  %s14 = inlined_call_operand.vmem [shape: f32[2,1,32], index: 14, kind: input, shape index: {}]
  %s15 = inlined_call_operand.vmem [shape: f32[2,1,32], index: 15, kind: input, shape index: {}]
  %s16 = inlined_call_operand.vmem [shape: f32[2,1,32], index: 16, kind: input, shape index: {}]
  %s17 = inlined_call_operand.vmem [shape: bf16[32,19], index: 17, kind: input, shape index: {}]
  %s18 = inlined_call_operand.vmem [shape: f32[1,19], index: 18, kind: input, shape index: {}]
  %s19 = inlined_call_operand.vmem [shape: f32[1,19], index: 19, kind: input, shape index: {}]
  %s20 = inlined_call_operand.vmem [shape: f32[1,19], index: 20, kind: input, shape index: {}]
  %s21 = inlined_call_operand.vmem [shape: f32[19,19], index: 21, kind: input, shape index: {}]
  %s22 = inlined_call_operand.hbm [shape: f32[16,19], index: 22, kind: output, shape index: {0}]
  %s23 = inlined_call_operand.vmem [shape: f32[2,1], index: 23, kind: output, shape index: {1}]
  %s24 = inlined_call_operand.hbm [shape: s32[2,8], index: 24, kind: output, shape index: {2}]
  %25 = xla_tuple %s22, %s23, %s24
  %s26 = sld [smem:[#allocation0]]
  $region114: #{_bert_ner_jit.1} parent=0
    _
  %s28 = ssub.s32 1, %s26
  %s29 = scalar_select 0, %s28, %s26
  $region1: #{_bert_ner_jit.1} parent=0
    #allocation2 [shape = 'u8[8192]{0}', space=vmem, size = 0x2000, scoped, tag = 'output window, operand 0, single buffered']
    #allocation3 [shape = 's32[1]{0}', space=sflag, size = 0x4, scoped, tag = 'scoped memory for _bert_ner_jit.1']
    #allocation4 [shape = 'u8[1024]{0}', space=vmem, size = 0x400, scoped, tag = 'output window, operand 2, single buffered']
    #allocation5 [shape = 's32[1]{0}', space=sflag, size = 0x4, scoped, tag = 'scoped memory for _bert_ner_jit.1']
    %30 = vsyncpa [#allocation3], 0
    %31 = vsyncpa [#allocation5], 0
    // Predicated region
    $region2: #{_bert_ner_jit.1} parent=1 // pred_check
      _
    $region3: #{_bert_ner_jit.1} parent=1 // pred_check_branch
      %33 = sbr.rel (0) target = $region5
    $region4: #{_bert_ner_jit.1} parent=1 // pred_region
      _
    $region5: #{_bert_ner_jit.1} parent=1 // pred_fallthru
      _
    // Predicated region
    $region6: #{_bert_ner_jit.1} parent=1 // pred_check
      _
    $region7: #{_bert_ner_jit.1} parent=1 // pred_check_branch
      %35 = sbr.rel (0) target = $region9
    $region8: #{_bert_ner_jit.1} parent=1 // pred_region
      _
    $region9: #{_bert_ner_jit.1} parent=1 // pred_fallthru
      _
    // Predicated region
    $region10: #{_bert_ner_jit.1} parent=1 // pred_check
      _
    $region11: #{_bert_ner_jit.1} parent=1 // pred_check_branch
      %37 = sbr.rel (0) target = $region13
    $region12: #{_bert_ner_jit.1} parent=1 // pred_region
      _
    $region13: #{_bert_ner_jit.1} parent=1 // pred_fallthru
      _
    // Predicated region
    $region14: #{_bert_ner_jit.1} parent=1 // pred_check
      _
    $region15: #{_bert_ner_jit.1} parent=1 // pred_check_branch
      %39 = sbr.rel (0) target = $region17
    $region16: #{_bert_ner_jit.1} parent=1 // pred_region
      _
    $region17: #{_bert_ner_jit.1} parent=1 // pred_fallthru
      _
    // Predicated region
    $region18: #{_bert_ner_jit.1} parent=1 // pred_check
      _
    $region19: #{_bert_ner_jit.1} parent=1 // pred_check_branch
      %41 = sbr.rel (0) target = $region21
    $region20: #{_bert_ner_jit.1} parent=1 // pred_region
      _
    $region21: #{_bert_ner_jit.1} parent=1 // pred_fallthru
      _
    // Predicated region
    $region22: #{_bert_ner_jit.1} parent=1 // pred_check
      _
    $region23: #{_bert_ner_jit.1} parent=1 // pred_check_branch
      %43 = sbr.rel (0) target = $region25
    $region24: #{_bert_ner_jit.1} parent=1 // pred_region
      _
    $region25: #{_bert_ner_jit.1} parent=1 // pred_fallthru
      _
    // Predicated region
    $region26: #{_bert_ner_jit.1} parent=1 // pred_check
      _
    $region27: #{_bert_ner_jit.1} parent=1 // pred_check_branch
      %45 = sbr.rel (0) target = $region29
    $region28: #{_bert_ner_jit.1} parent=1 // pred_region
      _
    $region29: #{_bert_ner_jit.1} parent=1 // pred_fallthru
      _
    // Predicated region
    $region30: #{_bert_ner_jit.1} parent=1 // pred_check
      _
    $region31: #{_bert_ner_jit.1} parent=1 // pred_check_branch
      %47 = sbr.rel (0) target = $region33
    $region32: #{_bert_ner_jit.1} parent=1 // pred_region
      _
    $region33: #{_bert_ner_jit.1} parent=1 // pred_fallthru
      _
    // Predicated region
    $region34: #{_bert_ner_jit.1} parent=1 // pred_check
      _
    $region35: #{_bert_ner_jit.1} parent=1 // pred_check_branch
      %49 = sbr.rel (0) target = $region37
    $region36: #{_bert_ner_jit.1} parent=1 // pred_region
      _
    $region37: #{_bert_ner_jit.1} parent=1 // pred_fallthru
      _
    // Predicated region
    $region38: #{_bert_ner_jit.1} parent=1 // pred_check
      _
    $region39: #{_bert_ner_jit.1} parent=1 // pred_check_branch
      %51 = sbr.rel (0) target = $region41
    $region40: #{_bert_ner_jit.1} parent=1 // pred_region
      _
    $region41: #{_bert_ner_jit.1} parent=1 // pred_fallthru
      _
    // Predicated region
    $region42: #{_bert_ner_jit.1} parent=1 // pred_check
      _
    $region43: #{_bert_ner_jit.1} parent=1 // pred_check_branch
      %53 = sbr.rel (0) target = $region45
    $region44: #{_bert_ner_jit.1} parent=1 // pred_region
      _
    $region45: #{_bert_ner_jit.1} parent=1 // pred_fallthru
      _
    // Predicated region
    $region46: #{_bert_ner_jit.1} parent=1 // pred_check
      _
    $region47: #{_bert_ner_jit.1} parent=1 // pred_check_branch
      %55 = sbr.rel (0) target = $region49
    $region48: #{_bert_ner_jit.1} parent=1 // pred_region
      _
    $region49: #{_bert_ner_jit.1} parent=1 // pred_fallthru
      _
    // Predicated region
    $region50: #{_bert_ner_jit.1} parent=1 // pred_check
      _
    $region51: #{_bert_ner_jit.1} parent=1 // pred_check_branch
      %57 = sbr.rel (0) target = $region53
    $region52: #{_bert_ner_jit.1} parent=1 // pred_region
      _
    $region53: #{_bert_ner_jit.1} parent=1 // pred_fallthru
      _
    // Predicated region
    $region54: #{_bert_ner_jit.1} parent=1 // pred_check
      _
    $region55: #{_bert_ner_jit.1} parent=1 // pred_check_branch
      %59 = sbr.rel (0) target = $region57
    $region56: #{_bert_ner_jit.1} parent=1 // pred_region
      _
    $region57: #{_bert_ner_jit.1} parent=1 // pred_fallthru
      _
    // Predicated region
    $region58: #{_bert_ner_jit.1} parent=1 // pred_check
      _
    $region59: #{_bert_ner_jit.1} parent=1 // pred_check_branch
      %61 = sbr.rel (0) target = $region61
    $region60: #{_bert_ner_jit.1} parent=1 // pred_region
      _
    $region61: #{_bert_ner_jit.1} parent=1 // pred_fallthru
      _
    // Predicated region
    $region62: #{_bert_ner_jit.1} parent=1 // pred_check
      _
    $region63: #{_bert_ner_jit.1} parent=1 // pred_check_branch
      %63 = sbr.rel (0) target = $region65
    $region64: #{_bert_ner_jit.1} parent=1 // pred_region
      _
    $region65: #{_bert_ner_jit.1} parent=1 // pred_fallthru
      _
    // Predicated region
    $region66: #{_bert_ner_jit.1} parent=1 // pred_check
      _
    $region67: #{_bert_ner_jit.1} parent=1 // pred_check_branch
      %65 = sbr.rel (0) target = $region69
    $region68: #{_bert_ner_jit.1} parent=1 // pred_region
      _
    $region69: #{_bert_ner_jit.1} parent=1 // pred_fallthru
      _
    // Predicated region
    $region70: #{_bert_ner_jit.1} parent=1 // pred_check
      _
    $region71: #{_bert_ner_jit.1} parent=1 // pred_check_branch
      %67 = sbr.rel (0) target = $region73
    $region72: #{_bert_ner_jit.1} parent=1 // pred_region
      _
    $region73: #{_bert_ner_jit.1} parent=1 // pred_fallthru
      _
    // Predicated region
    $region74: #{_bert_ner_jit.1} parent=1 // pred_check
      _
    $region75: #{_bert_ner_jit.1} parent=1 // pred_check_branch
      %69 = sbr.rel (0) target = $region77
    $region76: #{_bert_ner_jit.1} parent=1 // pred_region
      _
    $region77: #{_bert_ner_jit.1} parent=1 // pred_fallthru
      _
    // Predicated region
    $region78: #{_bert_ner_jit.1} parent=1 // pred_check
      _
    $region79: #{_bert_ner_jit.1} parent=1 // pred_check_branch
      %71 = sbr.rel (0) target = $region81
    $region80: #{_bert_ner_jit.1} parent=1 // pred_region
      _
    $region81: #{_bert_ner_jit.1} parent=1 // pred_fallthru
      _
    // Predicated region
    $region82: #{_bert_ner_jit.1} parent=1 // pred_check
      _
    $region83: #{_bert_ner_jit.1} parent=1 // pred_check_branch
      %73 = sbr.rel (0) target = $region85
    $region84: #{_bert_ner_jit.1} parent=1 // pred_region
      _
    $region85: #{_bert_ner_jit.1} parent=1 // pred_fallthru
      _
    // Predicated region
    $region86: #{_bert_ner_jit.1} parent=1 // pred_check
      _
    $region87: #{_bert_ner_jit.1} parent=1 // pred_check_branch
      %75 = sbr.rel (0) target = $region89
    $region88: #{_bert_ner_jit.1} parent=1 // pred_region
      _
    $region89: #{_bert_ner_jit.1} parent=1 // pred_fallthru
      _
    %v77 = vld [vmem:[%s1] sm:$0x3]
    %v78 = vsub.f32 1.0, %v77
    %v79 = vmul.f32 %v78, -10000.0
    %v82 = vunpack.c.l.s4 1966171168
    %v83 = vunpack.c.0.s8 %v82
    %v84 = vlaneseq
    %v85 = vshrl.u32 %v84, 7
    %v86 = vsub.s32 %v83, %v85
    %v87 = vrot.slane %v79, %v86
    %v88 = vcombine.high %v87, %v87
    %v90 = vunpack.c.l.s4 1966171168
    %v91 = vunpack.c.0.s8 %v90
    %v92 = vlaneseq
    %v93 = vshrl.u32 %v92, 7
    %v94 = vsub.s32 %v91, %v93
    %v95 = vrot.slane %v87, %v94
    %v97 = vunpack.c.l.s4 1966171168
    %v98 = vunpack.c.0.s8 %v97
    %v99 = vlaneseq
    %v100 = vshrl.u32 %v99, 7
    %v101 = vsub.s32 %v98, %v100
    %v102 = vrot.slane %v88, %v101
    %v103 = vld [vmem:[%s0] sm:$0xff]
    %v104 = vld [vmem:[%s0 + $0x8] sm:$0xff]
    %v105 = vld [vmem:[%s3] sm:$0x1]
    %v106 = vld [vmem:[%s4] sm:$0x1]
    %vm107 = vcmask 261120
    %v108 = vsel %vm107, %v103, 0.0
    %109 = vadd.xlane.f32.xlu0 %v108
    %v110 = vpop.xlane.xlu0 %109
    %v111 = vsel %vm107, %v104, 0.0
    %112 = vadd.xlane.f32.xlu0 %v111
    %v113 = vpop.xlane.xlu0 %112
    %v114 = vrcp.pop 32.0
    %v115 = vmul.f32 %v110, %v114
    %v116 = vmul.f32 %v113, %v114
    %v117 = vsub.f32 %v103, %v115
    %v118 = vsub.f32 %v104, %v116
    %v119 = vmul.f32 %v117, %v117
    %v120 = vmul.f32 %v118, %v118
    %v121 = vsel %vm107, %v119, 0.0
    %122 = vadd.xlane.f32.xlu0 %v121
    %v123 = vpop.xlane.xlu0 %122
    %v124 = vsel %vm107, %v120, 0.0
    %125 = vadd.xlane.f32.xlu0 %v124
    %v126 = vpop.xlane.xlu0 %125
    %v127 = vmul.f32 %v123, %v114
    %v128 = vmul.f32 %v126, %v114
    %v129 = vadd.f32 %v127, 1e-12
    %v130 = vadd.f32 %v128, 1e-12
    %v131 = vrsqrt.pop %v129
    %v132 = vrsqrt.pop %v130
    %v133 = vmul.f32 %v117, %v131
    %v134 = vmul.f32 %v118, %v132
    %v136 = vlaneseq
    %v137 = vshrl.u32 %v136, 7
    %v138 = vsub.s32 0, %v137
    %v139 = vrot.slane %v105, %v138
    %v141 = vmul.f32 %v133, %v139
    %v142 = vmul.f32 %v134, %v139
    %v144 = vlaneseq
    %v145 = vshrl.u32 %v144, 7
    %v146 = vsub.s32 0, %v145
    %v147 = vrot.slane %v106, %v146
    %v149 = vadd.f32 %v141, %v147
    %v150 = vadd.f32 %v142, %v147
    %v151 = vld [vmem:[%s5] sm:$0xf]
    %v152 = vld [vmem:[%s5 + $0x4] sm:$0xf]
    %v153 = vld [vmem:[%s5 + $0x8] sm:$0xf]
    %v154 = vld [vmem:[%s5 + $0xc] sm:$0xf]
    %v155 = vld [vmem:[%s6] sm:$0x1]
    %v156 = vpack.c.bf16 %v150, %v149
    %v158 = vlaneseq
    %v159 = vshrl.u32 %v158, 7
    %v160 = vsub.s32 0, %v159
    %v161 = vrot.slane %v155, %v160
    %v167 = vunpack.c.l.b16 %v151
    %v168 = vunpack.c.l.b16 %v152
    %v169 = vunpack.c.l.b16 %v153
    %v170 = vunpack.c.l.b16 %v154
    %v171 = vpack.c.b16 %v168, %v167
    %v172 = vpack.c.b16 %v170, %v169
    %v176 = vsel %vm107, %v156, 0
    %178 = vmatprep.subr.bf16.mxu0 0
    %179 = vmatpush1.bf16.msra.mxu0 %v171
    %180 = vmatprep.subr.bf16.mxu0 0
    %181 = vmatpush1.bf16.msra.mxu0 %v172
    %182 = vmatprep.subr.bf16.mxu0 0
    %183 = vmatpush1.bf16.msra.mxu0 0
    %184 = vmatprep.subr.bf16.mxu0 0
    %185 = vmatpush1.bf16.msra.mxu0 0
    %186 = vmatprep.subr.bf16.mxu0 0
    %187 = vmatpush1.bf16.msra.mxu0 0
    %188 = vmatprep.subr.bf16.mxu0 0
    %189 = vmatpush1.bf16.msra.mxu0 0
    %190 = vmatprep.subr.bf16.mxu0 0
    %191 = vmatpush1.bf16.msra.mxu0 0
    %192 = vmatprep.subr.bf16.mxu0 0
    %193 = vmatpush1.bf16.msra.mxu0 0
    %194 = vmatprep.subr.bf16.mxu0 0
    %195 = vmatpush1.bf16.msra.mxu0 0
    %196 = vmatprep.subr.bf16.mxu0 0
    %197 = vmatpush1.bf16.msra.mxu0 0
    %198 = vmatprep.subr.bf16.mxu0 0
    %199 = vmatpush1.bf16.msra.mxu0 0
    %200 = vmatprep.subr.bf16.mxu0 0
    %201 = vmatpush1.bf16.msra.mxu0 0
    %202 = vmatprep.subr.bf16.mxu0 0
    %203 = vmatpush1.bf16.msra.mxu0 0
    %204 = vmatprep.subr.bf16.mxu0 0
    %205 = vmatpush1.bf16.msra.mxu0 0
    %206 = vmatprep.subr.bf16.mxu0 0
    %207 = vmatpush1.bf16.msra.mxu0 0
    %208 = vmatprep.subr.bf16.mxu0 0
    %209 = vmatpush1.bf16.msra.mxu0 0
    %210 = vmatprep.mubr.bf16.mxu0 0
    %211 = vmatmul.mubr.bf16.gmra.mrb[0].mxu0 %v176
    %v212 = vpop.f32.mrb[0].mxu0
    %v213 = vadd.f32 %v161, %v212
    %v214 = vpop.f32.mrb[0].mxu0
    %v215 = vpop.f32.mrb[0].mxu0
    %v216 = vadd.f32 %v161, %v215
    %v217 = vpop.f32.mrb[0].mxu0
    %218 = vdwg.mxu0
    %v219 = vpack.c.bf16 %v213, %v213
    %v220 = vpack.c.bf16 %v216, %v216
    %222 = vrot.lane.b32.xlu0 %v219, 96
    %v223 = vpop.permute.xlu0 %222
    %vm224 = vcmask 130048
    %v226 = vsel %vm224, %v219, 0
    %v229 = vsel %vm224, %v223, 0
    %231 = vmatprep.subr.bf16.mxu0 0
    %232 = vmatpush1.bf16.xpose.msra.mxu0 %v229
    %233 = vmatprep.subr.bf16.mxu0 0
    %234 = vmatpush1.bf16.xpose.msra.mxu0 0
    %235 = vmatprep.subr.bf16.mxu0 0
    %236 = vmatpush1.bf16.xpose.msra.mxu0 0
    %237 = vmatprep.subr.bf16.mxu0 0
    %238 = vmatpush1.bf16.xpose.msra.mxu0 0
    %239 = vmatprep.subr.bf16.mxu0 0
    %240 = vmatpush1.bf16.xpose.msra.mxu0 0
    %241 = vmatprep.subr.bf16.mxu0 0
    %242 = vmatpush1.bf16.xpose.msra.mxu0 0
    %243 = vmatprep.subr.bf16.mxu0 0
    %244 = vmatpush1.bf16.xpose.msra.mxu0 0
    %245 = vmatprep.subr.bf16.mxu0 0
    %246 = vmatpush1.bf16.xpose.msra.mxu0 0
    %247 = vmatprep.subr.bf16.mxu0 0
    %248 = vmatpush1.bf16.xpose.msra.mxu0 0
    %249 = vmatprep.subr.bf16.mxu0 0
    %250 = vmatpush1.bf16.xpose.msra.mxu0 0
    %251 = vmatprep.subr.bf16.mxu0 0
    %252 = vmatpush1.bf16.xpose.msra.mxu0 0
    %253 = vmatprep.subr.bf16.mxu0 0
    %254 = vmatpush1.bf16.xpose.msra.mxu0 0
    %255 = vmatprep.subr.bf16.mxu0 0
    %256 = vmatpush1.bf16.xpose.msra.mxu0 0
    %257 = vmatprep.subr.bf16.mxu0 0
    %258 = vmatpush1.bf16.xpose.msra.mxu0 0
    %259 = vmatprep.subr.bf16.mxu0 0
    %260 = vmatpush1.bf16.xpose.msra.mxu0 0
    %261 = vmatprep.subr.bf16.mxu0 0
    %262 = vmatpush1.bf16.xpose.msra.mxu0 0
    %263 = vmatprep.mubr.bf16.mxu0 0
    %264 = vmatmul.mubr.bf16.gmra.mrb[0].mxu0 %v226
    %v265 = vpop.f32.mrb[0].mxu0
    %v266 = vadd.f32 0.0, %v265
    %v267 = vpop.f32.mrb[0].mxu0
    %v268 = vpop.f32.mrb[0].mxu0
    %v269 = vpop.f32.mrb[0].mxu0
    %270 = vdwg.mxu0
    %272 = vrot.lane.b32.xlu0 %v220, 96
    %v273 = vpop.permute.xlu0 %272
    %v275 = vsel %vm224, %v220, 0
    %v278 = vsel %vm224, %v273, 0
    %280 = vmatprep.subr.bf16.mxu0 0
    %281 = vmatpush1.bf16.xpose.msra.mxu0 %v278
    %282 = vmatprep.subr.bf16.mxu0 0
    %283 = vmatpush1.bf16.xpose.msra.mxu0 0
    %284 = vmatprep.subr.bf16.mxu0 0
    %285 = vmatpush1.bf16.xpose.msra.mxu0 0
    %286 = vmatprep.subr.bf16.mxu0 0
    %287 = vmatpush1.bf16.xpose.msra.mxu0 0
    %288 = vmatprep.subr.bf16.mxu0 0
    %289 = vmatpush1.bf16.xpose.msra.mxu0 0
    %290 = vmatprep.subr.bf16.mxu0 0
    %291 = vmatpush1.bf16.xpose.msra.mxu0 0
    %292 = vmatprep.subr.bf16.mxu0 0
    %293 = vmatpush1.bf16.xpose.msra.mxu0 0
    %294 = vmatprep.subr.bf16.mxu0 0
    %295 = vmatpush1.bf16.xpose.msra.mxu0 0
    %296 = vmatprep.subr.bf16.mxu0 0
    %297 = vmatpush1.bf16.xpose.msra.mxu0 0
    %298 = vmatprep.subr.bf16.mxu0 0
    %299 = vmatpush1.bf16.xpose.msra.mxu0 0
    %300 = vmatprep.subr.bf16.mxu0 0
    %301 = vmatpush1.bf16.xpose.msra.mxu0 0
    %302 = vmatprep.subr.bf16.mxu0 0
    %303 = vmatpush1.bf16.xpose.msra.mxu0 0
    %304 = vmatprep.subr.bf16.mxu0 0
    %305 = vmatpush1.bf16.xpose.msra.mxu0 0
    %306 = vmatprep.subr.bf16.mxu0 0
    %307 = vmatpush1.bf16.xpose.msra.mxu0 0
    %308 = vmatprep.subr.bf16.mxu0 0
    %309 = vmatpush1.bf16.xpose.msra.mxu0 0
    %310 = vmatprep.subr.bf16.mxu0 0
    %311 = vmatpush1.bf16.xpose.msra.mxu0 0
    %312 = vmatprep.mubr.bf16.mxu0 0
    %313 = vmatmul.mubr.bf16.gmra.mrb[0].mxu0 %v275
    %v314 = vpop.f32.mrb[0].mxu0
    %v315 = vadd.f32 0.0, %v314
    %v316 = vpop.f32.mrb[0].mxu0
    %v317 = vpop.f32.mrb[0].mxu0
    %v318 = vpop.f32.mrb[0].mxu0
    %319 = vdwg.mxu0
    %v320 = vmul.f32 %v266, 0.25
    %v321 = vmul.f32 %v315, 0.25
    %v322 = vlaneseq
    %v323 = vshrl.u32 %v322, 7
    %v324 = vsub.s32 0, %v323
    %v325 = vrot.slane %v95, %v324
    %v326 = vlaneseq
    %v327 = vshrl.u32 %v326, 7
    %v328 = vsub.s32 0, %v327
    %v329 = vrot.slane %v102, %v328
    %v332 = vadd.f32 %v320, %v325
    %v333 = vadd.f32 %v321, %v329
    %vm334 = vcmask 64512
    %v335 = vsel %vm334, %v332, -inf
    %336 = vmax.xlane.f32.xlu0 %v335
    %v337 = vpop.xlane.xlu0 %336
    %v338 = vsel %vm334, %v333, -inf
    %339 = vmax.xlane.f32.xlu0 %v338
    %v340 = vpop.xlane.xlu0 %339
    %v341 = vsub.f32 %v332, %v337
    %v342 = vsub.f32 %v333, %v340
    %v343 = vmul.f32 %v341, 1.442695
    %v344 = vpow.pop %v343
    %v345 = vmul.f32 %v342, 1.442695
    %v346 = vpow.pop %v345
    %v347 = vsel %vm334, %v344, 0.0
    %348 = vadd.xlane.f32.xlu0 %v347
    %v349 = vpop.xlane.xlu0 %348
    %v350 = vsel %vm334, %v346, 0.0
    %351 = vadd.xlane.f32.xlu0 %v350
    %v352 = vpop.xlane.xlu0 %351
    %v353 = vrcp.pop %v349
    %v354 = vrcp.pop %v352
    %v355 = vmul.f32 %v344, %v353
    %v356 = vmul.f32 %v346, %v354
    %v357 = vpack.c.bf16 %v355, %v355
    %v358 = vpack.c.bf16 %v356, %v356
    %359 = vrot.lane.b32.xlu0 %v219, 64
    %v360 = vpop.permute.xlu0 %359
    %v362 = vsel %vm334, %v357, 0
    %vm364 = vcmask 1043456
    %v366 = vsel %vm364, %v360, 0
    %368 = vmatprep.subr.bf16.mxu0 0
    %369 = vmatpush1.bf16.msra.mxu0 %v366
    %370 = vmatprep.subr.bf16.mxu0 0
    %371 = vmatpush1.bf16.msra.mxu0 0
    %372 = vmatprep.subr.bf16.mxu0 0
    %373 = vmatpush1.bf16.msra.mxu0 0
    %374 = vmatprep.subr.bf16.mxu0 0
    %375 = vmatpush1.bf16.msra.mxu0 0
    %376 = vmatprep.subr.bf16.mxu0 0
    %377 = vmatpush1.bf16.msra.mxu0 0
    %378 = vmatprep.subr.bf16.mxu0 0
    %379 = vmatpush1.bf16.msra.mxu0 0
    %380 = vmatprep.subr.bf16.mxu0 0
    %381 = vmatpush1.bf16.msra.mxu0 0
    %382 = vmatprep.subr.bf16.mxu0 0
    %383 = vmatpush1.bf16.msra.mxu0 0
    %384 = vmatprep.subr.bf16.mxu0 0
    %385 = vmatpush1.bf16.msra.mxu0 0
    %386 = vmatprep.subr.bf16.mxu0 0
    %387 = vmatpush1.bf16.msra.mxu0 0
    %388 = vmatprep.subr.bf16.mxu0 0
    %389 = vmatpush1.bf16.msra.mxu0 0
    %390 = vmatprep.subr.bf16.mxu0 0
    %391 = vmatpush1.bf16.msra.mxu0 0
    %392 = vmatprep.subr.bf16.mxu0 0
    %393 = vmatpush1.bf16.msra.mxu0 0
    %394 = vmatprep.subr.bf16.mxu0 0
    %395 = vmatpush1.bf16.msra.mxu0 0
    %396 = vmatprep.subr.bf16.mxu0 0
    %397 = vmatpush1.bf16.msra.mxu0 0
    %398 = vmatprep.subr.bf16.mxu0 0
    %399 = vmatpush1.bf16.msra.mxu0 0
    %400 = vmatprep.mubr.bf16.mxu0 0
    %401 = vmatmul.mubr.bf16.gmra.mrb[0].mxu0 %v362
    %v402 = vpop.f32.mrb[0].mxu0
    %v403 = vadd.f32 0.0, %v402
    %v404 = vpop.f32.mrb[0].mxu0
    %v405 = vpop.f32.mrb[0].mxu0
    %v406 = vpop.f32.mrb[0].mxu0
    %407 = vdwg.mxu0
    %408 = vrot.lane.b32.xlu0 %v220, 64
    %v409 = vpop.permute.xlu0 %408
    %v411 = vsel %vm334, %v358, 0
    %v414 = vsel %vm364, %v409, 0
    %416 = vmatprep.subr.bf16.mxu0 0
    %417 = vmatpush1.bf16.msra.mxu0 %v414
    %418 = vmatprep.subr.bf16.mxu0 0
    %419 = vmatpush1.bf16.msra.mxu0 0
    %420 = vmatprep.subr.bf16.mxu0 0
    %421 = vmatpush1.bf16.msra.mxu0 0
    %422 = vmatprep.subr.bf16.mxu0 0
    %423 = vmatpush1.bf16.msra.mxu0 0
    %424 = vmatprep.subr.bf16.mxu0 0
    %425 = vmatpush1.bf16.msra.mxu0 0
    %426 = vmatprep.subr.bf16.mxu0 0
    %427 = vmatpush1.bf16.msra.mxu0 0
    %428 = vmatprep.subr.bf16.mxu0 0
    %429 = vmatpush1.bf16.msra.mxu0 0
    %430 = vmatprep.subr.bf16.mxu0 0
    %431 = vmatpush1.bf16.msra.mxu0 0
    %432 = vmatprep.subr.bf16.mxu0 0
    %433 = vmatpush1.bf16.msra.mxu0 0
    %434 = vmatprep.subr.bf16.mxu0 0
    %435 = vmatpush1.bf16.msra.mxu0 0
    %436 = vmatprep.subr.bf16.mxu0 0
    %437 = vmatpush1.bf16.msra.mxu0 0
    %438 = vmatprep.subr.bf16.mxu0 0
    %439 = vmatpush1.bf16.msra.mxu0 0
    %440 = vmatprep.subr.bf16.mxu0 0
    %441 = vmatpush1.bf16.msra.mxu0 0
    %442 = vmatprep.subr.bf16.mxu0 0
    %443 = vmatpush1.bf16.msra.mxu0 0
    %444 = vmatprep.subr.bf16.mxu0 0
    %445 = vmatpush1.bf16.msra.mxu0 0
    %446 = vmatprep.subr.bf16.mxu0 0
    %447 = vmatpush1.bf16.msra.mxu0 0
    %448 = vmatprep.mubr.bf16.mxu0 0
    %449 = vmatmul.mubr.bf16.gmra.mrb[0].mxu0 %v411
    %v450 = vpop.f32.mrb[0].mxu0
    %v451 = vadd.f32 0.0, %v450
    %v452 = vpop.f32.mrb[0].mxu0
    %v453 = vpop.f32.mrb[0].mxu0
    %v454 = vpop.f32.mrb[0].mxu0
    %455 = vdwg.mxu0
    %456 = vrot.lane.b32.xlu0 %v219, 112
    %v457 = vpop.permute.xlu0 %456
    %458 = vrot.lane.b32.xlu0 %v219, 80
    %v459 = vpop.permute.xlu0 %458
    %v461 = vsel %vm224, %v457, 0
    %v464 = vsel %vm224, %v459, 0
    %466 = vmatprep.subr.bf16.mxu0 0
    %467 = vmatpush1.bf16.xpose.msra.mxu0 %v464
    %468 = vmatprep.subr.bf16.mxu0 0
    %469 = vmatpush1.bf16.xpose.msra.mxu0 0
    %470 = vmatprep.subr.bf16.mxu0 0
    %471 = vmatpush1.bf16.xpose.msra.mxu0 0
    %472 = vmatprep.subr.bf16.mxu0 0
    %473 = vmatpush1.bf16.xpose.msra.mxu0 0
    %474 = vmatprep.subr.bf16.mxu0 0
    %475 = vmatpush1.bf16.xpose.msra.mxu0 0
    %476 = vmatprep.subr.bf16.mxu0 0
    %477 = vmatpush1.bf16.xpose.msra.mxu0 0
    %478 = vmatprep.subr.bf16.mxu0 0
    %479 = vmatpush1.bf16.xpose.msra.mxu0 0
    %480 = vmatprep.subr.bf16.mxu0 0
    %481 = vmatpush1.bf16.xpose.msra.mxu0 0
    %482 = vmatprep.subr.bf16.mxu0 0
    %483 = vmatpush1.bf16.xpose.msra.mxu0 0
    %484 = vmatprep.subr.bf16.mxu0 0
    %485 = vmatpush1.bf16.xpose.msra.mxu0 0
    %486 = vmatprep.subr.bf16.mxu0 0
    %487 = vmatpush1.bf16.xpose.msra.mxu0 0
    %488 = vmatprep.subr.bf16.mxu0 0
    %489 = vmatpush1.bf16.xpose.msra.mxu0 0
    %490 = vmatprep.subr.bf16.mxu0 0
    %491 = vmatpush1.bf16.xpose.msra.mxu0 0
    %492 = vmatprep.subr.bf16.mxu0 0
    %493 = vmatpush1.bf16.xpose.msra.mxu0 0
    %494 = vmatprep.subr.bf16.mxu0 0
    %495 = vmatpush1.bf16.xpose.msra.mxu0 0
    %496 = vmatprep.subr.bf16.mxu0 0
    %497 = vmatpush1.bf16.xpose.msra.mxu0 0
    %498 = vmatprep.mubr.bf16.mxu0 0
    %499 = vmatmul.mubr.bf16.gmra.mrb[0].mxu0 %v461
    %v500 = vpop.f32.mrb[0].mxu0
    %v501 = vadd.f32 0.0, %v500
    %v502 = vpop.f32.mrb[0].mxu0
    %v503 = vpop.f32.mrb[0].mxu0
    %v504 = vpop.f32.mrb[0].mxu0
    %505 = vdwg.mxu0
    %506 = vrot.lane.b32.xlu0 %v220, 112
    %v507 = vpop.permute.xlu0 %506
    %508 = vrot.lane.b32.xlu0 %v220, 80
    %v509 = vpop.permute.xlu0 %508
    %v511 = vsel %vm224, %v507, 0
    %v514 = vsel %vm224, %v509, 0
    %516 = vmatprep.subr.bf16.mxu0 0
    %517 = vmatpush1.bf16.xpose.msra.mxu0 %v514
    %518 = vmatprep.subr.bf16.mxu0 0
    %519 = vmatpush1.bf16.xpose.msra.mxu0 0
    %520 = vmatprep.subr.bf16.mxu0 0
    %521 = vmatpush1.bf16.xpose.msra.mxu0 0
    %522 = vmatprep.subr.bf16.mxu0 0
    %523 = vmatpush1.bf16.xpose.msra.mxu0 0
    %524 = vmatprep.subr.bf16.mxu0 0
    %525 = vmatpush1.bf16.xpose.msra.mxu0 0
    %526 = vmatprep.subr.bf16.mxu0 0
    %527 = vmatpush1.bf16.xpose.msra.mxu0 0
    %528 = vmatprep.subr.bf16.mxu0 0
    %529 = vmatpush1.bf16.xpose.msra.mxu0 0
    %530 = vmatprep.subr.bf16.mxu0 0
    %531 = vmatpush1.bf16.xpose.msra.mxu0 0
    %532 = vmatprep.subr.bf16.mxu0 0
    %533 = vmatpush1.bf16.xpose.msra.mxu0 0
    %534 = vmatprep.subr.bf16.mxu0 0
    %535 = vmatpush1.bf16.xpose.msra.mxu0 0
    %536 = vmatprep.subr.bf16.mxu0 0
    %537 = vmatpush1.bf16.xpose.msra.mxu0 0
    %538 = vmatprep.subr.bf16.mxu0 0
    %539 = vmatpush1.bf16.xpose.msra.mxu0 0
    %540 = vmatprep.subr.bf16.mxu0 0
    %541 = vmatpush1.bf16.xpose.msra.mxu0 0
    %542 = vmatprep.subr.bf16.mxu0 0
    %543 = vmatpush1.bf16.xpose.msra.mxu0 0
    %544 = vmatprep.subr.bf16.mxu0 0
    %545 = vmatpush1.bf16.xpose.msra.mxu0 0
    %546 = vmatprep.subr.bf16.mxu0 0
    %547 = vmatpush1.bf16.xpose.msra.mxu0 0
    %548 = vmatprep.mubr.bf16.mxu0 0
    %549 = vmatmul.mubr.bf16.gmra.mrb[0].mxu0 %v511
    %v550 = vpop.f32.mrb[0].mxu0
    %v551 = vadd.f32 0.0, %v550
    %v552 = vpop.f32.mrb[0].mxu0
    %v553 = vpop.f32.mrb[0].mxu0
    %v554 = vpop.f32.mrb[0].mxu0
    %555 = vdwg.mxu0
    %v556 = vmul.f32 %v501, 0.25
    %v557 = vmul.f32 %v551, 0.25
    %v558 = vadd.f32 %v556, %v325
    %v559 = vadd.f32 %v557, %v329
    %v560 = vsel %vm334, %v558, -inf
    %561 = vmax.xlane.f32.xlu0 %v560
    %v562 = vpop.xlane.xlu0 %561
    %v563 = vsel %vm334, %v559, -inf
    %564 = vmax.xlane.f32.xlu0 %v563
    %v565 = vpop.xlane.xlu0 %564
    %v566 = vsub.f32 %v558, %v562
    %v567 = vsub.f32 %v559, %v565
    %v568 = vmul.f32 %v566, 1.442695
    %v569 = vpow.pop %v568
    %v570 = vmul.f32 %v567, 1.442695
    %v571 = vpow.pop %v570
    %v572 = vsel %vm334, %v569, 0.0
    %573 = vadd.xlane.f32.xlu0 %v572
    %v574 = vpop.xlane.xlu0 %573
    %v575 = vsel %vm334, %v571, 0.0
    %576 = vadd.xlane.f32.xlu0 %v575
    %v577 = vpop.xlane.xlu0 %576
    %v578 = vrcp.pop %v574
    %v579 = vrcp.pop %v577
    %v580 = vmul.f32 %v569, %v578
    %v581 = vmul.f32 %v571, %v579
    %v582 = vpack.c.bf16 %v580, %v580
    %v583 = vpack.c.bf16 %v581, %v581
    %584 = vrot.lane.b32.xlu0 %v219, 48
    %v585 = vpop.permute.xlu0 %584
    %v587 = vsel %vm334, %v582, 0
    %v590 = vsel %vm364, %v585, 0
    %592 = vmatprep.subr.bf16.mxu0 0
    %593 = vmatpush1.bf16.msra.mxu0 %v590
    %594 = vmatprep.subr.bf16.mxu0 0
    %595 = vmatpush1.bf16.msra.mxu0 0
    %596 = vmatprep.subr.bf16.mxu0 0
    %597 = vmatpush1.bf16.msra.mxu0 0
    %598 = vmatprep.subr.bf16.mxu0 0
    %599 = vmatpush1.bf16.msra.mxu0 0
    %600 = vmatprep.subr.bf16.mxu0 0
    %601 = vmatpush1.bf16.msra.mxu0 0
    %602 = vmatprep.subr.bf16.mxu0 0
    %603 = vmatpush1.bf16.msra.mxu0 0
    %604 = vmatprep.subr.bf16.mxu0 0
    %605 = vmatpush1.bf16.msra.mxu0 0
    %606 = vmatprep.subr.bf16.mxu0 0
    %607 = vmatpush1.bf16.msra.mxu0 0
    %608 = vmatprep.subr.bf16.mxu0 0
    %609 = vmatpush1.bf16.msra.mxu0 0
    %610 = vmatprep.subr.bf16.mxu0 0
    %611 = vmatpush1.bf16.msra.mxu0 0
    %612 = vmatprep.subr.bf16.mxu0 0
    %613 = vmatpush1.bf16.msra.mxu0 0
    %614 = vmatprep.subr.bf16.mxu0 0
    %615 = vmatpush1.bf16.msra.mxu0 0
    %616 = vmatprep.subr.bf16.mxu0 0
    %617 = vmatpush1.bf16.msra.mxu0 0
    %618 = vmatprep.subr.bf16.mxu0 0
    %619 = vmatpush1.bf16.msra.mxu0 0
    %620 = vmatprep.subr.bf16.mxu0 0
    %621 = vmatpush1.bf16.msra.mxu0 0
    %622 = vmatprep.subr.bf16.mxu0 0
    %623 = vmatpush1.bf16.msra.mxu0 0
    %624 = vmatprep.mubr.bf16.mxu0 0
    %625 = vmatmul.mubr.bf16.gmra.mrb[0].mxu0 %v587
    %v626 = vpop.f32.mrb[0].mxu0
    %v627 = vadd.f32 0.0, %v626
    %v628 = vpop.f32.mrb[0].mxu0
    %v629 = vpop.f32.mrb[0].mxu0
    %v630 = vpop.f32.mrb[0].mxu0
    %631 = vdwg.mxu0
    %632 = vrot.lane.b32.xlu0 %v220, 48
    %v633 = vpop.permute.xlu0 %632
    %v635 = vsel %vm334, %v583, 0
    %v638 = vsel %vm364, %v633, 0
    %640 = vmatprep.subr.bf16.mxu0 0
    %641 = vmatpush1.bf16.msra.mxu0 %v638
    %642 = vmatprep.subr.bf16.mxu0 0
    %643 = vmatpush1.bf16.msra.mxu0 0
    %644 = vmatprep.subr.bf16.mxu0 0
    %645 = vmatpush1.bf16.msra.mxu0 0
    %646 = vmatprep.subr.bf16.mxu0 0
    %647 = vmatpush1.bf16.msra.mxu0 0
    %648 = vmatprep.subr.bf16.mxu0 0
    %649 = vmatpush1.bf16.msra.mxu0 0
    %650 = vmatprep.subr.bf16.mxu0 0
    %651 = vmatpush1.bf16.msra.mxu0 0
    %652 = vmatprep.subr.bf16.mxu0 0
    %653 = vmatpush1.bf16.msra.mxu0 0
    %654 = vmatprep.subr.bf16.mxu0 0
    %655 = vmatpush1.bf16.msra.mxu0 0
    %656 = vmatprep.subr.bf16.mxu0 0
    %657 = vmatpush1.bf16.msra.mxu0 0
    %658 = vmatprep.subr.bf16.mxu0 0
    %659 = vmatpush1.bf16.msra.mxu0 0
    %660 = vmatprep.subr.bf16.mxu0 0
    %661 = vmatpush1.bf16.msra.mxu0 0
    %662 = vmatprep.subr.bf16.mxu0 0
    %663 = vmatpush1.bf16.msra.mxu0 0
    %664 = vmatprep.subr.bf16.mxu0 0
    %665 = vmatpush1.bf16.msra.mxu0 0
    %666 = vmatprep.subr.bf16.mxu0 0
    %667 = vmatpush1.bf16.msra.mxu0 0
    %668 = vmatprep.subr.bf16.mxu0 0
    %669 = vmatpush1.bf16.msra.mxu0 0
    %670 = vmatprep.subr.bf16.mxu0 0
    %671 = vmatpush1.bf16.msra.mxu0 0
    %672 = vmatprep.mubr.bf16.mxu0 0
    %673 = vmatmul.mubr.bf16.gmra.mrb[0].mxu0 %v635
    %v674 = vpop.f32.mrb[0].mxu0
    %v675 = vadd.f32 0.0, %v674
    %v676 = vpop.f32.mrb[0].mxu0
    %v677 = vpop.f32.mrb[0].mxu0
    %v678 = vpop.f32.mrb[0].mxu0
    %679 = vdwg.mxu0
    %682 = vrot.lane.b32.xlu0 %v627, 16
    %v683 = vpop.permute.xlu0 %682
    %684 = vrot.lane.b32.xlu0 %v675, 16
    %v685 = vpop.permute.xlu0 %684
    %v688 = vsel %vm224, %v403, %v683
    %v689 = vsel %vm224, %v451, %v685
    %v690 = vpack.c.bf16 %v689, %v688
    %v691 = vld [vmem:[%s7] sm:$0xf]
    %v692 = vld [vmem:[%s7 + $0x4] sm:$0xf]
    %v693 = vld [vmem:[%s7 + $0x8] sm:$0xf]
    %v694 = vld [vmem:[%s7 + $0xc] sm:$0xf]
    %v695 = vld [vmem:[%s8] sm:$0x1]
    %v697 = vlaneseq
    %v698 = vshrl.u32 %v697, 7
    %v699 = vsub.s32 0, %v698
    %v700 = vrot.slane %v695, %v699
    %v706 = vunpack.c.l.b16 %v691
    %v707 = vunpack.c.l.b16 %v692
    %v708 = vunpack.c.l.b16 %v693
    %v709 = vunpack.c.l.b16 %v694
    %v710 = vpack.c.b16 %v707, %v706
    %v711 = vpack.c.b16 %v709, %v708
    %v715 = vsel %vm107, %v690, 0
    %717 = vmatprep.subr.bf16.mxu0 0
    %718 = vmatpush1.bf16.msra.mxu0 %v710
    %719 = vmatprep.subr.bf16.mxu0 0
    %720 = vmatpush1.bf16.msra.mxu0 %v711
    %721 = vmatprep.subr.bf16.mxu0 0
    %722 = vmatpush1.bf16.msra.mxu0 0
    %723 = vmatprep.subr.bf16.mxu0 0
    %724 = vmatpush1.bf16.msra.mxu0 0
    %725 = vmatprep.subr.bf16.mxu0 0
    %726 = vmatpush1.bf16.msra.mxu0 0
    %727 = vmatprep.subr.bf16.mxu0 0
    %728 = vmatpush1.bf16.msra.mxu0 0
    %729 = vmatprep.subr.bf16.mxu0 0
    %730 = vmatpush1.bf16.msra.mxu0 0
    %731 = vmatprep.subr.bf16.mxu0 0
    %732 = vmatpush1.bf16.msra.mxu0 0
    %733 = vmatprep.subr.bf16.mxu0 0
    %734 = vmatpush1.bf16.msra.mxu0 0
    %735 = vmatprep.subr.bf16.mxu0 0
    %736 = vmatpush1.bf16.msra.mxu0 0
    %737 = vmatprep.subr.bf16.mxu0 0
    %738 = vmatpush1.bf16.msra.mxu0 0
    %739 = vmatprep.subr.bf16.mxu0 0
    %740 = vmatpush1.bf16.msra.mxu0 0
    %741 = vmatprep.subr.bf16.mxu0 0
    %742 = vmatpush1.bf16.msra.mxu0 0
    %743 = vmatprep.subr.bf16.mxu0 0
    %744 = vmatpush1.bf16.msra.mxu0 0
    %745 = vmatprep.subr.bf16.mxu0 0
    %746 = vmatpush1.bf16.msra.mxu0 0
    %747 = vmatprep.subr.bf16.mxu0 0
    %748 = vmatpush1.bf16.msra.mxu0 0
    %749 = vmatprep.mubr.bf16.mxu0 0
    %750 = vmatmul.mubr.bf16.gmra.mrb[0].mxu0 %v715
    %v751 = vpop.f32.mrb[0].mxu0
    %v752 = vadd.f32 %v700, %v751
    %v753 = vpop.f32.mrb[0].mxu0
    %v754 = vpop.f32.mrb[0].mxu0
    %v755 = vadd.f32 %v700, %v754
    %v756 = vpop.f32.mrb[0].mxu0
    %757 = vdwg.mxu0
    %v758 = vadd.f32 %v752, %v149
    %v759 = vadd.f32 %v755, %v150
    %v760 = vld [vmem:[%s9] sm:$0x1]
    %v761 = vld [vmem:[%s10] sm:$0x1]
    %v762 = vsel %vm107, %v758, 0.0
    %763 = vadd.xlane.f32.xlu0 %v762
    %v764 = vpop.xlane.xlu0 %763
    %v765 = vsel %vm107, %v759, 0.0
    %766 = vadd.xlane.f32.xlu0 %v765
    %v767 = vpop.xlane.xlu0 %766
    %v768 = vmul.f32 %v764, %v114
    %v769 = vmul.f32 %v767, %v114
    %v770 = vsub.f32 %v758, %v768
    %v771 = vsub.f32 %v759, %v769
    %v772 = vmul.f32 %v770, %v770
    %v773 = vmul.f32 %v771, %v771
    %v774 = vsel %vm107, %v772, 0.0
    %775 = vadd.xlane.f32.xlu0 %v774
    %v776 = vpop.xlane.xlu0 %775
    %v777 = vsel %vm107, %v773, 0.0
    %778 = vadd.xlane.f32.xlu0 %v777
    %v779 = vpop.xlane.xlu0 %778
    %v780 = vmul.f32 %v776, %v114
    %v781 = vmul.f32 %v779, %v114
    %v782 = vadd.f32 %v780, 1e-12
    %v783 = vadd.f32 %v781, 1e-12
    %v784 = vrsqrt.pop %v782
    %v785 = vrsqrt.pop %v783
    %v786 = vmul.f32 %v770, %v784
    %v787 = vmul.f32 %v771, %v785
    %v789 = vlaneseq
    %v790 = vshrl.u32 %v789, 7
    %v791 = vsub.s32 0, %v790
    %v792 = vrot.slane %v760, %v791
    %v794 = vmul.f32 %v786, %v792
    %v795 = vmul.f32 %v787, %v792
    %v797 = vlaneseq
    %v798 = vshrl.u32 %v797, 7
    %v799 = vsub.s32 0, %v798
    %v800 = vrot.slane %v761, %v799
    %v802 = vadd.f32 %v794, %v800
    %v803 = vadd.f32 %v795, %v800
    %v804 = vld [vmem:[%s11] sm:$0xf]
    %v805 = vld [vmem:[%s11 + $0x4] sm:$0xf]
    %v806 = vld [vmem:[%s11 + $0x8] sm:$0xf]
    %v807 = vld [vmem:[%s11 + $0xc] sm:$0xf]
    %v808 = vld [vmem:[%s12] sm:$0x1]
    %v809 = vpack.c.bf16 %v803, %v802
    %v811 = vlaneseq
    %v812 = vshrl.u32 %v811, 7
    %v813 = vsub.s32 0, %v812
    %v814 = vrot.slane %v808, %v813
    %v820 = vunpack.c.l.b16 %v804
    %v821 = vunpack.c.l.b16 %v805
    %v822 = vunpack.c.l.b16 %v806
    %v823 = vunpack.c.l.b16 %v807
    %v824 = vpack.c.b16 %v821, %v820
    %v825 = vpack.c.b16 %v823, %v822
    %v829 = vsel %vm107, %v809, 0
    %831 = vmatprep.subr.bf16.mxu0 0
    %832 = vmatpush1.bf16.msra.mxu0 %v824
    %833 = vmatprep.subr.bf16.mxu0 0
    %834 = vmatpush1.bf16.msra.mxu0 %v825
    %835 = vmatprep.subr.bf16.mxu0 0
    %836 = vmatpush1.bf16.msra.mxu0 0
    %837 = vmatprep.subr.bf16.mxu0 0
    %838 = vmatpush1.bf16.msra.mxu0 0
    %839 = vmatprep.subr.bf16.mxu0 0
    %840 = vmatpush1.bf16.msra.mxu0 0
    %841 = vmatprep.subr.bf16.mxu0 0
    %842 = vmatpush1.bf16.msra.mxu0 0
    %843 = vmatprep.subr.bf16.mxu0 0
    %844 = vmatpush1.bf16.msra.mxu0 0
    %845 = vmatprep.subr.bf16.mxu0 0
    %846 = vmatpush1.bf16.msra.mxu0 0
    %847 = vmatprep.subr.bf16.mxu0 0
    %848 = vmatpush1.bf16.msra.mxu0 0
    %849 = vmatprep.subr.bf16.mxu0 0
    %850 = vmatpush1.bf16.msra.mxu0 0
    %851 = vmatprep.subr.bf16.mxu0 0
    %852 = vmatpush1.bf16.msra.mxu0 0
    %853 = vmatprep.subr.bf16.mxu0 0
    %854 = vmatpush1.bf16.msra.mxu0 0
    %855 = vmatprep.subr.bf16.mxu0 0
    %856 = vmatpush1.bf16.msra.mxu0 0
    %857 = vmatprep.subr.bf16.mxu0 0
    %858 = vmatpush1.bf16.msra.mxu0 0
    %859 = vmatprep.subr.bf16.mxu0 0
    %860 = vmatpush1.bf16.msra.mxu0 0
    %861 = vmatprep.subr.bf16.mxu0 0
    %862 = vmatpush1.bf16.msra.mxu0 0
    %863 = vmatprep.mubr.bf16.mxu0 0
    %864 = vmatmul.mubr.bf16.gmra.mrb[0].mxu0 %v829
    %v865 = vpop.f32.mrb[0].mxu0
    %v866 = vadd.f32 %v814, %v865
    %v867 = vpop.f32.mrb[0].mxu0
    %v868 = vpop.f32.mrb[0].mxu0
    %v869 = vadd.f32 %v814, %v868
    %v870 = vpop.f32.mrb[0].mxu0
    %871 = vdwg.mxu0
    %v872 = vmul.f32 %v866, 0.5
    %v873 = vmul.f32 %v869, 0.5
    %v874 = vmul.f32 %v866, 0.70710677
    %v875 = vmul.f32 %v869, 0.70710677
    %vm876 = vcmp.ge.f32.partialorder %v874, 0.0
    %vm877 = vcmp.ge.f32.partialorder %v875, 0.0
    %v878 = vsel %vm876, 1.0, -1.0
    %v879 = vsel %vm877, 1.0, -1.0
    %v880 = vand.u32 2147483647, %v874
    %v881 = vand.u32 2147483647, %v875
    %v882 = vmul.f32 %v880, 0.3275911
    %v883 = vmul.f32 %v881, 0.3275911
    %v884 = vadd.f32 %v882, 1.0
    %v885 = vadd.f32 %v883, 1.0
    %v886 = vrcp.pop %v884
    %v887 = vmul.f32 1.0, %v886
    %v888 = vrcp.pop %v885
    %v889 = vmul.f32 1.0, %v888
    %v890 = vmul.f32 %v887, 1.0614054
    %v891 = vmul.f32 %v889, 1.0614054
    %v892 = vadd.f32 %v890, -1.4531521
    %v893 = vadd.f32 %v891, -1.4531521
    %v894 = vmul.f32 %v892, %v887
    %v895 = vmul.f32 %v893, %v889
    %v896 = vadd.f32 %v894, 1.4214138
    %v897 = vadd.f32 %v895, 1.4214138
    %v898 = vmul.f32 %v896, %v887
    %v899 = vmul.f32 %v897, %v889
    %v900 = vadd.f32 %v898, -0.28449672
    %v901 = vadd.f32 %v899, -0.28449672
    %v902 = vmul.f32 %v900, %v887
    %v903 = vmul.f32 %v901, %v889
    %v904 = vadd.f32 %v902, 0.2548296
    %v905 = vadd.f32 %v903, 0.2548296
    %v906 = vmul.f32 %v904, %v887
    %v907 = vmul.f32 %v905, %v889
    %v908 = vsub.f32 0.0, %v880
    %v909 = vsub.f32 0.0, %v881
    %v910 = vmul.f32 %v908, %v880
    %v911 = vmul.f32 %v909, %v881
    %v912 = vmul.f32 %v910, 1.442695
    %v913 = vpow.pop %v912
    %v914 = vmul.f32 %v911, 1.442695
    %v915 = vpow.pop %v914
    %v916 = vmul.f32 %v906, %v913
    %v917 = vmul.f32 %v907, %v915
    %v918 = vsub.f32 1.0, %v916
    %v919 = vsub.f32 1.0, %v917
    %v920 = vmul.f32 %v878, %v918
    %v921 = vmul.f32 %v879, %v919
    %v922 = vadd.f32 %v920, 1.0
    %v923 = vadd.f32 %v921, 1.0
    %v924 = vmul.f32 %v872, %v922
    %v925 = vmul.f32 %v873, %v923
    %v926 = vld [vmem:[%s13] sm:$0xf]
    %v927 = vld [vmem:[%s13 + $0x4] sm:$0xf]
    %v928 = vld [vmem:[%s13 + $0x8] sm:$0xf]
    %v929 = vld [vmem:[%s13 + $0xc] sm:$0xf]
    %v930 = vld [vmem:[%s13 + $0x10] sm:$0xf]
    %v931 = vld [vmem:[%s13 + $0x14] sm:$0xf]
    %v932 = vld [vmem:[%s13 + $0x18] sm:$0xf]
    %v933 = vld [vmem:[%s13 + $0x1c] sm:$0xf]
    %v934 = vld [vmem:[%s14] sm:$0x1]
    %v935 = vpack.c.bf16 %v925, %v924
    %v937 = vlaneseq
    %v938 = vshrl.u32 %v937, 7
    %v939 = vsub.s32 0, %v938
    %v940 = vrot.slane %v934, %v939
    %v950 = vunpack.c.l.b16 %v926
    %v951 = vunpack.c.l.b16 %v927
    %v952 = vunpack.c.l.b16 %v928
    %v953 = vunpack.c.l.b16 %v929
    %v954 = vunpack.c.l.b16 %v930
    %v955 = vunpack.c.l.b16 %v931
    %v956 = vunpack.c.l.b16 %v932
    %v957 = vunpack.c.l.b16 %v933
    %v958 = vpack.c.b16 %v951, %v950
    %v959 = vpack.c.b16 %v953, %v952
    %v960 = vpack.c.b16 %v955, %v954
    %v961 = vpack.c.b16 %v957, %v956
    %vm966 = vcmask 523264
    %v968 = vsel %vm966, %v935, 0
    %970 = vmatprep.subr.bf16.mxu0 0
    %971 = vmatpush1.bf16.msra.mxu0 %v958
    %972 = vmatprep.subr.bf16.mxu0 0
    %973 = vmatpush1.bf16.msra.mxu0 %v959
    %974 = vmatprep.subr.bf16.mxu0 0
    %975 = vmatpush1.bf16.msra.mxu0 %v960
    %976 = vmatprep.subr.bf16.mxu0 0
    %977 = vmatpush1.bf16.msra.mxu0 %v961
    %978 = vmatprep.subr.bf16.mxu0 0
    %979 = vmatpush1.bf16.msra.mxu0 0
    %980 = vmatprep.subr.bf16.mxu0 0
    %981 = vmatpush1.bf16.msra.mxu0 0
    %982 = vmatprep.subr.bf16.mxu0 0
    %983 = vmatpush1.bf16.msra.mxu0 0
    %984 = vmatprep.subr.bf16.mxu0 0
    %985 = vmatpush1.bf16.msra.mxu0 0
    %986 = vmatprep.subr.bf16.mxu0 0
    %987 = vmatpush1.bf16.msra.mxu0 0
    %988 = vmatprep.subr.bf16.mxu0 0
    %989 = vmatpush1.bf16.msra.mxu0 0
    %990 = vmatprep.subr.bf16.mxu0 0
    %991 = vmatpush1.bf16.msra.mxu0 0
    %992 = vmatprep.subr.bf16.mxu0 0
    %993 = vmatpush1.bf16.msra.mxu0 0
    %994 = vmatprep.subr.bf16.mxu0 0
    %995 = vmatpush1.bf16.msra.mxu0 0
    %996 = vmatprep.subr.bf16.mxu0 0
    %997 = vmatpush1.bf16.msra.mxu0 0
    %998 = vmatprep.subr.bf16.mxu0 0
    %999 = vmatpush1.bf16.msra.mxu0 0
    %1000 = vmatprep.subr.bf16.mxu0 0
    %1001 = vmatpush1.bf16.msra.mxu0 0
    %1002 = vmatprep.mubr.bf16.mxu0 0
    %1003 = vmatmul.mubr.bf16.gmra.mrb[0].mxu0 %v968
    %v1004 = vpop.f32.mrb[0].mxu0
    %v1005 = vadd.f32 %v940, %v1004
    %v1006 = vpop.f32.mrb[0].mxu0
    %v1007 = vpop.f32.mrb[0].mxu0
    %v1008 = vadd.f32 %v940, %v1007
    %v1009 = vpop.f32.mrb[0].mxu0
    %1010 = vdwg.mxu0
    %v1011 = vadd.f32 %v1005, %v802
    %v1012 = vadd.f32 %v1008, %v803
    %v1013 = vld [vmem:[%s15] sm:$0x1]
    %v1014 = vld [vmem:[%s16] sm:$0x1]
    %v1015 = vsel %vm107, %v1011, 0.0
    %1016 = vadd.xlane.f32.xlu0 %v1015
    %v1017 = vpop.xlane.xlu0 %1016
    %v1018 = vsel %vm107, %v1012, 0.0
    %1019 = vadd.xlane.f32.xlu0 %v1018
    %v1020 = vpop.xlane.xlu0 %1019
    %v1021 = vmul.f32 %v1017, %v114
    %v1022 = vmul.f32 %v1020, %v114
    %v1023 = vsub.f32 %v1011, %v1021
    %v1024 = vsub.f32 %v1012, %v1022
    %v1025 = vmul.f32 %v1023, %v1023
    %v1026 = vmul.f32 %v1024, %v1024
    %v1027 = vsel %vm107, %v1025, 0.0
    %1028 = vadd.xlane.f32.xlu0 %v1027
    %v1029 = vpop.xlane.xlu0 %1028
    %v1030 = vsel %vm107, %v1026, 0.0
    %1031 = vadd.xlane.f32.xlu0 %v1030
    %v1032 = vpop.xlane.xlu0 %1031
    %v1033 = vmul.f32 %v1029, %v114
    %v1034 = vmul.f32 %v1032, %v114
    %v1035 = vadd.f32 %v1033, 1e-12
    %v1036 = vadd.f32 %v1034, 1e-12
    %v1037 = vrsqrt.pop %v1035
    %v1038 = vrsqrt.pop %v1036
    %v1039 = vmul.f32 %v1023, %v1037
    %v1040 = vmul.f32 %v1024, %v1038
    %v1042 = vlaneseq
    %v1043 = vshrl.u32 %v1042, 7
    %v1044 = vsub.s32 0, %v1043
    %v1045 = vrot.slane %v1013, %v1044
    %v1047 = vmul.f32 %v1039, %v1045
    %v1048 = vmul.f32 %v1040, %v1045
    %v1050 = vlaneseq
    %v1051 = vshrl.u32 %v1050, 7
    %v1052 = vsub.s32 0, %v1051
    %v1053 = vrot.slane %v1014, %v1052
    %v1055 = vadd.f32 %v1047, %v1053
    %v1056 = vadd.f32 %v1048, %v1053
    %s1057 = scalar_lea.vmem %s5, 16
    %v1058 = vld [vmem:[%s1057] sm:$0xf]
    %v1059 = vld [vmem:[%s1057 + $0x4] sm:$0xf]
    %v1060 = vld [vmem:[%s1057 + $0x8] sm:$0xf]
    %v1061 = vld [vmem:[%s1057 + $0xc] sm:$0xf]
    %s1062 = scalar_lea.vmem %s6, 1
    %v1063 = vld [vmem:[%s1062] sm:$0x1]
    %v1064 = vpack.c.bf16 %v1056, %v1055
    %v1066 = vlaneseq
    %v1067 = vshrl.u32 %v1066, 7
    %v1068 = vsub.s32 0, %v1067
    %v1069 = vrot.slane %v1063, %v1068
    %v1075 = vunpack.c.l.b16 %v1058
    %v1076 = vunpack.c.l.b16 %v1059
    %v1077 = vunpack.c.l.b16 %v1060
    %v1078 = vunpack.c.l.b16 %v1061
    %v1079 = vpack.c.b16 %v1076, %v1075
    %v1080 = vpack.c.b16 %v1078, %v1077
    %v1084 = vsel %vm107, %v1064, 0
    %1086 = vmatprep.subr.bf16.mxu0 0
    %1087 = vmatpush1.bf16.msra.mxu0 %v1079
    %1088 = vmatprep.subr.bf16.mxu0 0
    %1089 = vmatpush1.bf16.msra.mxu0 %v1080
    %1090 = vmatprep.subr.bf16.mxu0 0
    %1091 = vmatpush1.bf16.msra.mxu0 0
    %1092 = vmatprep.subr.bf16.mxu0 0
    %1093 = vmatpush1.bf16.msra.mxu0 0
    %1094 = vmatprep.subr.bf16.mxu0 0
    %1095 = vmatpush1.bf16.msra.mxu0 0
    %1096 = vmatprep.subr.bf16.mxu0 0
    %1097 = vmatpush1.bf16.msra.mxu0 0
    %1098 = vmatprep.subr.bf16.mxu0 0
    %1099 = vmatpush1.bf16.msra.mxu0 0
    %1100 = vmatprep.subr.bf16.mxu0 0
    %1101 = vmatpush1.bf16.msra.mxu0 0
    %1102 = vmatprep.subr.bf16.mxu0 0
    %1103 = vmatpush1.bf16.msra.mxu0 0
    %1104 = vmatprep.subr.bf16.mxu0 0
    %1105 = vmatpush1.bf16.msra.mxu0 0
    %1106 = vmatprep.subr.bf16.mxu0 0
    %1107 = vmatpush1.bf16.msra.mxu0 0
    %1108 = vmatprep.subr.bf16.mxu0 0
    %1109 = vmatpush1.bf16.msra.mxu0 0
    %1110 = vmatprep.subr.bf16.mxu0 0
    %1111 = vmatpush1.bf16.msra.mxu0 0
    %1112 = vmatprep.subr.bf16.mxu0 0
    %1113 = vmatpush1.bf16.msra.mxu0 0
    %1114 = vmatprep.subr.bf16.mxu0 0
    %1115 = vmatpush1.bf16.msra.mxu0 0
    %1116 = vmatprep.subr.bf16.mxu0 0
    %1117 = vmatpush1.bf16.msra.mxu0 0
    %1118 = vmatprep.mubr.bf16.mxu0 0
    %1119 = vmatmul.mubr.bf16.gmra.mrb[0].mxu0 %v1084
    %v1120 = vpop.f32.mrb[0].mxu0
    %v1121 = vadd.f32 %v1069, %v1120
    %v1122 = vpop.f32.mrb[0].mxu0
    %v1123 = vpop.f32.mrb[0].mxu0
    %v1124 = vadd.f32 %v1069, %v1123
    %v1125 = vpop.f32.mrb[0].mxu0
    %1126 = vdwg.mxu0
    %v1127 = vpack.c.bf16 %v1121, %v1121
    %v1128 = vpack.c.bf16 %v1124, %v1124
    %1130 = vrot.lane.b32.xlu0 %v1127, 96
    %v1131 = vpop.permute.xlu0 %1130
    %v1133 = vsel %vm224, %v1127, 0
    %v1136 = vsel %vm224, %v1131, 0
    %1138 = vmatprep.subr.bf16.mxu0 0
    %1139 = vmatpush1.bf16.xpose.msra.mxu0 %v1136
    %1140 = vmatprep.subr.bf16.mxu0 0
    %1141 = vmatpush1.bf16.xpose.msra.mxu0 0
    %1142 = vmatprep.subr.bf16.mxu0 0
    %1143 = vmatpush1.bf16.xpose.msra.mxu0 0
    %1144 = vmatprep.subr.bf16.mxu0 0
    %1145 = vmatpush1.bf16.xpose.msra.mxu0 0
    %1146 = vmatprep.subr.bf16.mxu0 0
    %1147 = vmatpush1.bf16.xpose.msra.mxu0 0
    %1148 = vmatprep.subr.bf16.mxu0 0
    %1149 = vmatpush1.bf16.xpose.msra.mxu0 0
    %1150 = vmatprep.subr.bf16.mxu0 0
    %1151 = vmatpush1.bf16.xpose.msra.mxu0 0
    %1152 = vmatprep.subr.bf16.mxu0 0
    %1153 = vmatpush1.bf16.xpose.msra.mxu0 0
    %1154 = vmatprep.subr.bf16.mxu0 0
    %1155 = vmatpush1.bf16.xpose.msra.mxu0 0
    %1156 = vmatprep.subr.bf16.mxu0 0
    %1157 = vmatpush1.bf16.xpose.msra.mxu0 0
    %1158 = vmatprep.subr.bf16.mxu0 0
    %1159 = vmatpush1.bf16.xpose.msra.mxu0 0
    %1160 = vmatprep.subr.bf16.mxu0 0
    %1161 = vmatpush1.bf16.xpose.msra.mxu0 0
    %1162 = vmatprep.subr.bf16.mxu0 0
    %1163 = vmatpush1.bf16.xpose.msra.mxu0 0
    %1164 = vmatprep.subr.bf16.mxu0 0
    %1165 = vmatpush1.bf16.xpose.msra.mxu0 0
    %1166 = vmatprep.subr.bf16.mxu0 0
    %1167 = vmatpush1.bf16.xpose.msra.mxu0 0
    %1168 = vmatprep.subr.bf16.mxu0 0
    %1169 = vmatpush1.bf16.xpose.msra.mxu0 0
    %1170 = vmatprep.mubr.bf16.mxu0 0
    %1171 = vmatmul.mubr.bf16.gmra.mrb[0].mxu0 %v1133
    %v1172 = vpop.f32.mrb[0].mxu0
    %v1173 = vadd.f32 0.0, %v1172
    %v1174 = vpop.f32.mrb[0].mxu0
    %v1175 = vpop.f32.mrb[0].mxu0
    %v1176 = vpop.f32.mrb[0].mxu0
    %1177 = vdwg.mxu0
    %1179 = vrot.lane.b32.xlu0 %v1128, 96
    %v1180 = vpop.permute.xlu0 %1179
    %v1182 = vsel %vm224, %v1128, 0
    %v1185 = vsel %vm224, %v1180, 0
    %1187 = vmatprep.subr.bf16.mxu0 0
    %1188 = vmatpush1.bf16.xpose.msra.mxu0 %v1185
    %1189 = vmatprep.subr.bf16.mxu0 0
    %1190 = vmatpush1.bf16.xpose.msra.mxu0 0
    %1191 = vmatprep.subr.bf16.mxu0 0
    %1192 = vmatpush1.bf16.xpose.msra.mxu0 0
    %1193 = vmatprep.subr.bf16.mxu0 0
    %1194 = vmatpush1.bf16.xpose.msra.mxu0 0
    %1195 = vmatprep.subr.bf16.mxu0 0
    %1196 = vmatpush1.bf16.xpose.msra.mxu0 0
    %1197 = vmatprep.subr.bf16.mxu0 0
    %1198 = vmatpush1.bf16.xpose.msra.mxu0 0
    %1199 = vmatprep.subr.bf16.mxu0 0
    %1200 = vmatpush1.bf16.xpose.msra.mxu0 0
    %1201 = vmatprep.subr.bf16.mxu0 0
    %1202 = vmatpush1.bf16.xpose.msra.mxu0 0
    %1203 = vmatprep.subr.bf16.mxu0 0
    %1204 = vmatpush1.bf16.xpose.msra.mxu0 0
    %1205 = vmatprep.subr.bf16.mxu0 0
    %1206 = vmatpush1.bf16.xpose.msra.mxu0 0
    %1207 = vmatprep.subr.bf16.mxu0 0
    %1208 = vmatpush1.bf16.xpose.msra.mxu0 0
    %1209 = vmatprep.subr.bf16.mxu0 0
    %1210 = vmatpush1.bf16.xpose.msra.mxu0 0
    %1211 = vmatprep.subr.bf16.mxu0 0
    %1212 = vmatpush1.bf16.xpose.msra.mxu0 0
    %1213 = vmatprep.subr.bf16.mxu0 0
    %1214 = vmatpush1.bf16.xpose.msra.mxu0 0
    %1215 = vmatprep.subr.bf16.mxu0 0
    %1216 = vmatpush1.bf16.xpose.msra.mxu0 0
    %1217 = vmatprep.subr.bf16.mxu0 0
    %1218 = vmatpush1.bf16.xpose.msra.mxu0 0
    %1219 = vmatprep.mubr.bf16.mxu0 0
    %1220 = vmatmul.mubr.bf16.gmra.mrb[0].mxu0 %v1182
    %v1221 = vpop.f32.mrb[0].mxu0
    %v1222 = vadd.f32 0.0, %v1221
    %v1223 = vpop.f32.mrb[0].mxu0
    %v1224 = vpop.f32.mrb[0].mxu0
    %v1225 = vpop.f32.mrb[0].mxu0
    %1226 = vdwg.mxu0
    %v1227 = vmul.f32 %v1173, 0.25
    %v1228 = vmul.f32 %v1222, 0.25
    %v1229 = vadd.f32 %v1227, %v325
    %v1230 = vadd.f32 %v1228, %v329
    %v1231 = vsel %vm334, %v1229, -inf
    %1232 = vmax.xlane.f32.xlu0 %v1231
    %v1233 = vpop.xlane.xlu0 %1232
    %v1234 = vsel %vm334, %v1230, -inf
    %1235 = vmax.xlane.f32.xlu0 %v1234
    %v1236 = vpop.xlane.xlu0 %1235
    %v1237 = vsub.f32 %v1229, %v1233
    %v1238 = vsub.f32 %v1230, %v1236
    %v1239 = vmul.f32 %v1237, 1.442695
    %v1240 = vpow.pop %v1239
    %v1241 = vmul.f32 %v1238, 1.442695
    %v1242 = vpow.pop %v1241
    %v1243 = vsel %vm334, %v1240, 0.0
    %1244 = vadd.xlane.f32.xlu0 %v1243
    %v1245 = vpop.xlane.xlu0 %1244
    %v1246 = vsel %vm334, %v1242, 0.0
    %1247 = vadd.xlane.f32.xlu0 %v1246
    %v1248 = vpop.xlane.xlu0 %1247
    %v1249 = vrcp.pop %v1245
    %v1250 = vrcp.pop %v1248
    %v1251 = vmul.f32 %v1240, %v1249
    %v1252 = vmul.f32 %v1242, %v1250
    %v1253 = vpack.c.bf16 %v1251, %v1251
    %v1254 = vpack.c.bf16 %v1252, %v1252
    %1255 = vrot.lane.b32.xlu0 %v1127, 64
    %v1256 = vpop.permute.xlu0 %1255
    %v1258 = vsel %vm334, %v1253, 0
    %v1261 = vsel %vm364, %v1256, 0
    %1263 = vmatprep.subr.bf16.mxu0 0
    %1264 = vmatpush1.bf16.msra.mxu0 %v1261
    %1265 = vmatprep.subr.bf16.mxu0 0
    %1266 = vmatpush1.bf16.msra.mxu0 0
    %1267 = vmatprep.subr.bf16.mxu0 0
    %1268 = vmatpush1.bf16.msra.mxu0 0
    %1269 = vmatprep.subr.bf16.mxu0 0
    %1270 = vmatpush1.bf16.msra.mxu0 0
    %1271 = vmatprep.subr.bf16.mxu0 0
    %1272 = vmatpush1.bf16.msra.mxu0 0
    %1273 = vmatprep.subr.bf16.mxu0 0
    %1274 = vmatpush1.bf16.msra.mxu0 0
    %1275 = vmatprep.subr.bf16.mxu0 0
    %1276 = vmatpush1.bf16.msra.mxu0 0
    %1277 = vmatprep.subr.bf16.mxu0 0
    %1278 = vmatpush1.bf16.msra.mxu0 0
    %1279 = vmatprep.subr.bf16.mxu0 0
    %1280 = vmatpush1.bf16.msra.mxu0 0
    %1281 = vmatprep.subr.bf16.mxu0 0
    %1282 = vmatpush1.bf16.msra.mxu0 0
    %1283 = vmatprep.subr.bf16.mxu0 0
    %1284 = vmatpush1.bf16.msra.mxu0 0
    %1285 = vmatprep.subr.bf16.mxu0 0
    %1286 = vmatpush1.bf16.msra.mxu0 0
    %1287 = vmatprep.subr.bf16.mxu0 0
    %1288 = vmatpush1.bf16.msra.mxu0 0
    %1289 = vmatprep.subr.bf16.mxu0 0
    %1290 = vmatpush1.bf16.msra.mxu0 0
    %1291 = vmatprep.subr.bf16.mxu0 0
    %1292 = vmatpush1.bf16.msra.mxu0 0
    %1293 = vmatprep.subr.bf16.mxu0 0
    %1294 = vmatpush1.bf16.msra.mxu0 0
    %1295 = vmatprep.mubr.bf16.mxu0 0
    %1296 = vmatmul.mubr.bf16.gmra.mrb[0].mxu0 %v1258
    %v1297 = vpop.f32.mrb[0].mxu0
    %v1298 = vadd.f32 0.0, %v1297
    %v1299 = vpop.f32.mrb[0].mxu0
    %v1300 = vpop.f32.mrb[0].mxu0
    %v1301 = vpop.f32.mrb[0].mxu0
    %1302 = vdwg.mxu0
    %1303 = vrot.lane.b32.xlu0 %v1128, 64
    %v1304 = vpop.permute.xlu0 %1303
    %v1306 = vsel %vm334, %v1254, 0
    %v1309 = vsel %vm364, %v1304, 0
    %1311 = vmatprep.subr.bf16.mxu0 0
    %1312 = vmatpush1.bf16.msra.mxu0 %v1309
    %1313 = vmatprep.subr.bf16.mxu0 0
    %1314 = vmatpush1.bf16.msra.mxu0 0
    %1315 = vmatprep.subr.bf16.mxu0 0
    %1316 = vmatpush1.bf16.msra.mxu0 0
    %1317 = vmatprep.subr.bf16.mxu0 0
    %1318 = vmatpush1.bf16.msra.mxu0 0
    %1319 = vmatprep.subr.bf16.mxu0 0
    %1320 = vmatpush1.bf16.msra.mxu0 0
    %1321 = vmatprep.subr.bf16.mxu0 0
    %1322 = vmatpush1.bf16.msra.mxu0 0
    %1323 = vmatprep.subr.bf16.mxu0 0
    %1324 = vmatpush1.bf16.msra.mxu0 0
    %1325 = vmatprep.subr.bf16.mxu0 0
    %1326 = vmatpush1.bf16.msra.mxu0 0
    %1327 = vmatprep.subr.bf16.mxu0 0
    %1328 = vmatpush1.bf16.msra.mxu0 0
    %1329 = vmatprep.subr.bf16.mxu0 0
    %1330 = vmatpush1.bf16.msra.mxu0 0
    %1331 = vmatprep.subr.bf16.mxu0 0
    %1332 = vmatpush1.bf16.msra.mxu0 0
    %1333 = vmatprep.subr.bf16.mxu0 0
    %1334 = vmatpush1.bf16.msra.mxu0 0
    %1335 = vmatprep.subr.bf16.mxu0 0
    %1336 = vmatpush1.bf16.msra.mxu0 0
    %1337 = vmatprep.subr.bf16.mxu0 0
    %1338 = vmatpush1.bf16.msra.mxu0 0
    %1339 = vmatprep.subr.bf16.mxu0 0
    %1340 = vmatpush1.bf16.msra.mxu0 0
    %1341 = vmatprep.subr.bf16.mxu0 0
    %1342 = vmatpush1.bf16.msra.mxu0 0
    %1343 = vmatprep.mubr.bf16.mxu0 0
    %1344 = vmatmul.mubr.bf16.gmra.mrb[0].mxu0 %v1306
    %v1345 = vpop.f32.mrb[0].mxu0
    %v1346 = vadd.f32 0.0, %v1345
    %v1347 = vpop.f32.mrb[0].mxu0
    %v1348 = vpop.f32.mrb[0].mxu0
    %v1349 = vpop.f32.mrb[0].mxu0
    %1350 = vdwg.mxu0
    %1351 = vrot.lane.b32.xlu0 %v1127, 112
    %v1352 = vpop.permute.xlu0 %1351
    %1353 = vrot.lane.b32.xlu0 %v1127, 80
    %v1354 = vpop.permute.xlu0 %1353
    %v1356 = vsel %vm224, %v1352, 0
    %v1359 = vsel %vm224, %v1354, 0
    %1361 = vmatprep.subr.bf16.mxu0 0
    %1362 = vmatpush1.bf16.xpose.msra.mxu0 %v1359
    %1363 = vmatprep.subr.bf16.mxu0 0
    %1364 = vmatpush1.bf16.xpose.msra.mxu0 0
    %1365 = vmatprep.subr.bf16.mxu0 0
    %1366 = vmatpush1.bf16.xpose.msra.mxu0 0
    %1367 = vmatprep.subr.bf16.mxu0 0
    %1368 = vmatpush1.bf16.xpose.msra.mxu0 0
    %1369 = vmatprep.subr.bf16.mxu0 0
    %1370 = vmatpush1.bf16.xpose.msra.mxu0 0
    %1371 = vmatprep.subr.bf16.mxu0 0
    %1372 = vmatpush1.bf16.xpose.msra.mxu0 0
    %1373 = vmatprep.subr.bf16.mxu0 0
    %1374 = vmatpush1.bf16.xpose.msra.mxu0 0
    %1375 = vmatprep.subr.bf16.mxu0 0
    %1376 = vmatpush1.bf16.xpose.msra.mxu0 0
    %1377 = vmatprep.subr.bf16.mxu0 0
    %1378 = vmatpush1.bf16.xpose.msra.mxu0 0
    %1379 = vmatprep.subr.bf16.mxu0 0
    %1380 = vmatpush1.bf16.xpose.msra.mxu0 0
    %1381 = vmatprep.subr.bf16.mxu0 0
    %1382 = vmatpush1.bf16.xpose.msra.mxu0 0
    %1383 = vmatprep.subr.bf16.mxu0 0
    %1384 = vmatpush1.bf16.xpose.msra.mxu0 0
    %1385 = vmatprep.subr.bf16.mxu0 0
    %1386 = vmatpush1.bf16.xpose.msra.mxu0 0
    %1387 = vmatprep.subr.bf16.mxu0 0
    %1388 = vmatpush1.bf16.xpose.msra.mxu0 0
    %1389 = vmatprep.subr.bf16.mxu0 0
    %1390 = vmatpush1.bf16.xpose.msra.mxu0 0
    %1391 = vmatprep.subr.bf16.mxu0 0
    %1392 = vmatpush1.bf16.xpose.msra.mxu0 0
    %1393 = vmatprep.mubr.bf16.mxu0 0
    %1394 = vmatmul.mubr.bf16.gmra.mrb[0].mxu0 %v1356
    %v1395 = vpop.f32.mrb[0].mxu0
    %v1396 = vadd.f32 0.0, %v1395
    %v1397 = vpop.f32.mrb[0].mxu0
    %v1398 = vpop.f32.mrb[0].mxu0
    %v1399 = vpop.f32.mrb[0].mxu0
    %1400 = vdwg.mxu0
    %1401 = vrot.lane.b32.xlu0 %v1128, 112
    %v1402 = vpop.permute.xlu0 %1401
    %1403 = vrot.lane.b32.xlu0 %v1128, 80
    %v1404 = vpop.permute.xlu0 %1403
    %v1406 = vsel %vm224, %v1402, 0
    %v1409 = vsel %vm224, %v1404, 0
    %1411 = vmatprep.subr.bf16.mxu0 0
    %1412 = vmatpush1.bf16.xpose.msra.mxu0 %v1409
    %1413 = vmatprep.subr.bf16.mxu0 0
    %1414 = vmatpush1.bf16.xpose.msra.mxu0 0
    %1415 = vmatprep.subr.bf16.mxu0 0
    %1416 = vmatpush1.bf16.xpose.msra.mxu0 0
    %1417 = vmatprep.subr.bf16.mxu0 0
    %1418 = vmatpush1.bf16.xpose.msra.mxu0 0
    %1419 = vmatprep.subr.bf16.mxu0 0
    %1420 = vmatpush1.bf16.xpose.msra.mxu0 0
    %1421 = vmatprep.subr.bf16.mxu0 0
    %1422 = vmatpush1.bf16.xpose.msra.mxu0 0
    %1423 = vmatprep.subr.bf16.mxu0 0
    %1424 = vmatpush1.bf16.xpose.msra.mxu0 0
    %1425 = vmatprep.subr.bf16.mxu0 0
    %1426 = vmatpush1.bf16.xpose.msra.mxu0 0
    %1427 = vmatprep.subr.bf16.mxu0 0
    %1428 = vmatpush1.bf16.xpose.msra.mxu0 0
    %1429 = vmatprep.subr.bf16.mxu0 0
    %1430 = vmatpush1.bf16.xpose.msra.mxu0 0
    %1431 = vmatprep.subr.bf16.mxu0 0
    %1432 = vmatpush1.bf16.xpose.msra.mxu0 0
    %1433 = vmatprep.subr.bf16.mxu0 0
    %1434 = vmatpush1.bf16.xpose.msra.mxu0 0
    %1435 = vmatprep.subr.bf16.mxu0 0
    %1436 = vmatpush1.bf16.xpose.msra.mxu0 0
    %1437 = vmatprep.subr.bf16.mxu0 0
    %1438 = vmatpush1.bf16.xpose.msra.mxu0 0
    %1439 = vmatprep.subr.bf16.mxu0 0
    %1440 = vmatpush1.bf16.xpose.msra.mxu0 0
    %1441 = vmatprep.subr.bf16.mxu0 0
    %1442 = vmatpush1.bf16.xpose.msra.mxu0 0
    %1443 = vmatprep.mubr.bf16.mxu0 0
    %1444 = vmatmul.mubr.bf16.gmra.mrb[0].mxu0 %v1406
    %v1445 = vpop.f32.mrb[0].mxu0
    %v1446 = vadd.f32 0.0, %v1445
    %v1447 = vpop.f32.mrb[0].mxu0
    %v1448 = vpop.f32.mrb[0].mxu0
    %v1449 = vpop.f32.mrb[0].mxu0
    %1450 = vdwg.mxu0
    %v1451 = vmul.f32 %v1396, 0.25
    %v1452 = vmul.f32 %v1446, 0.25
    %v1453 = vadd.f32 %v1451, %v325
    %v1454 = vadd.f32 %v1452, %v329
    %v1455 = vsel %vm334, %v1453, -inf
    %1456 = vmax.xlane.f32.xlu0 %v1455
    %v1457 = vpop.xlane.xlu0 %1456
    %v1458 = vsel %vm334, %v1454, -inf
    %1459 = vmax.xlane.f32.xlu0 %v1458
    %v1460 = vpop.xlane.xlu0 %1459
    %v1461 = vsub.f32 %v1453, %v1457
    %v1462 = vsub.f32 %v1454, %v1460
    %v1463 = vmul.f32 %v1461, 1.442695
    %v1464 = vpow.pop %v1463
    %v1465 = vmul.f32 %v1462, 1.442695
    %v1466 = vpow.pop %v1465
    %v1467 = vsel %vm334, %v1464, 0.0
    %1468 = vadd.xlane.f32.xlu0 %v1467
    %v1469 = vpop.xlane.xlu0 %1468
    %v1470 = vsel %vm334, %v1466, 0.0
    %1471 = vadd.xlane.f32.xlu0 %v1470
    %v1472 = vpop.xlane.xlu0 %1471
    %v1473 = vrcp.pop %v1469
    %v1474 = vrcp.pop %v1472
    %v1475 = vmul.f32 %v1464, %v1473
    %v1476 = vmul.f32 %v1466, %v1474
    %v1477 = vpack.c.bf16 %v1475, %v1475
    %v1478 = vpack.c.bf16 %v1476, %v1476
    %1479 = vrot.lane.b32.xlu0 %v1127, 48
    %v1480 = vpop.permute.xlu0 %1479
    %v1482 = vsel %vm334, %v1477, 0
    %v1485 = vsel %vm364, %v1480, 0
    %1487 = vmatprep.subr.bf16.mxu0 0
    %1488 = vmatpush1.bf16.msra.mxu0 %v1485
    %1489 = vmatprep.subr.bf16.mxu0 0
    %1490 = vmatpush1.bf16.msra.mxu0 0
    %1491 = vmatprep.subr.bf16.mxu0 0
    %1492 = vmatpush1.bf16.msra.mxu0 0
    %1493 = vmatprep.subr.bf16.mxu0 0
    %1494 = vmatpush1.bf16.msra.mxu0 0
    %1495 = vmatprep.subr.bf16.mxu0 0
    %1496 = vmatpush1.bf16.msra.mxu0 0
    %1497 = vmatprep.subr.bf16.mxu0 0
    %1498 = vmatpush1.bf16.msra.mxu0 0
    %1499 = vmatprep.subr.bf16.mxu0 0
    %1500 = vmatpush1.bf16.msra.mxu0 0
    %1501 = vmatprep.subr.bf16.mxu0 0
    %1502 = vmatpush1.bf16.msra.mxu0 0
    %1503 = vmatprep.subr.bf16.mxu0 0
    %1504 = vmatpush1.bf16.msra.mxu0 0
    %1505 = vmatprep.subr.bf16.mxu0 0
    %1506 = vmatpush1.bf16.msra.mxu0 0
    %1507 = vmatprep.subr.bf16.mxu0 0
    %1508 = vmatpush1.bf16.msra.mxu0 0
    %1509 = vmatprep.subr.bf16.mxu0 0
    %1510 = vmatpush1.bf16.msra.mxu0 0
    %1511 = vmatprep.subr.bf16.mxu0 0
    %1512 = vmatpush1.bf16.msra.mxu0 0
    %1513 = vmatprep.subr.bf16.mxu0 0
    %1514 = vmatpush1.bf16.msra.mxu0 0
    %1515 = vmatprep.subr.bf16.mxu0 0
    %1516 = vmatpush1.bf16.msra.mxu0 0
    %1517 = vmatprep.subr.bf16.mxu0 0
    %1518 = vmatpush1.bf16.msra.mxu0 0
    %1519 = vmatprep.mubr.bf16.mxu0 0
    %1520 = vmatmul.mubr.bf16.gmra.mrb[0].mxu0 %v1482
    %v1521 = vpop.f32.mrb[0].mxu0
    %v1522 = vadd.f32 0.0, %v1521
    %v1523 = vpop.f32.mrb[0].mxu0
    %v1524 = vpop.f32.mrb[0].mxu0
    %v1525 = vpop.f32.mrb[0].mxu0
    %1526 = vdwg.mxu0
    %1527 = vrot.lane.b32.xlu0 %v1128, 48
    %v1528 = vpop.permute.xlu0 %1527
    %v1530 = vsel %vm334, %v1478, 0
    %v1533 = vsel %vm364, %v1528, 0
    %1535 = vmatprep.subr.bf16.mxu0 0
    %1536 = vmatpush1.bf16.msra.mxu0 %v1533
    %1537 = vmatprep.subr.bf16.mxu0 0
    %1538 = vmatpush1.bf16.msra.mxu0 0
    %1539 = vmatprep.subr.bf16.mxu0 0
    %1540 = vmatpush1.bf16.msra.mxu0 0
    %1541 = vmatprep.subr.bf16.mxu0 0
    %1542 = vmatpush1.bf16.msra.mxu0 0
    %1543 = vmatprep.subr.bf16.mxu0 0
    %1544 = vmatpush1.bf16.msra.mxu0 0
    %1545 = vmatprep.subr.bf16.mxu0 0
    %1546 = vmatpush1.bf16.msra.mxu0 0
    %1547 = vmatprep.subr.bf16.mxu0 0
    %1548 = vmatpush1.bf16.msra.mxu0 0
    %1549 = vmatprep.subr.bf16.mxu0 0
    %1550 = vmatpush1.bf16.msra.mxu0 0
    %1551 = vmatprep.subr.bf16.mxu0 0
    %1552 = vmatpush1.bf16.msra.mxu0 0
    %1553 = vmatprep.subr.bf16.mxu0 0
    %1554 = vmatpush1.bf16.msra.mxu0 0
    %1555 = vmatprep.subr.bf16.mxu0 0
    %1556 = vmatpush1.bf16.msra.mxu0 0
    %1557 = vmatprep.subr.bf16.mxu0 0
    %1558 = vmatpush1.bf16.msra.mxu0 0
    %1559 = vmatprep.subr.bf16.mxu0 0
    %1560 = vmatpush1.bf16.msra.mxu0 0
    %1561 = vmatprep.subr.bf16.mxu0 0
    %1562 = vmatpush1.bf16.msra.mxu0 0
    %1563 = vmatprep.subr.bf16.mxu0 0
    %1564 = vmatpush1.bf16.msra.mxu0 0
    %1565 = vmatprep.subr.bf16.mxu0 0
    %1566 = vmatpush1.bf16.msra.mxu0 0
    %1567 = vmatprep.mubr.bf16.mxu0 0
    %1568 = vmatmul.mubr.bf16.gmra.mrb[0].mxu0 %v1530
    %v1569 = vpop.f32.mrb[0].mxu0
    %v1570 = vadd.f32 0.0, %v1569
    %v1571 = vpop.f32.mrb[0].mxu0
    %v1572 = vpop.f32.mrb[0].mxu0
    %v1573 = vpop.f32.mrb[0].mxu0
    %1574 = vdwg.mxu0
    %1577 = vrot.lane.b32.xlu0 %v1522, 16
    %v1578 = vpop.permute.xlu0 %1577
    %1579 = vrot.lane.b32.xlu0 %v1570, 16
    %v1580 = vpop.permute.xlu0 %1579
    %v1583 = vsel %vm224, %v1298, %v1578
    %v1584 = vsel %vm224, %v1346, %v1580
    %v1585 = vpack.c.bf16 %v1584, %v1583
    %s1586 = scalar_lea.vmem %s7, 16
    %v1587 = vld [vmem:[%s1586] sm:$0xf]
    %v1588 = vld [vmem:[%s1586 + $0x4] sm:$0xf]
    %v1589 = vld [vmem:[%s1586 + $0x8] sm:$0xf]
    %v1590 = vld [vmem:[%s1586 + $0xc] sm:$0xf]
    %s1591 = scalar_lea.vmem %s8, 1
    %v1592 = vld [vmem:[%s1591] sm:$0x1]
    %v1594 = vlaneseq
    %v1595 = vshrl.u32 %v1594, 7
    %v1596 = vsub.s32 0, %v1595
    %v1597 = vrot.slane %v1592, %v1596
    %v1603 = vunpack.c.l.b16 %v1587
    %v1604 = vunpack.c.l.b16 %v1588
    %v1605 = vunpack.c.l.b16 %v1589
    %v1606 = vunpack.c.l.b16 %v1590
    %v1607 = vpack.c.b16 %v1604, %v1603
    %v1608 = vpack.c.b16 %v1606, %v1605
    %v1612 = vsel %vm107, %v1585, 0
    %1614 = vmatprep.subr.bf16.mxu0 0
    %1615 = vmatpush1.bf16.msra.mxu0 %v1607
    %1616 = vmatprep.subr.bf16.mxu0 0
    %1617 = vmatpush1.bf16.msra.mxu0 %v1608
    %1618 = vmatprep.subr.bf16.mxu0 0
    %1619 = vmatpush1.bf16.msra.mxu0 0
    %1620 = vmatprep.subr.bf16.mxu0 0
    %1621 = vmatpush1.bf16.msra.mxu0 0
    %1622 = vmatprep.subr.bf16.mxu0 0
    %1623 = vmatpush1.bf16.msra.mxu0 0
    %1624 = vmatprep.subr.bf16.mxu0 0
    %1625 = vmatpush1.bf16.msra.mxu0 0
    %1626 = vmatprep.subr.bf16.mxu0 0
    %1627 = vmatpush1.bf16.msra.mxu0 0
    %1628 = vmatprep.subr.bf16.mxu0 0
    %1629 = vmatpush1.bf16.msra.mxu0 0
    %1630 = vmatprep.subr.bf16.mxu0 0
    %1631 = vmatpush1.bf16.msra.mxu0 0
    %1632 = vmatprep.subr.bf16.mxu0 0
    %1633 = vmatpush1.bf16.msra.mxu0 0
    %1634 = vmatprep.subr.bf16.mxu0 0
    %1635 = vmatpush1.bf16.msra.mxu0 0
    %1636 = vmatprep.subr.bf16.mxu0 0
    %1637 = vmatpush1.bf16.msra.mxu0 0
    %1638 = vmatprep.subr.bf16.mxu0 0
    %1639 = vmatpush1.bf16.msra.mxu0 0
    %1640 = vmatprep.subr.bf16.mxu0 0
    %1641 = vmatpush1.bf16.msra.mxu0 0
    %1642 = vmatprep.subr.bf16.mxu0 0
    %1643 = vmatpush1.bf16.msra.mxu0 0
    %1644 = vmatprep.subr.bf16.mxu0 0
    %1645 = vmatpush1.bf16.msra.mxu0 0
    %1646 = vmatprep.mubr.bf16.mxu0 0
    %1647 = vmatmul.mubr.bf16.gmra.mrb[0].mxu0 %v1612
    %v1648 = vpop.f32.mrb[0].mxu0
    %v1649 = vadd.f32 %v1597, %v1648
    %v1650 = vpop.f32.mrb[0].mxu0
    %v1651 = vpop.f32.mrb[0].mxu0
    %v1652 = vadd.f32 %v1597, %v1651
    %v1653 = vpop.f32.mrb[0].mxu0
    %1654 = vdwg.mxu0
    %v1655 = vadd.f32 %v1649, %v1055
    %v1656 = vadd.f32 %v1652, %v1056
    %s1657 = scalar_lea.vmem %s9, 1
    %v1658 = vld [vmem:[%s1657] sm:$0x1]
    %s1659 = scalar_lea.vmem %s10, 1
    %v1660 = vld [vmem:[%s1659] sm:$0x1]
    %v1661 = vsel %vm107, %v1655, 0.0
    %1662 = vadd.xlane.f32.xlu0 %v1661
    %v1663 = vpop.xlane.xlu0 %1662
    %v1664 = vsel %vm107, %v1656, 0.0
    %1665 = vadd.xlane.f32.xlu0 %v1664
    %v1666 = vpop.xlane.xlu0 %1665
    %v1667 = vmul.f32 %v1663, %v114
    %v1668 = vmul.f32 %v1666, %v114
    %v1669 = vsub.f32 %v1655, %v1667
    %v1670 = vsub.f32 %v1656, %v1668
    %v1671 = vmul.f32 %v1669, %v1669
    %v1672 = vmul.f32 %v1670, %v1670
    %v1673 = vsel %vm107, %v1671, 0.0
    %1674 = vadd.xlane.f32.xlu0 %v1673
    %v1675 = vpop.xlane.xlu0 %1674
    %v1676 = vsel %vm107, %v1672, 0.0
    %1677 = vadd.xlane.f32.xlu0 %v1676
    %v1678 = vpop.xlane.xlu0 %1677
    %v1679 = vmul.f32 %v1675, %v114
    %v1680 = vmul.f32 %v1678, %v114
    %v1681 = vadd.f32 %v1679, 1e-12
    %v1682 = vadd.f32 %v1680, 1e-12
    %v1683 = vrsqrt.pop %v1681
    %v1684 = vrsqrt.pop %v1682
    %v1685 = vmul.f32 %v1669, %v1683
    %v1686 = vmul.f32 %v1670, %v1684
    %v1688 = vlaneseq
    %v1689 = vshrl.u32 %v1688, 7
    %v1690 = vsub.s32 0, %v1689
    %v1691 = vrot.slane %v1658, %v1690
    %v1693 = vmul.f32 %v1685, %v1691
    %v1694 = vmul.f32 %v1686, %v1691
    %v1696 = vlaneseq
    %v1697 = vshrl.u32 %v1696, 7
    %v1698 = vsub.s32 0, %v1697
    %v1699 = vrot.slane %v1660, %v1698
    %v1701 = vadd.f32 %v1693, %v1699
    %v1702 = vadd.f32 %v1694, %v1699
    %s1703 = scalar_lea.vmem %s11, 16
    %v1704 = vld [vmem:[%s1703] sm:$0xf]
    %v1705 = vld [vmem:[%s1703 + $0x4] sm:$0xf]
    %v1706 = vld [vmem:[%s1703 + $0x8] sm:$0xf]
    %v1707 = vld [vmem:[%s1703 + $0xc] sm:$0xf]
    %s1708 = scalar_lea.vmem %s12, 1
    %v1709 = vld [vmem:[%s1708] sm:$0x1]
    %v1710 = vpack.c.bf16 %v1702, %v1701
    %v1712 = vlaneseq
    %v1713 = vshrl.u32 %v1712, 7
    %v1714 = vsub.s32 0, %v1713
    %v1715 = vrot.slane %v1709, %v1714
    %v1721 = vunpack.c.l.b16 %v1704
    %v1722 = vunpack.c.l.b16 %v1705
    %v1723 = vunpack.c.l.b16 %v1706
    %v1724 = vunpack.c.l.b16 %v1707
    %v1725 = vpack.c.b16 %v1722, %v1721
    %v1726 = vpack.c.b16 %v1724, %v1723
    %v1730 = vsel %vm107, %v1710, 0
    %1732 = vmatprep.subr.bf16.mxu0 0
    %1733 = vmatpush1.bf16.msra.mxu0 %v1725
    %1734 = vmatprep.subr.bf16.mxu0 0
    %1735 = vmatpush1.bf16.msra.mxu0 %v1726
    %1736 = vmatprep.subr.bf16.mxu0 0
    %1737 = vmatpush1.bf16.msra.mxu0 0
    %1738 = vmatprep.subr.bf16.mxu0 0
    %1739 = vmatpush1.bf16.msra.mxu0 0
    %1740 = vmatprep.subr.bf16.mxu0 0
    %1741 = vmatpush1.bf16.msra.mxu0 0
    %1742 = vmatprep.subr.bf16.mxu0 0
    %1743 = vmatpush1.bf16.msra.mxu0 0
    %1744 = vmatprep.subr.bf16.mxu0 0
    %1745 = vmatpush1.bf16.msra.mxu0 0
    %1746 = vmatprep.subr.bf16.mxu0 0
    %1747 = vmatpush1.bf16.msra.mxu0 0
    %1748 = vmatprep.subr.bf16.mxu0 0
    %1749 = vmatpush1.bf16.msra.mxu0 0
    %1750 = vmatprep.subr.bf16.mxu0 0
    %1751 = vmatpush1.bf16.msra.mxu0 0
    %1752 = vmatprep.subr.bf16.mxu0 0
    %1753 = vmatpush1.bf16.msra.mxu0 0
    %1754 = vmatprep.subr.bf16.mxu0 0
    %1755 = vmatpush1.bf16.msra.mxu0 0
    %1756 = vmatprep.subr.bf16.mxu0 0
    %1757 = vmatpush1.bf16.msra.mxu0 0
    %1758 = vmatprep.subr.bf16.mxu0 0
    %1759 = vmatpush1.bf16.msra.mxu0 0
    %1760 = vmatprep.subr.bf16.mxu0 0
    %1761 = vmatpush1.bf16.msra.mxu0 0
    %1762 = vmatprep.subr.bf16.mxu0 0
    %1763 = vmatpush1.bf16.msra.mxu0 0
    %1764 = vmatprep.mubr.bf16.mxu0 0
    %1765 = vmatmul.mubr.bf16.gmra.mrb[0].mxu0 %v1730
    %v1766 = vpop.f32.mrb[0].mxu0
    %v1767 = vadd.f32 %v1715, %v1766
    %v1768 = vpop.f32.mrb[0].mxu0
    %v1769 = vpop.f32.mrb[0].mxu0
    %v1770 = vadd.f32 %v1715, %v1769
    %v1771 = vpop.f32.mrb[0].mxu0
    %1772 = vdwg.mxu0
    %v1773 = vmul.f32 %v1767, 0.5
    %v1774 = vmul.f32 %v1770, 0.5
    %v1775 = vmul.f32 %v1767, 0.70710677
    %v1776 = vmul.f32 %v1770, 0.70710677
    %vm1777 = vcmp.ge.f32.partialorder %v1775, 0.0
    %vm1778 = vcmp.ge.f32.partialorder %v1776, 0.0
    %v1779 = vsel %vm1777, 1.0, -1.0
    %v1780 = vsel %vm1778, 1.0, -1.0
    %v1781 = vand.u32 2147483647, %v1775
    %v1782 = vand.u32 2147483647, %v1776
    %v1783 = vmul.f32 %v1781, 0.3275911
    %v1784 = vmul.f32 %v1782, 0.3275911
    %v1785 = vadd.f32 %v1783, 1.0
    %v1786 = vadd.f32 %v1784, 1.0
    %v1787 = vrcp.pop %v1785
    %v1788 = vmul.f32 1.0, %v1787
    %v1789 = vrcp.pop %v1786
    %v1790 = vmul.f32 1.0, %v1789
    %v1791 = vmul.f32 %v1788, 1.0614054
    %v1792 = vmul.f32 %v1790, 1.0614054
    %v1793 = vadd.f32 %v1791, -1.4531521
    %v1794 = vadd.f32 %v1792, -1.4531521
    %v1795 = vmul.f32 %v1793, %v1788
    %v1796 = vmul.f32 %v1794, %v1790
    %v1797 = vadd.f32 %v1795, 1.4214138
    %v1798 = vadd.f32 %v1796, 1.4214138
    %v1799 = vmul.f32 %v1797, %v1788
    %v1800 = vmul.f32 %v1798, %v1790
    %v1801 = vadd.f32 %v1799, -0.28449672
    %v1802 = vadd.f32 %v1800, -0.28449672
    %v1803 = vmul.f32 %v1801, %v1788
    %v1804 = vmul.f32 %v1802, %v1790
    %v1805 = vadd.f32 %v1803, 0.2548296
    %v1806 = vadd.f32 %v1804, 0.2548296
    %v1807 = vmul.f32 %v1805, %v1788
    %v1808 = vmul.f32 %v1806, %v1790
    %v1809 = vsub.f32 0.0, %v1781
    %v1810 = vsub.f32 0.0, %v1782
    %v1811 = vmul.f32 %v1809, %v1781
    %v1812 = vmul.f32 %v1810, %v1782
    %v1813 = vmul.f32 %v1811, 1.442695
    %v1814 = vpow.pop %v1813
    %v1815 = vmul.f32 %v1812, 1.442695
    %v1816 = vpow.pop %v1815
    %v1817 = vmul.f32 %v1807, %v1814
    %v1818 = vmul.f32 %v1808, %v1816
    %v1819 = vsub.f32 1.0, %v1817
    %v1820 = vsub.f32 1.0, %v1818
    %v1821 = vmul.f32 %v1779, %v1819
    %v1822 = vmul.f32 %v1780, %v1820
    %v1823 = vadd.f32 %v1821, 1.0
    %v1824 = vadd.f32 %v1822, 1.0
    %v1825 = vmul.f32 %v1773, %v1823
    %v1826 = vmul.f32 %v1774, %v1824
    %s1827 = scalar_lea.vmem %s13, 32
    %v1828 = vld [vmem:[%s1827] sm:$0xf]
    %v1829 = vld [vmem:[%s1827 + $0x4] sm:$0xf]
    %v1830 = vld [vmem:[%s1827 + $0x8] sm:$0xf]
    %v1831 = vld [vmem:[%s1827 + $0xc] sm:$0xf]
    %v1832 = vld [vmem:[%s1827 + $0x10] sm:$0xf]
    %v1833 = vld [vmem:[%s1827 + $0x14] sm:$0xf]
    %v1834 = vld [vmem:[%s1827 + $0x18] sm:$0xf]
    %v1835 = vld [vmem:[%s1827 + $0x1c] sm:$0xf]
    %s1836 = scalar_lea.vmem %s14, 1
    %v1837 = vld [vmem:[%s1836] sm:$0x1]
    %v1838 = vpack.c.bf16 %v1826, %v1825
    %v1840 = vlaneseq
    %v1841 = vshrl.u32 %v1840, 7
    %v1842 = vsub.s32 0, %v1841
    %v1843 = vrot.slane %v1837, %v1842
    %v1853 = vunpack.c.l.b16 %v1828
    %v1854 = vunpack.c.l.b16 %v1829
    %v1855 = vunpack.c.l.b16 %v1830
    %v1856 = vunpack.c.l.b16 %v1831
    %v1857 = vunpack.c.l.b16 %v1832
    %v1858 = vunpack.c.l.b16 %v1833
    %v1859 = vunpack.c.l.b16 %v1834
    %v1860 = vunpack.c.l.b16 %v1835
    %v1861 = vpack.c.b16 %v1854, %v1853
    %v1862 = vpack.c.b16 %v1856, %v1855
    %v1863 = vpack.c.b16 %v1858, %v1857
    %v1864 = vpack.c.b16 %v1860, %v1859
    %v1870 = vsel %vm966, %v1838, 0
    %1872 = vmatprep.subr.bf16.mxu0 0
    %1873 = vmatpush1.bf16.msra.mxu0 %v1861
    %1874 = vmatprep.subr.bf16.mxu0 0
    %1875 = vmatpush1.bf16.msra.mxu0 %v1862
    %1876 = vmatprep.subr.bf16.mxu0 0
    %1877 = vmatpush1.bf16.msra.mxu0 %v1863
    %1878 = vmatprep.subr.bf16.mxu0 0
    %1879 = vmatpush1.bf16.msra.mxu0 %v1864
    %1880 = vmatprep.subr.bf16.mxu0 0
    %1881 = vmatpush1.bf16.msra.mxu0 0
    %1882 = vmatprep.subr.bf16.mxu0 0
    %1883 = vmatpush1.bf16.msra.mxu0 0
    %1884 = vmatprep.subr.bf16.mxu0 0
    %1885 = vmatpush1.bf16.msra.mxu0 0
    %1886 = vmatprep.subr.bf16.mxu0 0
    %1887 = vmatpush1.bf16.msra.mxu0 0
    %1888 = vmatprep.subr.bf16.mxu0 0
    %1889 = vmatpush1.bf16.msra.mxu0 0
    %1890 = vmatprep.subr.bf16.mxu0 0
    %1891 = vmatpush1.bf16.msra.mxu0 0
    %1892 = vmatprep.subr.bf16.mxu0 0
    %1893 = vmatpush1.bf16.msra.mxu0 0
    %1894 = vmatprep.subr.bf16.mxu0 0
    %1895 = vmatpush1.bf16.msra.mxu0 0
    %1896 = vmatprep.subr.bf16.mxu0 0
    %1897 = vmatpush1.bf16.msra.mxu0 0
    %1898 = vmatprep.subr.bf16.mxu0 0
    %1899 = vmatpush1.bf16.msra.mxu0 0
    %1900 = vmatprep.subr.bf16.mxu0 0
    %1901 = vmatpush1.bf16.msra.mxu0 0
    %1902 = vmatprep.subr.bf16.mxu0 0
    %1903 = vmatpush1.bf16.msra.mxu0 0
    %1904 = vmatprep.mubr.bf16.mxu0 0
    %1905 = vmatmul.mubr.bf16.gmra.mrb[0].mxu0 %v1870
    %v1906 = vpop.f32.mrb[0].mxu0
    %v1907 = vadd.f32 %v1843, %v1906
    %v1908 = vpop.f32.mrb[0].mxu0
    %v1909 = vpop.f32.mrb[0].mxu0
    %v1910 = vadd.f32 %v1843, %v1909
    %v1911 = vpop.f32.mrb[0].mxu0
    %1912 = vdwg.mxu0
    %v1913 = vadd.f32 %v1907, %v1701
    %v1914 = vadd.f32 %v1910, %v1702
    %s1915 = scalar_lea.vmem %s15, 1
    %v1916 = vld [vmem:[%s1915] sm:$0x1]
    %s1917 = scalar_lea.vmem %s16, 1
    %v1918 = vld [vmem:[%s1917] sm:$0x1]
    %v1919 = vsel %vm107, %v1913, 0.0
    %1920 = vadd.xlane.f32.xlu0 %v1919
    %v1921 = vpop.xlane.xlu0 %1920
    %v1922 = vsel %vm107, %v1914, 0.0
    %1923 = vadd.xlane.f32.xlu0 %v1922
    %v1924 = vpop.xlane.xlu0 %1923
    %v1925 = vmul.f32 %v1921, %v114
    %v1926 = vmul.f32 %v1924, %v114
    %v1927 = vsub.f32 %v1913, %v1925
    %v1928 = vsub.f32 %v1914, %v1926
    %v1929 = vmul.f32 %v1927, %v1927
    %v1930 = vmul.f32 %v1928, %v1928
    %v1931 = vsel %vm107, %v1929, 0.0
    %1932 = vadd.xlane.f32.xlu0 %v1931
    %v1933 = vpop.xlane.xlu0 %1932
    %v1934 = vsel %vm107, %v1930, 0.0
    %1935 = vadd.xlane.f32.xlu0 %v1934
    %v1936 = vpop.xlane.xlu0 %1935
    %v1937 = vmul.f32 %v1933, %v114
    %v1938 = vmul.f32 %v1936, %v114
    %v1939 = vadd.f32 %v1937, 1e-12
    %v1940 = vadd.f32 %v1938, 1e-12
    %v1941 = vrsqrt.pop %v1939
    %v1942 = vrsqrt.pop %v1940
    %v1943 = vmul.f32 %v1927, %v1941
    %v1944 = vmul.f32 %v1928, %v1942
    %v1946 = vlaneseq
    %v1947 = vshrl.u32 %v1946, 7
    %v1948 = vsub.s32 0, %v1947
    %v1949 = vrot.slane %v1916, %v1948
    %v1951 = vmul.f32 %v1943, %v1949
    %v1952 = vmul.f32 %v1944, %v1949
    %v1954 = vlaneseq
    %v1955 = vshrl.u32 %v1954, 7
    %v1956 = vsub.s32 0, %v1955
    %v1957 = vrot.slane %v1918, %v1956
    %v1959 = vadd.f32 %v1951, %v1957
    %v1960 = vadd.f32 %v1952, %v1957
    %v1961 = vld [vmem:[%s17] sm:$0xf]
    %v1962 = vld [vmem:[%s17 + $0x4] sm:$0xf]
    %v1963 = vld [vmem:[%s17 + $0x8] sm:$0xf]
    %v1964 = vld [vmem:[%s17 + $0xc] sm:$0xf]
    %v1965 = vld [vmem:[%s18] sm:$0x1]
    %v1966 = vpack.c.bf16 %v1960, %v1959
    %v1968 = vlaneseq
    %v1969 = vshrl.u32 %v1968, 7
    %v1970 = vsub.s32 0, %v1969
    %v1971 = vrot.slane %v1965, %v1970
    %v1977 = vunpack.c.l.b16 %v1961
    %v1978 = vunpack.c.l.b16 %v1962
    %v1979 = vunpack.c.l.b16 %v1963
    %v1980 = vunpack.c.l.b16 %v1964
    %v1981 = vpack.c.b16 %v1978, %v1977
    %v1982 = vpack.c.b16 %v1980, %v1979
    %v1986 = vsel %vm107, %v1966, 0
    %1988 = vmatprep.subr.bf16.mxu0 0
    %1989 = vmatpush1.bf16.msra.mxu0 %v1981
    %1990 = vmatprep.subr.bf16.mxu0 0
    %1991 = vmatpush1.bf16.msra.mxu0 %v1982
    %1992 = vmatprep.subr.bf16.mxu0 0
    %1993 = vmatpush1.bf16.msra.mxu0 0
    %1994 = vmatprep.subr.bf16.mxu0 0
    %1995 = vmatpush1.bf16.msra.mxu0 0
    %1996 = vmatprep.subr.bf16.mxu0 0
    %1997 = vmatpush1.bf16.msra.mxu0 0
    %1998 = vmatprep.subr.bf16.mxu0 0
    %1999 = vmatpush1.bf16.msra.mxu0 0
    %2000 = vmatprep.subr.bf16.mxu0 0
    %2001 = vmatpush1.bf16.msra.mxu0 0
    %2002 = vmatprep.subr.bf16.mxu0 0
    %2003 = vmatpush1.bf16.msra.mxu0 0
    %2004 = vmatprep.subr.bf16.mxu0 0
    %2005 = vmatpush1.bf16.msra.mxu0 0
    %2006 = vmatprep.subr.bf16.mxu0 0
    %2007 = vmatpush1.bf16.msra.mxu0 0
    %2008 = vmatprep.subr.bf16.mxu0 0
    %2009 = vmatpush1.bf16.msra.mxu0 0
    %2010 = vmatprep.subr.bf16.mxu0 0
    %2011 = vmatpush1.bf16.msra.mxu0 0
    %2012 = vmatprep.subr.bf16.mxu0 0
    %2013 = vmatpush1.bf16.msra.mxu0 0
    %2014 = vmatprep.subr.bf16.mxu0 0
    %2015 = vmatpush1.bf16.msra.mxu0 0
    %2016 = vmatprep.subr.bf16.mxu0 0
    %2017 = vmatpush1.bf16.msra.mxu0 0
    %2018 = vmatprep.subr.bf16.mxu0 0
    %2019 = vmatpush1.bf16.msra.mxu0 0
    %2020 = vmatprep.mubr.bf16.mxu0 0
    %2021 = vmatmul.mubr.bf16.gmra.mrb[0].mxu0 %v1986
    %v2022 = vpop.f32.mrb[0].mxu0
    %v2023 = vadd.f32 %v1971, %v2022
    %v2024 = vpop.f32.mrb[0].mxu0
    %v2025 = vpop.f32.mrb[0].mxu0
    %v2026 = vadd.f32 %v1971, %v2025
    %v2027 = vpop.f32.mrb[0].mxu0
    %2028 = vdwg.mxu0
    %vm2029 = vcmask 154624
    %2030 = vst.msk [vmem:[#allocation2] sm:$0xff] %vm2029, %v2023
    %2031 = vst.msk [vmem:[#allocation2 + $0x8] sm:$0xff] %vm2029, %v2026
    %v2032 = vld [vmem:[%s2] sm:$0x3]
    %v2033 = vld [vmem:[%s19] sm:$0x1]
    %v2034 = vld [vmem:[%s20] sm:$0x1]
    %v2035 = vld [vmem:[%s21] sm:$0xff]
    %v2036 = vld [vmem:[%s21 + $0x8] sm:$0xff]
    %v2037 = vld [vmem:[%s21 + $0x10] sm:$0x7]
    %v2038 = vlaneseq
    %v2039 = vand.u32 %v2038, 127
    %v2040 = vcvt.s32.f32 %v2039
    %v2041 = vlaneseq
    %v2042 = vshrl.u32 %v2041, 7
    %v2043 = vadd.s32 %v2042, 8
    %v2044 = vadd.s32 %v2042, 16
    %v2045 = vcvt.s32.f32 %v2042
    %v2046 = vcvt.s32.f32 %v2043
    %v2047 = vcvt.s32.f32 %v2044
    %v2048 = vlaneseq
    %v2049 = vshrl.u32 %v2048, 7
    %v2050 = vsub.s32 0, %v2049
    %v2051 = vrot.slane %v2032, %v2050
    %2053 = vbcast.lane.b32.xlu0 %v2051, 256
    %v2054 = vpop.permute.xlu0 %2053
    %v2055 = vlaneseq
    %v2056 = vshrl.u32 %v2055, 7
    %v2057 = vsub.s32 1, %v2056
    %v2058 = vrot.slane %v2032, %v2057
    %2060 = vbcast.lane.b32.xlu0 %v2058, 256
    %v2061 = vpop.permute.xlu0 %2060
    %vm2062 = vcmp.eq.s32.totalorder %v2039, %v2054
    %vm2063 = vcmp.eq.s32.totalorder %v2039, %v2061
    %v2064 = vsel %vm2062, 1, 0
    %v2065 = vsel %vm2063, 1, 0
    %v2066 = vcvt.s32.f32 %v2064
    %v2067 = vcvt.s32.f32 %v2065
    %v2069 = vlaneseq
    %v2070 = vshrl.u32 %v2069, 7
    %v2071 = vsub.s32 0, %v2070
    %v2072 = vrot.slane %v2033, %v2071
    %v2076 = vrot.slane %v2026, 7
    %vm2077 = vcmask 1041409
    %v2078 = vsel %vm2077, %v2076, %v2023
    %v2080 = vadd.f32 %v2072, %v2078
    %v2083 = vrot.slane %v2067, 7
    %v2084 = vsel %vm2077, %v2083, %v2066
    %v2086 = vmul.f32 %v2080, %v2084
    %vm2087 = vcmask 148480
    %v2088 = vsel %vm2087, %v2086, 0.0
    %2089 = vadd.xlane.f32.xlu0 %v2088
    %v2090 = vpop.xlane.xlu0 %2089
    %vm2091 = vcmp.gt.f32.partialorder %v77, 0.0
    %v2092 = vsel %vm2029, %v2084, 0
    %vm2094 = vcmask 1042432
    %v2096 = vsel %vm2094, %v2037, 0
    %2098 = vmatprep.subr.mxu0 0.0
    %2099 = vmatpush1.msra.mxu0 %v2035
    %2100 = vmatprep.subr.mxu0 0.0
    %2101 = vmatpush1.msra.mxu0 %v2036
    %2102 = vmatprep.subr.mxu0 0.0
    %2103 = vmatpush1.msra.mxu0 %v2096
    %2104 = vmatprep.subr.mxu0 0.0
    %2105 = vmatpush1.msra.mxu0 0.0
    %2106 = vmatprep.subr.mxu0 0.0
    %2107 = vmatpush1.msra.mxu0 0.0
    %2108 = vmatprep.subr.mxu0 0.0
    %2109 = vmatpush1.msra.mxu0 0.0
    %2110 = vmatprep.subr.mxu0 0.0
    %2111 = vmatpush1.msra.mxu0 0.0
    %2112 = vmatprep.subr.mxu0 0.0
    %2113 = vmatpush1.msra.mxu0 0.0
    %2114 = vmatprep.subr.mxu0 0.0
    %2115 = vmatpush1.msra.mxu0 0.0
    %2116 = vmatprep.subr.mxu0 0.0
    %2117 = vmatpush1.msra.mxu0 0.0
    %2118 = vmatprep.subr.mxu0 0.0
    %2119 = vmatpush1.msra.mxu0 0.0
    %2120 = vmatprep.subr.mxu0 0.0
    %2121 = vmatpush1.msra.mxu0 0.0
    %2122 = vmatprep.subr.mxu0 0.0
    %2123 = vmatpush1.msra.mxu0 0.0
    %2124 = vmatprep.subr.mxu0 0.0
    %2125 = vmatpush1.msra.mxu0 0.0
    %2126 = vmatprep.subr.mxu0 0.0
    %2127 = vmatpush1.msra.mxu0 0.0
    %2128 = vmatprep.subr.mxu0 0.0
    %2129 = vmatpush1.msra.mxu0 0.0
    %2130 = vmatprep.subr.mxu0 0.0
    %2131 = vmatpush1.msra.mxu0 0.0
    %2132 = vmatprep.subr.mxu0 0.0
    %2133 = vmatpush1.msra.mxu0 0.0
    %2134 = vmatprep.subr.mxu0 0.0
    %2135 = vmatpush1.msra.mxu0 0.0
    %2136 = vmatprep.subr.mxu0 0.0
    %2137 = vmatpush1.msra.mxu0 0.0
    %2138 = vmatprep.subr.mxu0 0.0
    %2139 = vmatpush1.msra.mxu0 0.0
    %2140 = vmatprep.subr.mxu0 0.0
    %2141 = vmatpush1.msra.mxu0 0.0
    %2142 = vmatprep.subr.mxu0 0.0
    %2143 = vmatpush1.msra.mxu0 0.0
    %2144 = vmatprep.subr.mxu0 0.0
    %2145 = vmatpush1.msra.mxu0 0.0
    %2146 = vmatprep.subr.mxu0 0.0
    %2147 = vmatpush1.msra.mxu0 0.0
    %2148 = vmatprep.subr.mxu0 0.0
    %2149 = vmatpush1.msra.mxu0 0.0
    %2150 = vmatprep.subr.mxu0 0.0
    %2151 = vmatpush1.msra.mxu0 0.0
    %2152 = vmatprep.subr.mxu0 0.0
    %2153 = vmatpush1.msra.mxu0 0.0
    %2154 = vmatprep.subr.mxu0 0.0
    %2155 = vmatpush1.msra.mxu0 0.0
    %2156 = vmatprep.subr.mxu0 0.0
    %2157 = vmatpush1.msra.mxu0 0.0
    %2158 = vmatprep.subr.mxu0 0.0
    %2159 = vmatpush1.msra.mxu0 0.0
    %2160 = vmatprep.subr.mxu0 0.0
    %2161 = vmatpush1.msra.mxu0 0.0
    %2162 = vmatprep.mubr.f32.mxu0 0.0
    %2163 = vmatmul.mubr.f32.gmra.mrb[0].mxu0 %v2092
    %v2164 = vpop.f32.mrb[0].mxu0
    %v2165 = vadd.f32 0.0, %v2164
    %v2166 = vpop.f32.mrb[0].mxu0
    %2167 = vdwg.mxu0
    %v2168 = vrot.slane %v2066, 1
    %v2169 = vsel %vm2077, %v2067, %v2168
    %v2171 = vmul.f32 %v2165, %v2169
    %v2172 = vsel %vm2087, %v2171, 0.0
    %2173 = vadd.xlane.f32.xlu0 %v2172
    %v2174 = vpop.xlane.xlu0 %2173
    %v2175 = vmul.f32 %v2023, %v2066
    %v2176 = vmul.f32 %v2026, %v2067
    %v2179 = vrot.slane %v2176, 7
    %vm2180 = vcmask 1042434
    %v2181 = vsel %vm2180, %v2179, %v2175
    %vm2183 = vcmask 149505
    %v2184 = vsel %vm2183, %v2181, 0.0
    %2185 = vadd.xlane.f32.xlu0 %v2184
    %v2186 = vpop.xlane.xlu0 %2185
    %v2188 = vrot.slane %v2186, 1
    %v2190 = vadd.f32 %v2174, %v2188
    %2192 = vrot.lane.b32.xlu0 %v77, 127
    %v2193 = vpop.permute.xlu0 %2192
    %v2195 = vmul.f32 %v2190, %v2193
    %v2196 = vadd.f32 %v2090, %v2195
    %v2197 = vsel %vm2091, 1, 0
    %2198 = vset.pattern.permute.xlu0 1
    %2199 = vperm.xlu0 %2198, %v2197
    %v2200 = vpop.permute.xlu0 %2199
    %vm2201 = vcmp.eq.s32.totalorder %v2200, 1
    %v2202 = vsel %vm2201, %v2169, %v2084
    %v2203 = vlaneseq
    %v2204 = vshrl.u32 %v2203, 7
    %v2205 = vsub.s32 1, %v2204
    %v2206 = vrot.slane %v2023, %v2205
    %v2207 = vlaneseq
    %v2208 = vshrl.u32 %v2207, 7
    %v2209 = vsub.s32 1, %v2208
    %v2210 = vrot.slane %v2026, %v2209
    %v2211 = vadd.f32 %v2035, %v2206
    %v2212 = vadd.f32 %v2036, %v2206
    %v2213 = vadd.f32 %v2037, %v2206
    %v2214 = vadd.f32 %v2035, %v2210
    %v2215 = vadd.f32 %v2036, %v2210
    %v2216 = vadd.f32 %v2037, %v2210
    %v2217 = vlaneseq
    %v2218 = vshrl.u32 %v2217, 7
    %v2219 = vsub.s32 0, %v2218
    %v2220 = vrot.slane %v2080, %v2219
    %2222 = vbcast.lane.b32.xlu0 %v2220, 256
    %v2223 = vpop.permute.xlu0 %2222
    %s2225 = sor.u32 256, 8
    %2226 = vbcast.lane.b32.xlu0 %v2220, %s2225
    %v2227 = vpop.permute.xlu0 %2226
    %s2229 = sor.u32 256, 16
    %2230 = vbcast.lane.b32.xlu0 %v2220, %s2229
    %v2231 = vpop.permute.xlu0 %2230
    %v2232 = vlaneseq
    %v2233 = vshrl.u32 %v2232, 7
    %v2234 = vsub.s32 1, %v2233
    %v2235 = vrot.slane %v2080, %v2234
    %2237 = vbcast.lane.b32.xlu0 %v2235, 256
    %v2238 = vpop.permute.xlu0 %2237
    %s2240 = sor.u32 256, 8
    %2241 = vbcast.lane.b32.xlu0 %v2235, %s2240
    %v2242 = vpop.permute.xlu0 %2241
    %s2244 = sor.u32 256, 16
    %2245 = vbcast.lane.b32.xlu0 %v2235, %s2244
    %v2246 = vpop.permute.xlu0 %2245
    %v2247 = vadd.f32 %v2223, %v2211
    %v2248 = vadd.f32 %v2227, %v2212
    %v2249 = vadd.f32 %v2231, %v2213
    %v2250 = vadd.f32 %v2238, %v2214
    %v2251 = vadd.f32 %v2242, %v2215
    %v2252 = vadd.f32 %v2246, %v2216
    %v2253 = vsel %vm2029, %v2247, -inf
    %v2254 = vsel %vm2029, %v2248, -inf
    %vm2255 = vcmask 149504
    %v2256 = vsel %vm2255, %v2249, -inf
    %v2257 = vmax.f32 %v2253, %v2256
    %v2258 = vmax.f32 %v2257, %v2254
    %v2259 = vrot.slane %v2258, 4
    %v2260 = vmax.f32 %v2258, %v2259
    %v2261 = vrot.slane %v2260, 2
    %v2262 = vmax.f32 %v2260, %v2261
    %v2263 = vrot.slane %v2262, 1
    %v2264 = vmax.f32 %v2262, %v2263
    %v2265 = vsel %vm2029, %v2250, -inf
    %v2266 = vsel %vm2029, %v2251, -inf
    %v2267 = vsel %vm2255, %v2252, -inf
    %v2268 = vmax.f32 %v2265, %v2267
    %v2269 = vmax.f32 %v2268, %v2266
    %v2270 = vrot.slane %v2269, 4
    %v2271 = vmax.f32 %v2269, %v2270
    %v2272 = vrot.slane %v2271, 2
    %v2273 = vmax.f32 %v2271, %v2272
    %v2274 = vrot.slane %v2273, 1
    %v2275 = vmax.f32 %v2273, %v2274
    %v2276 = vsub.f32 %v2247, %v2264
    %v2277 = vsub.f32 %v2248, %v2264
    %v2278 = vsub.f32 %v2249, %v2264
    %v2279 = vsub.f32 %v2250, %v2275
    %v2280 = vsub.f32 %v2251, %v2275
    %v2281 = vsub.f32 %v2252, %v2275
    %v2282 = vmul.f32 %v2276, 1.442695
    %v2283 = vpow.pop %v2282
    %v2284 = vmul.f32 %v2277, 1.442695
    %v2285 = vpow.pop %v2284
    %v2286 = vmul.f32 %v2278, 1.442695
    %v2287 = vpow.pop %v2286
    %v2288 = vmul.f32 %v2279, 1.442695
    %v2289 = vpow.pop %v2288
    %v2290 = vmul.f32 %v2280, 1.442695
    %v2291 = vpow.pop %v2290
    %v2292 = vmul.f32 %v2281, 1.442695
    %v2293 = vpow.pop %v2292
    %v2294 = vsel %vm2029, %v2283, 0.0
    %v2295 = vsel %vm2029, %v2285, 0.0
    %v2296 = vadd.f32 %v2294, %v2295
    %v2297 = vsel %vm2255, %v2287, 0.0
    %v2298 = vadd.f32 %v2296, %v2297
    %v2299 = vrot.slane %v2298, 4
    %v2300 = vadd.f32 %v2298, %v2299
    %v2301 = vrot.slane %v2300, 2
    %v2302 = vadd.f32 %v2300, %v2301
    %v2303 = vrot.slane %v2302, 1
    %v2304 = vadd.f32 %v2302, %v2303
    %v2305 = vsel %vm2029, %v2289, 0.0
    %v2306 = vsel %vm2029, %v2291, 0.0
    %v2307 = vadd.f32 %v2305, %v2306
    %v2308 = vsel %vm2255, %v2293, 0.0
    %v2309 = vadd.f32 %v2307, %v2308
    %v2310 = vrot.slane %v2309, 4
    %v2311 = vadd.f32 %v2309, %v2310
    %v2312 = vrot.slane %v2311, 2
    %v2313 = vadd.f32 %v2311, %v2312
    %v2314 = vrot.slane %v2313, 1
    %v2315 = vadd.f32 %v2313, %v2314
    %v2316 = vlog2.pop %v2304
    %v2317 = vmul.f32 %v2316, 0.6931472
    %v2318 = vlog2.pop %v2315
    %v2319 = vmul.f32 %v2318, 0.6931472
    %v2320 = vadd.f32 %v2317, %v2264
    %v2321 = vadd.f32 %v2319, %v2275
    %v2324 = vsel %vm2077, %v2321, %v2320
    %v2326 = vsel %vm2201, %v2324, %v2080
    %vm2327 = vcmp.ge.f32.partialorder %v2247, %v2264
    %vm2328 = vcmp.ge.f32.partialorder %v2248, %v2264
    %vm2329 = vcmp.ge.f32.partialorder %v2249, %v2264
    %vm2330 = vcmp.ge.f32.partialorder %v2250, %v2275
    %vm2331 = vcmp.ge.f32.partialorder %v2251, %v2275
    %vm2332 = vcmp.ge.f32.partialorder %v2252, %v2275
    %v2333 = vsel %vm2327, %v2045, 19.0
    %v2334 = vsel %vm2328, %v2046, 19.0
    %v2335 = vsel %vm2329, %v2047, 19.0
    %v2336 = vsel %vm2330, %v2045, 19.0
    %v2337 = vsel %vm2331, %v2046, 19.0
    %v2338 = vsel %vm2332, %v2047, 19.0
    %v2339 = vsel %vm2029, %v2333, inf
    %v2340 = vsel %vm2029, %v2334, inf
    %v2341 = vsel %vm2255, %v2335, inf
    %v2342 = vmin.f32 %v2339, %v2341
    %v2343 = vmin.f32 %v2342, %v2340
    %v2344 = vrot.slane %v2343, 4
    %v2345 = vmin.f32 %v2343, %v2344
    %v2346 = vrot.slane %v2345, 2
    %v2347 = vmin.f32 %v2345, %v2346
    %v2348 = vrot.slane %v2347, 1
    %v2349 = vmin.f32 %v2347, %v2348
    %v2350 = vsel %vm2029, %v2336, inf
    %v2351 = vsel %vm2029, %v2337, inf
    %v2352 = vsel %vm2255, %v2338, inf
    %v2353 = vmin.f32 %v2350, %v2352
    %v2354 = vmin.f32 %v2353, %v2351
    %v2355 = vrot.slane %v2354, 4
    %v2356 = vmin.f32 %v2354, %v2355
    %v2357 = vrot.slane %v2356, 2
    %v2358 = vmin.f32 %v2356, %v2357
    %v2359 = vrot.slane %v2358, 1
    %v2360 = vmin.f32 %v2358, %v2359
    %v2363 = vsel %vm2077, %v2275, %v2264
    %v2365 = vsel %vm2201, %v2363, %v2080
    %v2368 = vsel %vm2077, %v2360, %v2349
    %v2370 = vsel %vm2201, %v2368, %v2040
    %v2371 = vsel %vm2029, %v2169, 0
    %2373 = vmatprep.subr.mxu0 0.0
    %2374 = vmatpush1.msra.mxu0 %v2035
    %2375 = vmatprep.subr.mxu0 0.0
    %2376 = vmatpush1.msra.mxu0 %v2036
    %2377 = vmatprep.subr.mxu0 0.0
    %2378 = vmatpush1.msra.mxu0 %v2096
    %2379 = vmatprep.subr.mxu0 0.0
    %2380 = vmatpush1.msra.mxu0 0.0
    %2381 = vmatprep.subr.mxu0 0.0
    %2382 = vmatpush1.msra.mxu0 0.0
    %2383 = vmatprep.subr.mxu0 0.0
    %2384 = vmatpush1.msra.mxu0 0.0
    %2385 = vmatprep.subr.mxu0 0.0
    %2386 = vmatpush1.msra.mxu0 0.0
    %2387 = vmatprep.subr.mxu0 0.0
    %2388 = vmatpush1.msra.mxu0 0.0
    %2389 = vmatprep.subr.mxu0 0.0
    %2390 = vmatpush1.msra.mxu0 0.0
    %2391 = vmatprep.subr.mxu0 0.0
    %2392 = vmatpush1.msra.mxu0 0.0
    %2393 = vmatprep.subr.mxu0 0.0
    %2394 = vmatpush1.msra.mxu0 0.0
    %2395 = vmatprep.subr.mxu0 0.0
    %2396 = vmatpush1.msra.mxu0 0.0
    %2397 = vmatprep.subr.mxu0 0.0
    %2398 = vmatpush1.msra.mxu0 0.0
    %2399 = vmatprep.subr.mxu0 0.0
    %2400 = vmatpush1.msra.mxu0 0.0
    %2401 = vmatprep.subr.mxu0 0.0
    %2402 = vmatpush1.msra.mxu0 0.0
    %2403 = vmatprep.subr.mxu0 0.0
    %2404 = vmatpush1.msra.mxu0 0.0
    %2405 = vmatprep.subr.mxu0 0.0
    %2406 = vmatpush1.msra.mxu0 0.0
    %2407 = vmatprep.subr.mxu0 0.0
    %2408 = vmatpush1.msra.mxu0 0.0
    %2409 = vmatprep.subr.mxu0 0.0
    %2410 = vmatpush1.msra.mxu0 0.0
    %2411 = vmatprep.subr.mxu0 0.0
    %2412 = vmatpush1.msra.mxu0 0.0
    %2413 = vmatprep.subr.mxu0 0.0
    %2414 = vmatpush1.msra.mxu0 0.0
    %2415 = vmatprep.subr.mxu0 0.0
    %2416 = vmatpush1.msra.mxu0 0.0
    %2417 = vmatprep.subr.mxu0 0.0
    %2418 = vmatpush1.msra.mxu0 0.0
    %2419 = vmatprep.subr.mxu0 0.0
    %2420 = vmatpush1.msra.mxu0 0.0
    %2421 = vmatprep.subr.mxu0 0.0
    %2422 = vmatpush1.msra.mxu0 0.0
    %2423 = vmatprep.subr.mxu0 0.0
    %2424 = vmatpush1.msra.mxu0 0.0
    %2425 = vmatprep.subr.mxu0 0.0
    %2426 = vmatpush1.msra.mxu0 0.0
    %2427 = vmatprep.subr.mxu0 0.0
    %2428 = vmatpush1.msra.mxu0 0.0
    %2429 = vmatprep.subr.mxu0 0.0
    %2430 = vmatpush1.msra.mxu0 0.0
    %2431 = vmatprep.subr.mxu0 0.0
    %2432 = vmatpush1.msra.mxu0 0.0
    %2433 = vmatprep.subr.mxu0 0.0
    %2434 = vmatpush1.msra.mxu0 0.0
    %2435 = vmatprep.subr.mxu0 0.0
    %2436 = vmatpush1.msra.mxu0 0.0
    %2437 = vmatprep.mubr.f32.mxu0 0.0
    %2438 = vmatmul.mubr.f32.gmra.mrb[0].mxu0 %v2371
    %v2439 = vpop.f32.mrb[0].mxu0
    %v2440 = vadd.f32 0.0, %v2439
    %v2441 = vpop.f32.mrb[0].mxu0
    %2442 = vdwg.mxu0
    %v2443 = vrot.slane %v2066, 2
    %v2444 = vrot.slane %v2067, 1
    %v2445 = vsel %vm2077, %v2444, %v2443
    %v2447 = vmul.f32 %v2440, %v2445
    %v2448 = vsel %vm2087, %v2447, 0.0
    %2449 = vadd.xlane.f32.xlu0 %v2448
    %v2450 = vpop.xlane.xlu0 %2449
    %vm2451 = vcmask 1043459
    %v2452 = vsel %vm2451, %v2179, %v2175
    %vm2454 = vcmask 150530
    %v2455 = vsel %vm2454, %v2452, 0.0
    %2456 = vadd.xlane.f32.xlu0 %v2455
    %v2457 = vpop.xlane.xlu0 %2456
    %v2459 = vrot.slane %v2457, 2
    %v2461 = vadd.f32 %v2450, %v2459
    %2462 = vrot.lane.b32.xlu0 %v77, 126
    %v2463 = vpop.permute.xlu0 %2462
    %v2465 = vmul.f32 %v2461, %v2463
    %v2466 = vadd.f32 %v2196, %v2465
    %2467 = vset.pattern.permute.xlu0 2
    %2468 = vperm.xlu0 %2467, %v2197
    %v2469 = vpop.permute.xlu0 %2468
    %vm2470 = vcmp.eq.s32.totalorder %v2469, 1
    %v2471 = vsel %vm2470, %v2445, %v2202
    %v2472 = vlaneseq
    %v2473 = vshrl.u32 %v2472, 7
    %v2474 = vsub.s32 2, %v2473
    %v2475 = vrot.slane %v2023, %v2474
    %v2476 = vlaneseq
    %v2477 = vshrl.u32 %v2476, 7
    %v2478 = vsub.s32 2, %v2477
    %v2479 = vrot.slane %v2026, %v2478
    %v2480 = vadd.f32 %v2035, %v2475
    %v2481 = vadd.f32 %v2036, %v2475
    %v2482 = vadd.f32 %v2037, %v2475
    %v2483 = vadd.f32 %v2035, %v2479
    %v2484 = vadd.f32 %v2036, %v2479
    %v2485 = vadd.f32 %v2037, %v2479
    %v2486 = vlaneseq
    %v2487 = vshrl.u32 %v2486, 7
    %v2488 = vsub.s32 0, %v2487
    %v2489 = vrot.slane %v2326, %v2488
    %2491 = vbcast.lane.b32.xlu0 %v2489, 256
    %v2492 = vpop.permute.xlu0 %2491
    %s2494 = sor.u32 256, 8
    %2495 = vbcast.lane.b32.xlu0 %v2489, %s2494
    %v2496 = vpop.permute.xlu0 %2495
    %s2498 = sor.u32 256, 16
    %2499 = vbcast.lane.b32.xlu0 %v2489, %s2498
    %v2500 = vpop.permute.xlu0 %2499
    %v2501 = vlaneseq
    %v2502 = vshrl.u32 %v2501, 7
    %v2503 = vsub.s32 1, %v2502
    %v2504 = vrot.slane %v2326, %v2503
    %2506 = vbcast.lane.b32.xlu0 %v2504, 256
    %v2507 = vpop.permute.xlu0 %2506
    %s2509 = sor.u32 256, 8
    %2510 = vbcast.lane.b32.xlu0 %v2504, %s2509
    %v2511 = vpop.permute.xlu0 %2510
    %s2513 = sor.u32 256, 16
    %2514 = vbcast.lane.b32.xlu0 %v2504, %s2513
    %v2515 = vpop.permute.xlu0 %2514
    %v2516 = vadd.f32 %v2492, %v2480
    %v2517 = vadd.f32 %v2496, %v2481
    %v2518 = vadd.f32 %v2500, %v2482
    %v2519 = vadd.f32 %v2507, %v2483
    %v2520 = vadd.f32 %v2511, %v2484
    %v2521 = vadd.f32 %v2515, %v2485
    %v2522 = vsel %vm2029, %v2516, -inf
    %v2523 = vsel %vm2029, %v2517, -inf
    %v2524 = vsel %vm2255, %v2518, -inf
    %v2525 = vmax.f32 %v2522, %v2524
    %v2526 = vmax.f32 %v2525, %v2523
    %v2527 = vrot.slane %v2526, 4
    %v2528 = vmax.f32 %v2526, %v2527
    %v2529 = vrot.slane %v2528, 2
    %v2530 = vmax.f32 %v2528, %v2529
    %v2531 = vrot.slane %v2530, 1
    %v2532 = vmax.f32 %v2530, %v2531
    %v2533 = vsel %vm2029, %v2519, -inf
    %v2534 = vsel %vm2029, %v2520, -inf
    %v2535 = vsel %vm2255, %v2521, -inf
    %v2536 = vmax.f32 %v2533, %v2535
    %v2537 = vmax.f32 %v2536, %v2534
    %v2538 = vrot.slane %v2537, 4
    %v2539 = vmax.f32 %v2537, %v2538
    %v2540 = vrot.slane %v2539, 2
    %v2541 = vmax.f32 %v2539, %v2540
    %v2542 = vrot.slane %v2541, 1
    %v2543 = vmax.f32 %v2541, %v2542
    %v2544 = vsub.f32 %v2516, %v2532
    %v2545 = vsub.f32 %v2517, %v2532
    %v2546 = vsub.f32 %v2518, %v2532
    %v2547 = vsub.f32 %v2519, %v2543
    %v2548 = vsub.f32 %v2520, %v2543
    %v2549 = vsub.f32 %v2521, %v2543
    %v2550 = vmul.f32 %v2544, 1.442695
    %v2551 = vpow.pop %v2550
    %v2552 = vmul.f32 %v2545, 1.442695
    %v2553 = vpow.pop %v2552
    %v2554 = vmul.f32 %v2546, 1.442695
    %v2555 = vpow.pop %v2554
    %v2556 = vmul.f32 %v2547, 1.442695
    %v2557 = vpow.pop %v2556
    %v2558 = vmul.f32 %v2548, 1.442695
    %v2559 = vpow.pop %v2558
    %v2560 = vmul.f32 %v2549, 1.442695
    %v2561 = vpow.pop %v2560
    %v2562 = vsel %vm2029, %v2551, 0.0
    %v2563 = vsel %vm2029, %v2553, 0.0
    %v2564 = vadd.f32 %v2562, %v2563
    %v2565 = vsel %vm2255, %v2555, 0.0
    %v2566 = vadd.f32 %v2564, %v2565
    %v2567 = vrot.slane %v2566, 4
    %v2568 = vadd.f32 %v2566, %v2567
    %v2569 = vrot.slane %v2568, 2
    %v2570 = vadd.f32 %v2568, %v2569
    %v2571 = vrot.slane %v2570, 1
    %v2572 = vadd.f32 %v2570, %v2571
    %v2573 = vsel %vm2029, %v2557, 0.0
    %v2574 = vsel %vm2029, %v2559, 0.0
    %v2575 = vadd.f32 %v2573, %v2574
    %v2576 = vsel %vm2255, %v2561, 0.0
    %v2577 = vadd.f32 %v2575, %v2576
    %v2578 = vrot.slane %v2577, 4
    %v2579 = vadd.f32 %v2577, %v2578
    %v2580 = vrot.slane %v2579, 2
    %v2581 = vadd.f32 %v2579, %v2580
    %v2582 = vrot.slane %v2581, 1
    %v2583 = vadd.f32 %v2581, %v2582
    %v2584 = vlog2.pop %v2572
    %v2585 = vmul.f32 %v2584, 0.6931472
    %v2586 = vlog2.pop %v2583
    %v2587 = vmul.f32 %v2586, 0.6931472
    %v2588 = vadd.f32 %v2585, %v2532
    %v2589 = vadd.f32 %v2587, %v2543
    %v2592 = vsel %vm2077, %v2589, %v2588
    %v2594 = vsel %vm2470, %v2592, %v2326
    %v2595 = vlaneseq
    %v2596 = vshrl.u32 %v2595, 7
    %v2597 = vsub.s32 0, %v2596
    %v2598 = vrot.slane %v2365, %v2597
    %2600 = vbcast.lane.b32.xlu0 %v2598, 256
    %v2601 = vpop.permute.xlu0 %2600
    %s2603 = sor.u32 256, 8
    %2604 = vbcast.lane.b32.xlu0 %v2598, %s2603
    %v2605 = vpop.permute.xlu0 %2604
    %s2607 = sor.u32 256, 16
    %2608 = vbcast.lane.b32.xlu0 %v2598, %s2607
    %v2609 = vpop.permute.xlu0 %2608
    %v2610 = vlaneseq
    %v2611 = vshrl.u32 %v2610, 7
    %v2612 = vsub.s32 1, %v2611
    %v2613 = vrot.slane %v2365, %v2612
    %2615 = vbcast.lane.b32.xlu0 %v2613, 256
    %v2616 = vpop.permute.xlu0 %2615
    %s2618 = sor.u32 256, 8
    %2619 = vbcast.lane.b32.xlu0 %v2613, %s2618
    %v2620 = vpop.permute.xlu0 %2619
    %s2622 = sor.u32 256, 16
    %2623 = vbcast.lane.b32.xlu0 %v2613, %s2622
    %v2624 = vpop.permute.xlu0 %2623
    %v2625 = vadd.f32 %v2601, %v2480
    %v2626 = vadd.f32 %v2605, %v2481
    %v2627 = vadd.f32 %v2609, %v2482
    %v2628 = vadd.f32 %v2616, %v2483
    %v2629 = vadd.f32 %v2620, %v2484
    %v2630 = vadd.f32 %v2624, %v2485
    %v2631 = vsel %vm2029, %v2625, -inf
    %v2632 = vsel %vm2029, %v2626, -inf
    %v2633 = vsel %vm2255, %v2627, -inf
    %v2634 = vmax.f32 %v2631, %v2633
    %v2635 = vmax.f32 %v2634, %v2632
    %v2636 = vrot.slane %v2635, 4
    %v2637 = vmax.f32 %v2635, %v2636
    %v2638 = vrot.slane %v2637, 2
    %v2639 = vmax.f32 %v2637, %v2638
    %v2640 = vrot.slane %v2639, 1
    %v2641 = vmax.f32 %v2639, %v2640
    %v2642 = vsel %vm2029, %v2628, -inf
    %v2643 = vsel %vm2029, %v2629, -inf
    %v2644 = vsel %vm2255, %v2630, -inf
    %v2645 = vmax.f32 %v2642, %v2644
    %v2646 = vmax.f32 %v2645, %v2643
    %v2647 = vrot.slane %v2646, 4
    %v2648 = vmax.f32 %v2646, %v2647
    %v2649 = vrot.slane %v2648, 2
    %v2650 = vmax.f32 %v2648, %v2649
    %v2651 = vrot.slane %v2650, 1
    %v2652 = vmax.f32 %v2650, %v2651
    %vm2653 = vcmp.ge.f32.partialorder %v2625, %v2641
    %vm2654 = vcmp.ge.f32.partialorder %v2626, %v2641
    %vm2655 = vcmp.ge.f32.partialorder %v2627, %v2641
    %vm2656 = vcmp.ge.f32.partialorder %v2628, %v2652
    %vm2657 = vcmp.ge.f32.partialorder %v2629, %v2652
    %vm2658 = vcmp.ge.f32.partialorder %v2630, %v2652
    %v2659 = vsel %vm2653, %v2045, 19.0
    %v2660 = vsel %vm2654, %v2046, 19.0
    %v2661 = vsel %vm2655, %v2047, 19.0
    %v2662 = vsel %vm2656, %v2045, 19.0
    %v2663 = vsel %vm2657, %v2046, 19.0
    %v2664 = vsel %vm2658, %v2047, 19.0
    %v2665 = vsel %vm2029, %v2659, inf
    %v2666 = vsel %vm2029, %v2660, inf
    %v2667 = vsel %vm2255, %v2661, inf
    %v2668 = vmin.f32 %v2665, %v2667
    %v2669 = vmin.f32 %v2668, %v2666
    %v2670 = vrot.slane %v2669, 4
    %v2671 = vmin.f32 %v2669, %v2670
    %v2672 = vrot.slane %v2671, 2
    %v2673 = vmin.f32 %v2671, %v2672
    %v2674 = vrot.slane %v2673, 1
    %v2675 = vmin.f32 %v2673, %v2674
    %v2676 = vsel %vm2029, %v2662, inf
    %v2677 = vsel %vm2029, %v2663, inf
    %v2678 = vsel %vm2255, %v2664, inf
    %v2679 = vmin.f32 %v2676, %v2678
    %v2680 = vmin.f32 %v2679, %v2677
    %v2681 = vrot.slane %v2680, 4
    %v2682 = vmin.f32 %v2680, %v2681
    %v2683 = vrot.slane %v2682, 2
    %v2684 = vmin.f32 %v2682, %v2683
    %v2685 = vrot.slane %v2684, 1
    %v2686 = vmin.f32 %v2684, %v2685
    %v2689 = vsel %vm2077, %v2652, %v2641
    %v2691 = vsel %vm2470, %v2689, %v2365
    %v2694 = vsel %vm2077, %v2686, %v2675
    %v2696 = vsel %vm2470, %v2694, %v2040
    %v2697 = vsel %vm2029, %v2445, 0
    %2699 = vmatprep.subr.mxu0 0.0
    %2700 = vmatpush1.msra.mxu0 %v2035
    %2701 = vmatprep.subr.mxu0 0.0
    %2702 = vmatpush1.msra.mxu0 %v2036
    %2703 = vmatprep.subr.mxu0 0.0
    %2704 = vmatpush1.msra.mxu0 %v2096
    %2705 = vmatprep.subr.mxu0 0.0
    %2706 = vmatpush1.msra.mxu0 0.0
    %2707 = vmatprep.subr.mxu0 0.0
    %2708 = vmatpush1.msra.mxu0 0.0
    %2709 = vmatprep.subr.mxu0 0.0
    %2710 = vmatpush1.msra.mxu0 0.0
    %2711 = vmatprep.subr.mxu0 0.0
    %2712 = vmatpush1.msra.mxu0 0.0
    %2713 = vmatprep.subr.mxu0 0.0
    %2714 = vmatpush1.msra.mxu0 0.0
    %2715 = vmatprep.subr.mxu0 0.0
    %2716 = vmatpush1.msra.mxu0 0.0
    %2717 = vmatprep.subr.mxu0 0.0
    %2718 = vmatpush1.msra.mxu0 0.0
    %2719 = vmatprep.subr.mxu0 0.0
    %2720 = vmatpush1.msra.mxu0 0.0
    %2721 = vmatprep.subr.mxu0 0.0
    %2722 = vmatpush1.msra.mxu0 0.0
    %2723 = vmatprep.subr.mxu0 0.0
    %2724 = vmatpush1.msra.mxu0 0.0
    %2725 = vmatprep.subr.mxu0 0.0
    %2726 = vmatpush1.msra.mxu0 0.0
    %2727 = vmatprep.subr.mxu0 0.0
    %2728 = vmatpush1.msra.mxu0 0.0
    %2729 = vmatprep.subr.mxu0 0.0
    %2730 = vmatpush1.msra.mxu0 0.0
    %2731 = vmatprep.subr.mxu0 0.0
    %2732 = vmatpush1.msra.mxu0 0.0
    %2733 = vmatprep.subr.mxu0 0.0
    %2734 = vmatpush1.msra.mxu0 0.0
    %2735 = vmatprep.subr.mxu0 0.0
    %2736 = vmatpush1.msra.mxu0 0.0
    %2737 = vmatprep.subr.mxu0 0.0
    %2738 = vmatpush1.msra.mxu0 0.0
    %2739 = vmatprep.subr.mxu0 0.0
    %2740 = vmatpush1.msra.mxu0 0.0
    %2741 = vmatprep.subr.mxu0 0.0
    %2742 = vmatpush1.msra.mxu0 0.0
    %2743 = vmatprep.subr.mxu0 0.0
    %2744 = vmatpush1.msra.mxu0 0.0
    %2745 = vmatprep.subr.mxu0 0.0
    %2746 = vmatpush1.msra.mxu0 0.0
    %2747 = vmatprep.subr.mxu0 0.0
    %2748 = vmatpush1.msra.mxu0 0.0
    %2749 = vmatprep.subr.mxu0 0.0
    %2750 = vmatpush1.msra.mxu0 0.0
    %2751 = vmatprep.subr.mxu0 0.0
    %2752 = vmatpush1.msra.mxu0 0.0
    %2753 = vmatprep.subr.mxu0 0.0
    %2754 = vmatpush1.msra.mxu0 0.0
    %2755 = vmatprep.subr.mxu0 0.0
    %2756 = vmatpush1.msra.mxu0 0.0
    %2757 = vmatprep.subr.mxu0 0.0
    %2758 = vmatpush1.msra.mxu0 0.0
    %2759 = vmatprep.subr.mxu0 0.0
    %2760 = vmatpush1.msra.mxu0 0.0
    %2761 = vmatprep.subr.mxu0 0.0
    %2762 = vmatpush1.msra.mxu0 0.0
    %2763 = vmatprep.mubr.f32.mxu0 0.0
    %2764 = vmatmul.mubr.f32.gmra.mrb[0].mxu0 %v2697
    %v2765 = vpop.f32.mrb[0].mxu0
    %v2766 = vadd.f32 0.0, %v2765
    %v2767 = vpop.f32.mrb[0].mxu0
    %2768 = vdwg.mxu0
    %v2769 = vrot.slane %v2066, 3
    %v2770 = vrot.slane %v2067, 2
    %v2771 = vsel %vm2077, %v2770, %v2769
    %v2773 = vmul.f32 %v2766, %v2771
    %v2774 = vsel %vm2087, %v2773, 0.0
    %2775 = vadd.xlane.f32.xlu0 %v2774
    %v2776 = vpop.xlane.xlu0 %2775
    %vm2777 = vcmask 1044484
    %v2778 = vsel %vm2777, %v2179, %v2175
    %vm2780 = vcmask 151555
    %v2781 = vsel %vm2780, %v2778, 0.0
    %2782 = vadd.xlane.f32.xlu0 %v2781
    %v2783 = vpop.xlane.xlu0 %2782
    %v2785 = vrot.slane %v2783, 3
    %v2787 = vadd.f32 %v2776, %v2785
    %2788 = vrot.lane.b32.xlu0 %v77, 125
    %v2789 = vpop.permute.xlu0 %2788
    %v2791 = vmul.f32 %v2787, %v2789
    %v2792 = vadd.f32 %v2466, %v2791
    %2793 = vset.pattern.permute.xlu0 3
    %2794 = vperm.xlu0 %2793, %v2197
    %v2795 = vpop.permute.xlu0 %2794
    %vm2796 = vcmp.eq.s32.totalorder %v2795, 1
    %v2797 = vsel %vm2796, %v2771, %v2471
    %v2798 = vlaneseq
    %v2799 = vshrl.u32 %v2798, 7
    %v2800 = vsub.s32 3, %v2799
    %v2801 = vrot.slane %v2023, %v2800
    %v2802 = vlaneseq
    %v2803 = vshrl.u32 %v2802, 7
    %v2804 = vsub.s32 3, %v2803
    %v2805 = vrot.slane %v2026, %v2804
    %v2806 = vadd.f32 %v2035, %v2801
    %v2807 = vadd.f32 %v2036, %v2801
    %v2808 = vadd.f32 %v2037, %v2801
    %v2809 = vadd.f32 %v2035, %v2805
    %v2810 = vadd.f32 %v2036, %v2805
    %v2811 = vadd.f32 %v2037, %v2805
    %v2812 = vlaneseq
    %v2813 = vshrl.u32 %v2812, 7
    %v2814 = vsub.s32 0, %v2813
    %v2815 = vrot.slane %v2594, %v2814
    %2817 = vbcast.lane.b32.xlu0 %v2815, 256
    %v2818 = vpop.permute.xlu0 %2817
    %s2820 = sor.u32 256, 8
    %2821 = vbcast.lane.b32.xlu0 %v2815, %s2820
    %v2822 = vpop.permute.xlu0 %2821
    %s2824 = sor.u32 256, 16
    %2825 = vbcast.lane.b32.xlu0 %v2815, %s2824
    %v2826 = vpop.permute.xlu0 %2825
    %v2827 = vlaneseq
    %v2828 = vshrl.u32 %v2827, 7
    %v2829 = vsub.s32 1, %v2828
    %v2830 = vrot.slane %v2594, %v2829
    %2832 = vbcast.lane.b32.xlu0 %v2830, 256
    %v2833 = vpop.permute.xlu0 %2832
    %s2835 = sor.u32 256, 8
    %2836 = vbcast.lane.b32.xlu0 %v2830, %s2835
    %v2837 = vpop.permute.xlu0 %2836
    %s2839 = sor.u32 256, 16
    %2840 = vbcast.lane.b32.xlu0 %v2830, %s2839
    %v2841 = vpop.permute.xlu0 %2840
    %v2842 = vadd.f32 %v2818, %v2806
    %v2843 = vadd.f32 %v2822, %v2807
    %v2844 = vadd.f32 %v2826, %v2808
    %v2845 = vadd.f32 %v2833, %v2809
    %v2846 = vadd.f32 %v2837, %v2810
    %v2847 = vadd.f32 %v2841, %v2811
    %v2848 = vsel %vm2029, %v2842, -inf
    %v2849 = vsel %vm2029, %v2843, -inf
    %v2850 = vsel %vm2255, %v2844, -inf
    %v2851 = vmax.f32 %v2848, %v2850
    %v2852 = vmax.f32 %v2851, %v2849
    %v2853 = vrot.slane %v2852, 4
    %v2854 = vmax.f32 %v2852, %v2853
    %v2855 = vrot.slane %v2854, 2
    %v2856 = vmax.f32 %v2854, %v2855
    %v2857 = vrot.slane %v2856, 1
    %v2858 = vmax.f32 %v2856, %v2857
    %v2859 = vsel %vm2029, %v2845, -inf
    %v2860 = vsel %vm2029, %v2846, -inf
    %v2861 = vsel %vm2255, %v2847, -inf
    %v2862 = vmax.f32 %v2859, %v2861
    %v2863 = vmax.f32 %v2862, %v2860
    %v2864 = vrot.slane %v2863, 4
    %v2865 = vmax.f32 %v2863, %v2864
    %v2866 = vrot.slane %v2865, 2
    %v2867 = vmax.f32 %v2865, %v2866
    %v2868 = vrot.slane %v2867, 1
    %v2869 = vmax.f32 %v2867, %v2868
    %v2870 = vsub.f32 %v2842, %v2858
    %v2871 = vsub.f32 %v2843, %v2858
    %v2872 = vsub.f32 %v2844, %v2858
    %v2873 = vsub.f32 %v2845, %v2869
    %v2874 = vsub.f32 %v2846, %v2869
    %v2875 = vsub.f32 %v2847, %v2869
    %v2876 = vmul.f32 %v2870, 1.442695
    %v2877 = vpow.pop %v2876
    %v2878 = vmul.f32 %v2871, 1.442695
    %v2879 = vpow.pop %v2878
    %v2880 = vmul.f32 %v2872, 1.442695
    %v2881 = vpow.pop %v2880
    %v2882 = vmul.f32 %v2873, 1.442695
    %v2883 = vpow.pop %v2882
    %v2884 = vmul.f32 %v2874, 1.442695
    %v2885 = vpow.pop %v2884
    %v2886 = vmul.f32 %v2875, 1.442695
    %v2887 = vpow.pop %v2886
    %v2888 = vsel %vm2029, %v2877, 0.0
    %v2889 = vsel %vm2029, %v2879, 0.0
    %v2890 = vadd.f32 %v2888, %v2889
    %v2891 = vsel %vm2255, %v2881, 0.0
    %v2892 = vadd.f32 %v2890, %v2891
    %v2893 = vrot.slane %v2892, 4
    %v2894 = vadd.f32 %v2892, %v2893
    %v2895 = vrot.slane %v2894, 2
    %v2896 = vadd.f32 %v2894, %v2895
    %v2897 = vrot.slane %v2896, 1
    %v2898 = vadd.f32 %v2896, %v2897
    %v2899 = vsel %vm2029, %v2883, 0.0
    %v2900 = vsel %vm2029, %v2885, 0.0
    %v2901 = vadd.f32 %v2899, %v2900
    %v2902 = vsel %vm2255, %v2887, 0.0
    %v2903 = vadd.f32 %v2901, %v2902
    %v2904 = vrot.slane %v2903, 4
    %v2905 = vadd.f32 %v2903, %v2904
    %v2906 = vrot.slane %v2905, 2
    %v2907 = vadd.f32 %v2905, %v2906
    %v2908 = vrot.slane %v2907, 1
    %v2909 = vadd.f32 %v2907, %v2908
    %v2910 = vlog2.pop %v2898
    %v2911 = vmul.f32 %v2910, 0.6931472
    %v2912 = vlog2.pop %v2909
    %v2913 = vmul.f32 %v2912, 0.6931472
    %v2914 = vadd.f32 %v2911, %v2858
    %v2915 = vadd.f32 %v2913, %v2869
    %v2918 = vsel %vm2077, %v2915, %v2914
    %v2920 = vsel %vm2796, %v2918, %v2594
    %v2921 = vlaneseq
    %v2922 = vshrl.u32 %v2921, 7
    %v2923 = vsub.s32 0, %v2922
    %v2924 = vrot.slane %v2691, %v2923
    %2926 = vbcast.lane.b32.xlu0 %v2924, 256
    %v2927 = vpop.permute.xlu0 %2926
    %s2929 = sor.u32 256, 8
    %2930 = vbcast.lane.b32.xlu0 %v2924, %s2929
    %v2931 = vpop.permute.xlu0 %2930
    %s2933 = sor.u32 256, 16
    %2934 = vbcast.lane.b32.xlu0 %v2924, %s2933
    %v2935 = vpop.permute.xlu0 %2934
    %v2936 = vlaneseq
    %v2937 = vshrl.u32 %v2936, 7
    %v2938 = vsub.s32 1, %v2937
    %v2939 = vrot.slane %v2691, %v2938
    %2941 = vbcast.lane.b32.xlu0 %v2939, 256
    %v2942 = vpop.permute.xlu0 %2941
    %s2944 = sor.u32 256, 8
    %2945 = vbcast.lane.b32.xlu0 %v2939, %s2944
    %v2946 = vpop.permute.xlu0 %2945
    %s2948 = sor.u32 256, 16
    %2949 = vbcast.lane.b32.xlu0 %v2939, %s2948
    %v2950 = vpop.permute.xlu0 %2949
    %v2951 = vadd.f32 %v2927, %v2806
    %v2952 = vadd.f32 %v2931, %v2807
    %v2953 = vadd.f32 %v2935, %v2808
    %v2954 = vadd.f32 %v2942, %v2809
    %v2955 = vadd.f32 %v2946, %v2810
    %v2956 = vadd.f32 %v2950, %v2811
    %v2957 = vsel %vm2029, %v2951, -inf
    %v2958 = vsel %vm2029, %v2952, -inf
    %v2959 = vsel %vm2255, %v2953, -inf
    %v2960 = vmax.f32 %v2957, %v2959
    %v2961 = vmax.f32 %v2960, %v2958
    %v2962 = vrot.slane %v2961, 4
    %v2963 = vmax.f32 %v2961, %v2962
    %v2964 = vrot.slane %v2963, 2
    %v2965 = vmax.f32 %v2963, %v2964
    %v2966 = vrot.slane %v2965, 1
    %v2967 = vmax.f32 %v2965, %v2966
    %v2968 = vsel %vm2029, %v2954, -inf
    %v2969 = vsel %vm2029, %v2955, -inf
    %v2970 = vsel %vm2255, %v2956, -inf
    %v2971 = vmax.f32 %v2968, %v2970
    %v2972 = vmax.f32 %v2971, %v2969
    %v2973 = vrot.slane %v2972, 4
    %v2974 = vmax.f32 %v2972, %v2973
    %v2975 = vrot.slane %v2974, 2
    %v2976 = vmax.f32 %v2974, %v2975
    %v2977 = vrot.slane %v2976, 1
    %v2978 = vmax.f32 %v2976, %v2977
    %vm2979 = vcmp.ge.f32.partialorder %v2951, %v2967
    %vm2980 = vcmp.ge.f32.partialorder %v2952, %v2967
    %vm2981 = vcmp.ge.f32.partialorder %v2953, %v2967
    %vm2982 = vcmp.ge.f32.partialorder %v2954, %v2978
    %vm2983 = vcmp.ge.f32.partialorder %v2955, %v2978
    %vm2984 = vcmp.ge.f32.partialorder %v2956, %v2978
    %v2985 = vsel %vm2979, %v2045, 19.0
    %v2986 = vsel %vm2980, %v2046, 19.0
    %v2987 = vsel %vm2981, %v2047, 19.0
    %v2988 = vsel %vm2982, %v2045, 19.0
    %v2989 = vsel %vm2983, %v2046, 19.0
    %v2990 = vsel %vm2984, %v2047, 19.0
    %v2991 = vsel %vm2029, %v2985, inf
    %v2992 = vsel %vm2029, %v2986, inf
    %v2993 = vsel %vm2255, %v2987, inf
    %v2994 = vmin.f32 %v2991, %v2993
    %v2995 = vmin.f32 %v2994, %v2992
    %v2996 = vrot.slane %v2995, 4
    %v2997 = vmin.f32 %v2995, %v2996
    %v2998 = vrot.slane %v2997, 2
    %v2999 = vmin.f32 %v2997, %v2998
    %v3000 = vrot.slane %v2999, 1
    %v3001 = vmin.f32 %v2999, %v3000
    %v3002 = vsel %vm2029, %v2988, inf
    %v3003 = vsel %vm2029, %v2989, inf
    %v3004 = vsel %vm2255, %v2990, inf
    %v3005 = vmin.f32 %v3002, %v3004
    %v3006 = vmin.f32 %v3005, %v3003
    %v3007 = vrot.slane %v3006, 4
    %v3008 = vmin.f32 %v3006, %v3007
    %v3009 = vrot.slane %v3008, 2
    %v3010 = vmin.f32 %v3008, %v3009
    %v3011 = vrot.slane %v3010, 1
    %v3012 = vmin.f32 %v3010, %v3011
    %v3015 = vsel %vm2077, %v2978, %v2967
    %v3017 = vsel %vm2796, %v3015, %v2691
    %v3020 = vsel %vm2077, %v3012, %v3001
    %v3022 = vsel %vm2796, %v3020, %v2040
    %v3023 = vsel %vm2029, %v2771, 0
    %3025 = vmatprep.subr.mxu0 0.0
    %3026 = vmatpush1.msra.mxu0 %v2035
    %3027 = vmatprep.subr.mxu0 0.0
    %3028 = vmatpush1.msra.mxu0 %v2036
    %3029 = vmatprep.subr.mxu0 0.0
    %3030 = vmatpush1.msra.mxu0 %v2096
    %3031 = vmatprep.subr.mxu0 0.0
    %3032 = vmatpush1.msra.mxu0 0.0
    %3033 = vmatprep.subr.mxu0 0.0
    %3034 = vmatpush1.msra.mxu0 0.0
    %3035 = vmatprep.subr.mxu0 0.0
    %3036 = vmatpush1.msra.mxu0 0.0
    %3037 = vmatprep.subr.mxu0 0.0
    %3038 = vmatpush1.msra.mxu0 0.0
    %3039 = vmatprep.subr.mxu0 0.0
    %3040 = vmatpush1.msra.mxu0 0.0
    %3041 = vmatprep.subr.mxu0 0.0
    %3042 = vmatpush1.msra.mxu0 0.0
    %3043 = vmatprep.subr.mxu0 0.0
    %3044 = vmatpush1.msra.mxu0 0.0
    %3045 = vmatprep.subr.mxu0 0.0
    %3046 = vmatpush1.msra.mxu0 0.0
    %3047 = vmatprep.subr.mxu0 0.0
    %3048 = vmatpush1.msra.mxu0 0.0
    %3049 = vmatprep.subr.mxu0 0.0
    %3050 = vmatpush1.msra.mxu0 0.0
    %3051 = vmatprep.subr.mxu0 0.0
    %3052 = vmatpush1.msra.mxu0 0.0
    %3053 = vmatprep.subr.mxu0 0.0
    %3054 = vmatpush1.msra.mxu0 0.0
    %3055 = vmatprep.subr.mxu0 0.0
    %3056 = vmatpush1.msra.mxu0 0.0
    %3057 = vmatprep.subr.mxu0 0.0
    %3058 = vmatpush1.msra.mxu0 0.0
    %3059 = vmatprep.subr.mxu0 0.0
    %3060 = vmatpush1.msra.mxu0 0.0
    %3061 = vmatprep.subr.mxu0 0.0
    %3062 = vmatpush1.msra.mxu0 0.0
    %3063 = vmatprep.subr.mxu0 0.0
    %3064 = vmatpush1.msra.mxu0 0.0
    %3065 = vmatprep.subr.mxu0 0.0
    %3066 = vmatpush1.msra.mxu0 0.0
    %3067 = vmatprep.subr.mxu0 0.0
    %3068 = vmatpush1.msra.mxu0 0.0
    %3069 = vmatprep.subr.mxu0 0.0
    %3070 = vmatpush1.msra.mxu0 0.0
    %3071 = vmatprep.subr.mxu0 0.0
    %3072 = vmatpush1.msra.mxu0 0.0
    %3073 = vmatprep.subr.mxu0 0.0
    %3074 = vmatpush1.msra.mxu0 0.0
    %3075 = vmatprep.subr.mxu0 0.0
    %3076 = vmatpush1.msra.mxu0 0.0
    %3077 = vmatprep.subr.mxu0 0.0
    %3078 = vmatpush1.msra.mxu0 0.0
    %3079 = vmatprep.subr.mxu0 0.0
    %3080 = vmatpush1.msra.mxu0 0.0
    %3081 = vmatprep.subr.mxu0 0.0
    %3082 = vmatpush1.msra.mxu0 0.0
    %3083 = vmatprep.subr.mxu0 0.0
    %3084 = vmatpush1.msra.mxu0 0.0
    %3085 = vmatprep.subr.mxu0 0.0
    %3086 = vmatpush1.msra.mxu0 0.0
    %3087 = vmatprep.subr.mxu0 0.0
    %3088 = vmatpush1.msra.mxu0 0.0
    %3089 = vmatprep.mubr.f32.mxu0 0.0
    %3090 = vmatmul.mubr.f32.gmra.mrb[0].mxu0 %v3023
    %v3091 = vpop.f32.mrb[0].mxu0
    %v3092 = vadd.f32 0.0, %v3091
    %v3093 = vpop.f32.mrb[0].mxu0
    %3094 = vdwg.mxu0
    %v3095 = vrot.slane %v2066, 4
    %v3096 = vrot.slane %v2067, 3
    %v3097 = vsel %vm2077, %v3096, %v3095
    %v3099 = vmul.f32 %v3092, %v3097
    %v3100 = vsel %vm2087, %v3099, 0.0
    %3101 = vadd.xlane.f32.xlu0 %v3100
    %v3102 = vpop.xlane.xlu0 %3101
    %vm3103 = vcmask 1045509
    %v3104 = vsel %vm3103, %v2179, %v2175
    %vm3106 = vcmask 152580
    %v3107 = vsel %vm3106, %v3104, 0.0
    %3108 = vadd.xlane.f32.xlu0 %v3107
    %v3109 = vpop.xlane.xlu0 %3108
    %v3111 = vrot.slane %v3109, 4
    %v3113 = vadd.f32 %v3102, %v3111
    %3114 = vrot.lane.b32.xlu0 %v77, 124
    %v3115 = vpop.permute.xlu0 %3114
    %v3117 = vmul.f32 %v3113, %v3115
    %v3118 = vadd.f32 %v2792, %v3117
    %3119 = vset.pattern.permute.xlu0 4
    %3120 = vperm.xlu0 %3119, %v2197
    %v3121 = vpop.permute.xlu0 %3120
    %vm3122 = vcmp.eq.s32.totalorder %v3121, 1
    %v3123 = vsel %vm3122, %v3097, %v2797
    %v3124 = vlaneseq
    %v3125 = vshrl.u32 %v3124, 7
    %v3126 = vsub.s32 4, %v3125
    %v3127 = vrot.slane %v2023, %v3126
    %v3128 = vlaneseq
    %v3129 = vshrl.u32 %v3128, 7
    %v3130 = vsub.s32 4, %v3129
    %v3131 = vrot.slane %v2026, %v3130
    %v3132 = vadd.f32 %v2035, %v3127
    %v3133 = vadd.f32 %v2036, %v3127
    %v3134 = vadd.f32 %v2037, %v3127
    %v3135 = vadd.f32 %v2035, %v3131
    %v3136 = vadd.f32 %v2036, %v3131
    %v3137 = vadd.f32 %v2037, %v3131
    %v3138 = vlaneseq
    %v3139 = vshrl.u32 %v3138, 7
    %v3140 = vsub.s32 0, %v3139
    %v3141 = vrot.slane %v2920, %v3140
    %3143 = vbcast.lane.b32.xlu0 %v3141, 256
    %v3144 = vpop.permute.xlu0 %3143
    %s3146 = sor.u32 256, 8
    %3147 = vbcast.lane.b32.xlu0 %v3141, %s3146
    %v3148 = vpop.permute.xlu0 %3147
    %s3150 = sor.u32 256, 16
    %3151 = vbcast.lane.b32.xlu0 %v3141, %s3150
    %v3152 = vpop.permute.xlu0 %3151
    %v3153 = vlaneseq
    %v3154 = vshrl.u32 %v3153, 7
    %v3155 = vsub.s32 1, %v3154
    %v3156 = vrot.slane %v2920, %v3155
    %3158 = vbcast.lane.b32.xlu0 %v3156, 256
    %v3159 = vpop.permute.xlu0 %3158
    %s3161 = sor.u32 256, 8
    %3162 = vbcast.lane.b32.xlu0 %v3156, %s3161
    %v3163 = vpop.permute.xlu0 %3162
    %s3165 = sor.u32 256, 16
    %3166 = vbcast.lane.b32.xlu0 %v3156, %s3165
    %v3167 = vpop.permute.xlu0 %3166
    %v3168 = vadd.f32 %v3144, %v3132
    %v3169 = vadd.f32 %v3148, %v3133
    %v3170 = vadd.f32 %v3152, %v3134
    %v3171 = vadd.f32 %v3159, %v3135
    %v3172 = vadd.f32 %v3163, %v3136
    %v3173 = vadd.f32 %v3167, %v3137
    %v3174 = vsel %vm2029, %v3168, -inf
    %v3175 = vsel %vm2029, %v3169, -inf
    %v3176 = vsel %vm2255, %v3170, -inf
    %v3177 = vmax.f32 %v3174, %v3176
    %v3178 = vmax.f32 %v3177, %v3175
    %v3179 = vrot.slane %v3178, 4
    %v3180 = vmax.f32 %v3178, %v3179
    %v3181 = vrot.slane %v3180, 2
    %v3182 = vmax.f32 %v3180, %v3181
    %v3183 = vrot.slane %v3182, 1
    %v3184 = vmax.f32 %v3182, %v3183
    %v3185 = vsel %vm2029, %v3171, -inf
    %v3186 = vsel %vm2029, %v3172, -inf
    %v3187 = vsel %vm2255, %v3173, -inf
    %v3188 = vmax.f32 %v3185, %v3187
    %v3189 = vmax.f32 %v3188, %v3186
    %v3190 = vrot.slane %v3189, 4
    %v3191 = vmax.f32 %v3189, %v3190
    %v3192 = vrot.slane %v3191, 2
    %v3193 = vmax.f32 %v3191, %v3192
    %v3194 = vrot.slane %v3193, 1
    %v3195 = vmax.f32 %v3193, %v3194
    %v3196 = vsub.f32 %v3168, %v3184
    %v3197 = vsub.f32 %v3169, %v3184
    %v3198 = vsub.f32 %v3170, %v3184
    %v3199 = vsub.f32 %v3171, %v3195
    %v3200 = vsub.f32 %v3172, %v3195
    %v3201 = vsub.f32 %v3173, %v3195
    %v3202 = vmul.f32 %v3196, 1.442695
    %v3203 = vpow.pop %v3202
    %v3204 = vmul.f32 %v3197, 1.442695
    %v3205 = vpow.pop %v3204
    %v3206 = vmul.f32 %v3198, 1.442695
    %v3207 = vpow.pop %v3206
    %v3208 = vmul.f32 %v3199, 1.442695
    %v3209 = vpow.pop %v3208
    %v3210 = vmul.f32 %v3200, 1.442695
    %v3211 = vpow.pop %v3210
    %v3212 = vmul.f32 %v3201, 1.442695
    %v3213 = vpow.pop %v3212
    %v3214 = vsel %vm2029, %v3203, 0.0
    %v3215 = vsel %vm2029, %v3205, 0.0
    %v3216 = vadd.f32 %v3214, %v3215
    %v3217 = vsel %vm2255, %v3207, 0.0
    %v3218 = vadd.f32 %v3216, %v3217
    %v3219 = vrot.slane %v3218, 4
    %v3220 = vadd.f32 %v3218, %v3219
    %v3221 = vrot.slane %v3220, 2
    %v3222 = vadd.f32 %v3220, %v3221
    %v3223 = vrot.slane %v3222, 1
    %v3224 = vadd.f32 %v3222, %v3223
    %v3225 = vsel %vm2029, %v3209, 0.0
    %v3226 = vsel %vm2029, %v3211, 0.0
    %v3227 = vadd.f32 %v3225, %v3226
    %v3228 = vsel %vm2255, %v3213, 0.0
    %v3229 = vadd.f32 %v3227, %v3228
    %v3230 = vrot.slane %v3229, 4
    %v3231 = vadd.f32 %v3229, %v3230
    %v3232 = vrot.slane %v3231, 2
    %v3233 = vadd.f32 %v3231, %v3232
    %v3234 = vrot.slane %v3233, 1
    %v3235 = vadd.f32 %v3233, %v3234
    %v3236 = vlog2.pop %v3224
    %v3237 = vmul.f32 %v3236, 0.6931472
    %v3238 = vlog2.pop %v3235
    %v3239 = vmul.f32 %v3238, 0.6931472
    %v3240 = vadd.f32 %v3237, %v3184
    %v3241 = vadd.f32 %v3239, %v3195
    %v3244 = vsel %vm2077, %v3241, %v3240
    %v3246 = vsel %vm3122, %v3244, %v2920
    %v3247 = vlaneseq
    %v3248 = vshrl.u32 %v3247, 7
    %v3249 = vsub.s32 0, %v3248
    %v3250 = vrot.slane %v3017, %v3249
    %3252 = vbcast.lane.b32.xlu0 %v3250, 256
    %v3253 = vpop.permute.xlu0 %3252
    %s3255 = sor.u32 256, 8
    %3256 = vbcast.lane.b32.xlu0 %v3250, %s3255
    %v3257 = vpop.permute.xlu0 %3256
    %s3259 = sor.u32 256, 16
    %3260 = vbcast.lane.b32.xlu0 %v3250, %s3259
    %v3261 = vpop.permute.xlu0 %3260
    %v3262 = vlaneseq
    %v3263 = vshrl.u32 %v3262, 7
    %v3264 = vsub.s32 1, %v3263
    %v3265 = vrot.slane %v3017, %v3264
    %3267 = vbcast.lane.b32.xlu0 %v3265, 256
    %v3268 = vpop.permute.xlu0 %3267
    %s3270 = sor.u32 256, 8
    %3271 = vbcast.lane.b32.xlu0 %v3265, %s3270
    %v3272 = vpop.permute.xlu0 %3271
    %s3274 = sor.u32 256, 16
    %3275 = vbcast.lane.b32.xlu0 %v3265, %s3274
    %v3276 = vpop.permute.xlu0 %3275
    %v3277 = vadd.f32 %v3253, %v3132
    %v3278 = vadd.f32 %v3257, %v3133
    %v3279 = vadd.f32 %v3261, %v3134
    %v3280 = vadd.f32 %v3268, %v3135
    %v3281 = vadd.f32 %v3272, %v3136
    %v3282 = vadd.f32 %v3276, %v3137
    %v3283 = vsel %vm2029, %v3277, -inf
    %v3284 = vsel %vm2029, %v3278, -inf
    %v3285 = vsel %vm2255, %v3279, -inf
    %v3286 = vmax.f32 %v3283, %v3285
    %v3287 = vmax.f32 %v3286, %v3284
    %v3288 = vrot.slane %v3287, 4
    %v3289 = vmax.f32 %v3287, %v3288
    %v3290 = vrot.slane %v3289, 2
    %v3291 = vmax.f32 %v3289, %v3290
    %v3292 = vrot.slane %v3291, 1
    %v3293 = vmax.f32 %v3291, %v3292
    %v3294 = vsel %vm2029, %v3280, -inf
    %v3295 = vsel %vm2029, %v3281, -inf
    %v3296 = vsel %vm2255, %v3282, -inf
    %v3297 = vmax.f32 %v3294, %v3296
    %v3298 = vmax.f32 %v3297, %v3295
    %v3299 = vrot.slane %v3298, 4
    %v3300 = vmax.f32 %v3298, %v3299
    %v3301 = vrot.slane %v3300, 2
    %v3302 = vmax.f32 %v3300, %v3301
    %v3303 = vrot.slane %v3302, 1
    %v3304 = vmax.f32 %v3302, %v3303
    %vm3305 = vcmp.ge.f32.partialorder %v3277, %v3293
    %vm3306 = vcmp.ge.f32.partialorder %v3278, %v3293
    %vm3307 = vcmp.ge.f32.partialorder %v3279, %v3293
    %vm3308 = vcmp.ge.f32.partialorder %v3280, %v3304
    %vm3309 = vcmp.ge.f32.partialorder %v3281, %v3304
    %vm3310 = vcmp.ge.f32.partialorder %v3282, %v3304
    %v3311 = vsel %vm3305, %v2045, 19.0
    %v3312 = vsel %vm3306, %v2046, 19.0
    %v3313 = vsel %vm3307, %v2047, 19.0
    %v3314 = vsel %vm3308, %v2045, 19.0
    %v3315 = vsel %vm3309, %v2046, 19.0
    %v3316 = vsel %vm3310, %v2047, 19.0
    %v3317 = vsel %vm2029, %v3311, inf
    %v3318 = vsel %vm2029, %v3312, inf
    %v3319 = vsel %vm2255, %v3313, inf
    %v3320 = vmin.f32 %v3317, %v3319
    %v3321 = vmin.f32 %v3320, %v3318
    %v3322 = vrot.slane %v3321, 4
    %v3323 = vmin.f32 %v3321, %v3322
    %v3324 = vrot.slane %v3323, 2
    %v3325 = vmin.f32 %v3323, %v3324
    %v3326 = vrot.slane %v3325, 1
    %v3327 = vmin.f32 %v3325, %v3326
    %v3328 = vsel %vm2029, %v3314, inf
    %v3329 = vsel %vm2029, %v3315, inf
    %v3330 = vsel %vm2255, %v3316, inf
    %v3331 = vmin.f32 %v3328, %v3330
    %v3332 = vmin.f32 %v3331, %v3329
    %v3333 = vrot.slane %v3332, 4
    %v3334 = vmin.f32 %v3332, %v3333
    %v3335 = vrot.slane %v3334, 2
    %v3336 = vmin.f32 %v3334, %v3335
    %v3337 = vrot.slane %v3336, 1
    %v3338 = vmin.f32 %v3336, %v3337
    %v3341 = vsel %vm2077, %v3304, %v3293
    %v3343 = vsel %vm3122, %v3341, %v3017
    %v3346 = vsel %vm2077, %v3338, %v3327
    %v3348 = vsel %vm3122, %v3346, %v2040
    %v3349 = vsel %vm2029, %v3097, 0
    %3351 = vmatprep.subr.mxu0 0.0
    %3352 = vmatpush1.msra.mxu0 %v2035
    %3353 = vmatprep.subr.mxu0 0.0
    %3354 = vmatpush1.msra.mxu0 %v2036
    %3355 = vmatprep.subr.mxu0 0.0
    %3356 = vmatpush1.msra.mxu0 %v2096
    %3357 = vmatprep.subr.mxu0 0.0
    %3358 = vmatpush1.msra.mxu0 0.0
    %3359 = vmatprep.subr.mxu0 0.0
    %3360 = vmatpush1.msra.mxu0 0.0
    %3361 = vmatprep.subr.mxu0 0.0
    %3362 = vmatpush1.msra.mxu0 0.0
    %3363 = vmatprep.subr.mxu0 0.0
    %3364 = vmatpush1.msra.mxu0 0.0
    %3365 = vmatprep.subr.mxu0 0.0
    %3366 = vmatpush1.msra.mxu0 0.0
    %3367 = vmatprep.subr.mxu0 0.0
    %3368 = vmatpush1.msra.mxu0 0.0
    %3369 = vmatprep.subr.mxu0 0.0
    %3370 = vmatpush1.msra.mxu0 0.0
    %3371 = vmatprep.subr.mxu0 0.0
    %3372 = vmatpush1.msra.mxu0 0.0
    %3373 = vmatprep.subr.mxu0 0.0
    %3374 = vmatpush1.msra.mxu0 0.0
    %3375 = vmatprep.subr.mxu0 0.0
    %3376 = vmatpush1.msra.mxu0 0.0
    %3377 = vmatprep.subr.mxu0 0.0
    %3378 = vmatpush1.msra.mxu0 0.0
    %3379 = vmatprep.subr.mxu0 0.0
    %3380 = vmatpush1.msra.mxu0 0.0
    %3381 = vmatprep.subr.mxu0 0.0
    %3382 = vmatpush1.msra.mxu0 0.0
    %3383 = vmatprep.subr.mxu0 0.0
    %3384 = vmatpush1.msra.mxu0 0.0
    %3385 = vmatprep.subr.mxu0 0.0
    %3386 = vmatpush1.msra.mxu0 0.0
    %3387 = vmatprep.subr.mxu0 0.0
    %3388 = vmatpush1.msra.mxu0 0.0
    %3389 = vmatprep.subr.mxu0 0.0
    %3390 = vmatpush1.msra.mxu0 0.0
    %3391 = vmatprep.subr.mxu0 0.0
    %3392 = vmatpush1.msra.mxu0 0.0
    %3393 = vmatprep.subr.mxu0 0.0
    %3394 = vmatpush1.msra.mxu0 0.0
    %3395 = vmatprep.subr.mxu0 0.0
    %3396 = vmatpush1.msra.mxu0 0.0
    %3397 = vmatprep.subr.mxu0 0.0
    %3398 = vmatpush1.msra.mxu0 0.0
    %3399 = vmatprep.subr.mxu0 0.0
    %3400 = vmatpush1.msra.mxu0 0.0
    %3401 = vmatprep.subr.mxu0 0.0
    %3402 = vmatpush1.msra.mxu0 0.0
    %3403 = vmatprep.subr.mxu0 0.0
    %3404 = vmatpush1.msra.mxu0 0.0
    %3405 = vmatprep.subr.mxu0 0.0
    %3406 = vmatpush1.msra.mxu0 0.0
    %3407 = vmatprep.subr.mxu0 0.0
    %3408 = vmatpush1.msra.mxu0 0.0
    %3409 = vmatprep.subr.mxu0 0.0
    %3410 = vmatpush1.msra.mxu0 0.0
    %3411 = vmatprep.subr.mxu0 0.0
    %3412 = vmatpush1.msra.mxu0 0.0
    %3413 = vmatprep.subr.mxu0 0.0
    %3414 = vmatpush1.msra.mxu0 0.0
    %3415 = vmatprep.mubr.f32.mxu0 0.0
    %3416 = vmatmul.mubr.f32.gmra.mrb[0].mxu0 %v3349
    %v3417 = vpop.f32.mrb[0].mxu0
    %v3418 = vadd.f32 0.0, %v3417
    %v3419 = vpop.f32.mrb[0].mxu0
    %3420 = vdwg.mxu0
    %v3421 = vrot.slane %v2066, 5
    %v3422 = vrot.slane %v2067, 4
    %v3423 = vsel %vm2077, %v3422, %v3421
    %v3425 = vmul.f32 %v3418, %v3423
    %v3426 = vsel %vm2087, %v3425, 0.0
    %3427 = vadd.xlane.f32.xlu0 %v3426
    %v3428 = vpop.xlane.xlu0 %3427
    %vm3429 = vcmask 1046534
    %v3430 = vsel %vm3429, %v2179, %v2175
    %vm3432 = vcmask 153605
    %v3433 = vsel %vm3432, %v3430, 0.0
    %3434 = vadd.xlane.f32.xlu0 %v3433
    %v3435 = vpop.xlane.xlu0 %3434
    %v3437 = vrot.slane %v3435, 5
    %v3439 = vadd.f32 %v3428, %v3437
    %3440 = vrot.lane.b32.xlu0 %v77, 123
    %v3441 = vpop.permute.xlu0 %3440
    %v3443 = vmul.f32 %v3439, %v3441
    %v3444 = vadd.f32 %v3118, %v3443
    %3445 = vset.pattern.permute.xlu0 5
    %3446 = vperm.xlu0 %3445, %v2197
    %v3447 = vpop.permute.xlu0 %3446
    %vm3448 = vcmp.eq.s32.totalorder %v3447, 1
    %v3449 = vsel %vm3448, %v3423, %v3123
    %v3450 = vlaneseq
    %v3451 = vshrl.u32 %v3450, 7
    %v3452 = vsub.s32 5, %v3451
    %v3453 = vrot.slane %v2023, %v3452
    %v3454 = vlaneseq
    %v3455 = vshrl.u32 %v3454, 7
    %v3456 = vsub.s32 5, %v3455
    %v3457 = vrot.slane %v2026, %v3456
    %v3458 = vadd.f32 %v2035, %v3453
    %v3459 = vadd.f32 %v2036, %v3453
    %v3460 = vadd.f32 %v2037, %v3453
    %v3461 = vadd.f32 %v2035, %v3457
    %v3462 = vadd.f32 %v2036, %v3457
    %v3463 = vadd.f32 %v2037, %v3457
    %v3464 = vlaneseq
    %v3465 = vshrl.u32 %v3464, 7
    %v3466 = vsub.s32 0, %v3465
    %v3467 = vrot.slane %v3246, %v3466
    %3469 = vbcast.lane.b32.xlu0 %v3467, 256
    %v3470 = vpop.permute.xlu0 %3469
    %s3472 = sor.u32 256, 8
    %3473 = vbcast.lane.b32.xlu0 %v3467, %s3472
    %v3474 = vpop.permute.xlu0 %3473
    %s3476 = sor.u32 256, 16
    %3477 = vbcast.lane.b32.xlu0 %v3467, %s3476
    %v3478 = vpop.permute.xlu0 %3477
    %v3479 = vlaneseq
    %v3480 = vshrl.u32 %v3479, 7
    %v3481 = vsub.s32 1, %v3480
    %v3482 = vrot.slane %v3246, %v3481
    %3484 = vbcast.lane.b32.xlu0 %v3482, 256
    %v3485 = vpop.permute.xlu0 %3484
    %s3487 = sor.u32 256, 8
    %3488 = vbcast.lane.b32.xlu0 %v3482, %s3487
    %v3489 = vpop.permute.xlu0 %3488
    %s3491 = sor.u32 256, 16
    %3492 = vbcast.lane.b32.xlu0 %v3482, %s3491
    %v3493 = vpop.permute.xlu0 %3492
    %v3494 = vadd.f32 %v3470, %v3458
    %v3495 = vadd.f32 %v3474, %v3459
    %v3496 = vadd.f32 %v3478, %v3460
    %v3497 = vadd.f32 %v3485, %v3461
    %v3498 = vadd.f32 %v3489, %v3462
    %v3499 = vadd.f32 %v3493, %v3463
    %v3500 = vsel %vm2029, %v3494, -inf
    %v3501 = vsel %vm2029, %v3495, -inf
    %v3502 = vsel %vm2255, %v3496, -inf
    %v3503 = vmax.f32 %v3500, %v3502
    %v3504 = vmax.f32 %v3503, %v3501
    %v3505 = vrot.slane %v3504, 4
    %v3506 = vmax.f32 %v3504, %v3505
    %v3507 = vrot.slane %v3506, 2
    %v3508 = vmax.f32 %v3506, %v3507
    %v3509 = vrot.slane %v3508, 1
    %v3510 = vmax.f32 %v3508, %v3509
    %v3511 = vsel %vm2029, %v3497, -inf
    %v3512 = vsel %vm2029, %v3498, -inf
    %v3513 = vsel %vm2255, %v3499, -inf
    %v3514 = vmax.f32 %v3511, %v3513
    %v3515 = vmax.f32 %v3514, %v3512
    %v3516 = vrot.slane %v3515, 4
    %v3517 = vmax.f32 %v3515, %v3516
    %v3518 = vrot.slane %v3517, 2
    %v3519 = vmax.f32 %v3517, %v3518
    %v3520 = vrot.slane %v3519, 1
    %v3521 = vmax.f32 %v3519, %v3520
    %v3522 = vsub.f32 %v3494, %v3510
    %v3523 = vsub.f32 %v3495, %v3510
    %v3524 = vsub.f32 %v3496, %v3510
    %v3525 = vsub.f32 %v3497, %v3521
    %v3526 = vsub.f32 %v3498, %v3521
    %v3527 = vsub.f32 %v3499, %v3521
    %v3528 = vmul.f32 %v3522, 1.442695
    %v3529 = vpow.pop %v3528
    %v3530 = vmul.f32 %v3523, 1.442695
    %v3531 = vpow.pop %v3530
    %v3532 = vmul.f32 %v3524, 1.442695
    %v3533 = vpow.pop %v3532
    %v3534 = vmul.f32 %v3525, 1.442695
    %v3535 = vpow.pop %v3534
    %v3536 = vmul.f32 %v3526, 1.442695
    %v3537 = vpow.pop %v3536
    %v3538 = vmul.f32 %v3527, 1.442695
    %v3539 = vpow.pop %v3538
    %v3540 = vsel %vm2029, %v3529, 0.0
    %v3541 = vsel %vm2029, %v3531, 0.0
    %v3542 = vadd.f32 %v3540, %v3541
    %v3543 = vsel %vm2255, %v3533, 0.0
    %v3544 = vadd.f32 %v3542, %v3543
    %v3545 = vrot.slane %v3544, 4
    %v3546 = vadd.f32 %v3544, %v3545
    %v3547 = vrot.slane %v3546, 2
    %v3548 = vadd.f32 %v3546, %v3547
    %v3549 = vrot.slane %v3548, 1
    %v3550 = vadd.f32 %v3548, %v3549
    %v3551 = vsel %vm2029, %v3535, 0.0
    %v3552 = vsel %vm2029, %v3537, 0.0
    %v3553 = vadd.f32 %v3551, %v3552
    %v3554 = vsel %vm2255, %v3539, 0.0
    %v3555 = vadd.f32 %v3553, %v3554
    %v3556 = vrot.slane %v3555, 4
    %v3557 = vadd.f32 %v3555, %v3556
    %v3558 = vrot.slane %v3557, 2
    %v3559 = vadd.f32 %v3557, %v3558
    %v3560 = vrot.slane %v3559, 1
    %v3561 = vadd.f32 %v3559, %v3560
    %v3562 = vlog2.pop %v3550
    %v3563 = vmul.f32 %v3562, 0.6931472
    %v3564 = vlog2.pop %v3561
    %v3565 = vmul.f32 %v3564, 0.6931472
    %v3566 = vadd.f32 %v3563, %v3510
    %v3567 = vadd.f32 %v3565, %v3521
    %v3570 = vsel %vm2077, %v3567, %v3566
    %v3572 = vsel %vm3448, %v3570, %v3246
    %v3573 = vlaneseq
    %v3574 = vshrl.u32 %v3573, 7
    %v3575 = vsub.s32 0, %v3574
    %v3576 = vrot.slane %v3343, %v3575
    %3578 = vbcast.lane.b32.xlu0 %v3576, 256
    %v3579 = vpop.permute.xlu0 %3578
    %s3581 = sor.u32 256, 8
    %3582 = vbcast.lane.b32.xlu0 %v3576, %s3581
    %v3583 = vpop.permute.xlu0 %3582
    %s3585 = sor.u32 256, 16
    %3586 = vbcast.lane.b32.xlu0 %v3576, %s3585
    %v3587 = vpop.permute.xlu0 %3586
    %v3588 = vlaneseq
    %v3589 = vshrl.u32 %v3588, 7
    %v3590 = vsub.s32 1, %v3589
    %v3591 = vrot.slane %v3343, %v3590
    %3593 = vbcast.lane.b32.xlu0 %v3591, 256
    %v3594 = vpop.permute.xlu0 %3593
    %s3596 = sor.u32 256, 8
    %3597 = vbcast.lane.b32.xlu0 %v3591, %s3596
    %v3598 = vpop.permute.xlu0 %3597
    %s3600 = sor.u32 256, 16
    %3601 = vbcast.lane.b32.xlu0 %v3591, %s3600
    %v3602 = vpop.permute.xlu0 %3601
    %v3603 = vadd.f32 %v3579, %v3458
    %v3604 = vadd.f32 %v3583, %v3459
    %v3605 = vadd.f32 %v3587, %v3460
    %v3606 = vadd.f32 %v3594, %v3461
    %v3607 = vadd.f32 %v3598, %v3462
    %v3608 = vadd.f32 %v3602, %v3463
    %v3609 = vsel %vm2029, %v3603, -inf
    %v3610 = vsel %vm2029, %v3604, -inf
    %v3611 = vsel %vm2255, %v3605, -inf
    %v3612 = vmax.f32 %v3609, %v3611
    %v3613 = vmax.f32 %v3612, %v3610
    %v3614 = vrot.slane %v3613, 4
    %v3615 = vmax.f32 %v3613, %v3614
    %v3616 = vrot.slane %v3615, 2
    %v3617 = vmax.f32 %v3615, %v3616
    %v3618 = vrot.slane %v3617, 1
    %v3619 = vmax.f32 %v3617, %v3618
    %v3620 = vsel %vm2029, %v3606, -inf
    %v3621 = vsel %vm2029, %v3607, -inf
    %v3622 = vsel %vm2255, %v3608, -inf
    %v3623 = vmax.f32 %v3620, %v3622
    %v3624 = vmax.f32 %v3623, %v3621
    %v3625 = vrot.slane %v3624, 4
    %v3626 = vmax.f32 %v3624, %v3625
    %v3627 = vrot.slane %v3626, 2
    %v3628 = vmax.f32 %v3626, %v3627
    %v3629 = vrot.slane %v3628, 1
    %v3630 = vmax.f32 %v3628, %v3629
    %vm3631 = vcmp.ge.f32.partialorder %v3603, %v3619
    %vm3632 = vcmp.ge.f32.partialorder %v3604, %v3619
    %vm3633 = vcmp.ge.f32.partialorder %v3605, %v3619
    %vm3634 = vcmp.ge.f32.partialorder %v3606, %v3630
    %vm3635 = vcmp.ge.f32.partialorder %v3607, %v3630
    %vm3636 = vcmp.ge.f32.partialorder %v3608, %v3630
    %v3637 = vsel %vm3631, %v2045, 19.0
    %v3638 = vsel %vm3632, %v2046, 19.0
    %v3639 = vsel %vm3633, %v2047, 19.0
    %v3640 = vsel %vm3634, %v2045, 19.0
    %v3641 = vsel %vm3635, %v2046, 19.0
    %v3642 = vsel %vm3636, %v2047, 19.0
    %v3643 = vsel %vm2029, %v3637, inf
    %v3644 = vsel %vm2029, %v3638, inf
    %v3645 = vsel %vm2255, %v3639, inf
    %v3646 = vmin.f32 %v3643, %v3645
    %v3647 = vmin.f32 %v3646, %v3644
    %v3648 = vrot.slane %v3647, 4
    %v3649 = vmin.f32 %v3647, %v3648
    %v3650 = vrot.slane %v3649, 2
    %v3651 = vmin.f32 %v3649, %v3650
    %v3652 = vrot.slane %v3651, 1
    %v3653 = vmin.f32 %v3651, %v3652
    %v3654 = vsel %vm2029, %v3640, inf
    %v3655 = vsel %vm2029, %v3641, inf
    %v3656 = vsel %vm2255, %v3642, inf
    %v3657 = vmin.f32 %v3654, %v3656
    %v3658 = vmin.f32 %v3657, %v3655
    %v3659 = vrot.slane %v3658, 4
    %v3660 = vmin.f32 %v3658, %v3659
    %v3661 = vrot.slane %v3660, 2
    %v3662 = vmin.f32 %v3660, %v3661
    %v3663 = vrot.slane %v3662, 1
    %v3664 = vmin.f32 %v3662, %v3663
    %v3667 = vsel %vm2077, %v3630, %v3619
    %v3669 = vsel %vm3448, %v3667, %v3343
    %v3672 = vsel %vm2077, %v3664, %v3653
    %v3674 = vsel %vm3448, %v3672, %v2040
    %v3675 = vsel %vm2029, %v3423, 0
    %3677 = vmatprep.subr.mxu0 0.0
    %3678 = vmatpush1.msra.mxu0 %v2035
    %3679 = vmatprep.subr.mxu0 0.0
    %3680 = vmatpush1.msra.mxu0 %v2036
    %3681 = vmatprep.subr.mxu0 0.0
    %3682 = vmatpush1.msra.mxu0 %v2096
    %3683 = vmatprep.subr.mxu0 0.0
    %3684 = vmatpush1.msra.mxu0 0.0
    %3685 = vmatprep.subr.mxu0 0.0
    %3686 = vmatpush1.msra.mxu0 0.0
    %3687 = vmatprep.subr.mxu0 0.0
    %3688 = vmatpush1.msra.mxu0 0.0
    %3689 = vmatprep.subr.mxu0 0.0
    %3690 = vmatpush1.msra.mxu0 0.0
    %3691 = vmatprep.subr.mxu0 0.0
    %3692 = vmatpush1.msra.mxu0 0.0
    %3693 = vmatprep.subr.mxu0 0.0
    %3694 = vmatpush1.msra.mxu0 0.0
    %3695 = vmatprep.subr.mxu0 0.0
    %3696 = vmatpush1.msra.mxu0 0.0
    %3697 = vmatprep.subr.mxu0 0.0
    %3698 = vmatpush1.msra.mxu0 0.0
    %3699 = vmatprep.subr.mxu0 0.0
    %3700 = vmatpush1.msra.mxu0 0.0
    %3701 = vmatprep.subr.mxu0 0.0
    %3702 = vmatpush1.msra.mxu0 0.0
    %3703 = vmatprep.subr.mxu0 0.0
    %3704 = vmatpush1.msra.mxu0 0.0
    %3705 = vmatprep.subr.mxu0 0.0
    %3706 = vmatpush1.msra.mxu0 0.0
    %3707 = vmatprep.subr.mxu0 0.0
    %3708 = vmatpush1.msra.mxu0 0.0
    %3709 = vmatprep.subr.mxu0 0.0
    %3710 = vmatpush1.msra.mxu0 0.0
    %3711 = vmatprep.subr.mxu0 0.0
    %3712 = vmatpush1.msra.mxu0 0.0
    %3713 = vmatprep.subr.mxu0 0.0
    %3714 = vmatpush1.msra.mxu0 0.0
    %3715 = vmatprep.subr.mxu0 0.0
    %3716 = vmatpush1.msra.mxu0 0.0
    %3717 = vmatprep.subr.mxu0 0.0
    %3718 = vmatpush1.msra.mxu0 0.0
    %3719 = vmatprep.subr.mxu0 0.0
    %3720 = vmatpush1.msra.mxu0 0.0
    %3721 = vmatprep.subr.mxu0 0.0
    %3722 = vmatpush1.msra.mxu0 0.0
    %3723 = vmatprep.subr.mxu0 0.0
    %3724 = vmatpush1.msra.mxu0 0.0
    %3725 = vmatprep.subr.mxu0 0.0
    %3726 = vmatpush1.msra.mxu0 0.0
    %3727 = vmatprep.subr.mxu0 0.0
    %3728 = vmatpush1.msra.mxu0 0.0
    %3729 = vmatprep.subr.mxu0 0.0
    %3730 = vmatpush1.msra.mxu0 0.0
    %3731 = vmatprep.subr.mxu0 0.0
    %3732 = vmatpush1.msra.mxu0 0.0
    %3733 = vmatprep.subr.mxu0 0.0
    %3734 = vmatpush1.msra.mxu0 0.0
    %3735 = vmatprep.subr.mxu0 0.0
    %3736 = vmatpush1.msra.mxu0 0.0
    %3737 = vmatprep.subr.mxu0 0.0
    %3738 = vmatpush1.msra.mxu0 0.0
    %3739 = vmatprep.subr.mxu0 0.0
    %3740 = vmatpush1.msra.mxu0 0.0
    %3741 = vmatprep.mubr.f32.mxu0 0.0
    %3742 = vmatmul.mubr.f32.gmra.mrb[0].mxu0 %v3675
    %v3743 = vpop.f32.mrb[0].mxu0
    %v3744 = vadd.f32 0.0, %v3743
    %v3745 = vpop.f32.mrb[0].mxu0
    %3746 = vdwg.mxu0
    %v3747 = vrot.slane %v2066, 6
    %v3748 = vrot.slane %v2067, 5
    %v3749 = vsel %vm2077, %v3748, %v3747
    %v3751 = vmul.f32 %v3744, %v3749
    %v3752 = vsel %vm2087, %v3751, 0.0
    %3753 = vadd.xlane.f32.xlu0 %v3752
    %v3754 = vpop.xlane.xlu0 %3753
    %vm3755 = vcmask 1047559
    %v3756 = vsel %vm3755, %v2179, %v2175
    %vm3758 = vcmask 154630
    %v3759 = vsel %vm3758, %v3756, 0.0
    %3760 = vadd.xlane.f32.xlu0 %v3759
    %v3761 = vpop.xlane.xlu0 %3760
    %v3763 = vrot.slane %v3761, 6
    %v3765 = vadd.f32 %v3754, %v3763
    %3766 = vrot.lane.b32.xlu0 %v77, 122
    %v3767 = vpop.permute.xlu0 %3766
    %v3769 = vmul.f32 %v3765, %v3767
    %v3770 = vadd.f32 %v3444, %v3769
    %3771 = vset.pattern.permute.xlu0 6
    %3772 = vperm.xlu0 %3771, %v2197
    %v3773 = vpop.permute.xlu0 %3772
    %vm3774 = vcmp.eq.s32.totalorder %v3773, 1
    %v3775 = vsel %vm3774, %v3749, %v3449
    %v3776 = vlaneseq
    %v3777 = vshrl.u32 %v3776, 7
    %v3778 = vsub.s32 6, %v3777
    %v3779 = vrot.slane %v2023, %v3778
    %v3780 = vlaneseq
    %v3781 = vshrl.u32 %v3780, 7
    %v3782 = vsub.s32 6, %v3781
    %v3783 = vrot.slane %v2026, %v3782
    %v3784 = vadd.f32 %v2035, %v3779
    %v3785 = vadd.f32 %v2036, %v3779
    %v3786 = vadd.f32 %v2037, %v3779
    %v3787 = vadd.f32 %v2035, %v3783
    %v3788 = vadd.f32 %v2036, %v3783
    %v3789 = vadd.f32 %v2037, %v3783
    %v3790 = vlaneseq
    %v3791 = vshrl.u32 %v3790, 7
    %v3792 = vsub.s32 0, %v3791
    %v3793 = vrot.slane %v3572, %v3792
    %3795 = vbcast.lane.b32.xlu0 %v3793, 256
    %v3796 = vpop.permute.xlu0 %3795
    %s3798 = sor.u32 256, 8
    %3799 = vbcast.lane.b32.xlu0 %v3793, %s3798
    %v3800 = vpop.permute.xlu0 %3799
    %s3802 = sor.u32 256, 16
    %3803 = vbcast.lane.b32.xlu0 %v3793, %s3802
    %v3804 = vpop.permute.xlu0 %3803
    %v3805 = vlaneseq
    %v3806 = vshrl.u32 %v3805, 7
    %v3807 = vsub.s32 1, %v3806
    %v3808 = vrot.slane %v3572, %v3807
    %3810 = vbcast.lane.b32.xlu0 %v3808, 256
    %v3811 = vpop.permute.xlu0 %3810
    %s3813 = sor.u32 256, 8
    %3814 = vbcast.lane.b32.xlu0 %v3808, %s3813
    %v3815 = vpop.permute.xlu0 %3814
    %s3817 = sor.u32 256, 16
    %3818 = vbcast.lane.b32.xlu0 %v3808, %s3817
    %v3819 = vpop.permute.xlu0 %3818
    %v3820 = vadd.f32 %v3796, %v3784
    %v3821 = vadd.f32 %v3800, %v3785
    %v3822 = vadd.f32 %v3804, %v3786
    %v3823 = vadd.f32 %v3811, %v3787
    %v3824 = vadd.f32 %v3815, %v3788
    %v3825 = vadd.f32 %v3819, %v3789
    %v3826 = vsel %vm2029, %v3820, -inf
    %v3827 = vsel %vm2029, %v3821, -inf
    %v3828 = vsel %vm2255, %v3822, -inf
    %v3829 = vmax.f32 %v3826, %v3828
    %v3830 = vmax.f32 %v3829, %v3827
    %v3831 = vrot.slane %v3830, 4
    %v3832 = vmax.f32 %v3830, %v3831
    %v3833 = vrot.slane %v3832, 2
    %v3834 = vmax.f32 %v3832, %v3833
    %v3835 = vrot.slane %v3834, 1
    %v3836 = vmax.f32 %v3834, %v3835
    %v3837 = vsel %vm2029, %v3823, -inf
    %v3838 = vsel %vm2029, %v3824, -inf
    %v3839 = vsel %vm2255, %v3825, -inf
    %v3840 = vmax.f32 %v3837, %v3839
    %v3841 = vmax.f32 %v3840, %v3838
    %v3842 = vrot.slane %v3841, 4
    %v3843 = vmax.f32 %v3841, %v3842
    %v3844 = vrot.slane %v3843, 2
    %v3845 = vmax.f32 %v3843, %v3844
    %v3846 = vrot.slane %v3845, 1
    %v3847 = vmax.f32 %v3845, %v3846
    %v3848 = vsub.f32 %v3820, %v3836
    %v3849 = vsub.f32 %v3821, %v3836
    %v3850 = vsub.f32 %v3822, %v3836
    %v3851 = vsub.f32 %v3823, %v3847
    %v3852 = vsub.f32 %v3824, %v3847
    %v3853 = vsub.f32 %v3825, %v3847
    %v3854 = vmul.f32 %v3848, 1.442695
    %v3855 = vpow.pop %v3854
    %v3856 = vmul.f32 %v3849, 1.442695
    %v3857 = vpow.pop %v3856
    %v3858 = vmul.f32 %v3850, 1.442695
    %v3859 = vpow.pop %v3858
    %v3860 = vmul.f32 %v3851, 1.442695
    %v3861 = vpow.pop %v3860
    %v3862 = vmul.f32 %v3852, 1.442695
    %v3863 = vpow.pop %v3862
    %v3864 = vmul.f32 %v3853, 1.442695
    %v3865 = vpow.pop %v3864
    %v3866 = vsel %vm2029, %v3855, 0.0
    %v3867 = vsel %vm2029, %v3857, 0.0
    %v3868 = vadd.f32 %v3866, %v3867
    %v3869 = vsel %vm2255, %v3859, 0.0
    %v3870 = vadd.f32 %v3868, %v3869
    %v3871 = vrot.slane %v3870, 4
    %v3872 = vadd.f32 %v3870, %v3871
    %v3873 = vrot.slane %v3872, 2
    %v3874 = vadd.f32 %v3872, %v3873
    %v3875 = vrot.slane %v3874, 1
    %v3876 = vadd.f32 %v3874, %v3875
    %v3877 = vsel %vm2029, %v3861, 0.0
    %v3878 = vsel %vm2029, %v3863, 0.0
    %v3879 = vadd.f32 %v3877, %v3878
    %v3880 = vsel %vm2255, %v3865, 0.0
    %v3881 = vadd.f32 %v3879, %v3880
    %v3882 = vrot.slane %v3881, 4
    %v3883 = vadd.f32 %v3881, %v3882
    %v3884 = vrot.slane %v3883, 2
    %v3885 = vadd.f32 %v3883, %v3884
    %v3886 = vrot.slane %v3885, 1
    %v3887 = vadd.f32 %v3885, %v3886
    %v3888 = vlog2.pop %v3876
    %v3889 = vmul.f32 %v3888, 0.6931472
    %v3890 = vlog2.pop %v3887
    %v3891 = vmul.f32 %v3890, 0.6931472
    %v3892 = vadd.f32 %v3889, %v3836
    %v3893 = vadd.f32 %v3891, %v3847
    %v3896 = vsel %vm2077, %v3893, %v3892
    %v3898 = vsel %vm3774, %v3896, %v3572
    %v3899 = vlaneseq
    %v3900 = vshrl.u32 %v3899, 7
    %v3901 = vsub.s32 0, %v3900
    %v3902 = vrot.slane %v3669, %v3901
    %3904 = vbcast.lane.b32.xlu0 %v3902, 256
    %v3905 = vpop.permute.xlu0 %3904
    %s3907 = sor.u32 256, 8
    %3908 = vbcast.lane.b32.xlu0 %v3902, %s3907
    %v3909 = vpop.permute.xlu0 %3908
    %s3911 = sor.u32 256, 16
    %3912 = vbcast.lane.b32.xlu0 %v3902, %s3911
    %v3913 = vpop.permute.xlu0 %3912
    %v3914 = vlaneseq
    %v3915 = vshrl.u32 %v3914, 7
    %v3916 = vsub.s32 1, %v3915
    %v3917 = vrot.slane %v3669, %v3916
    %3919 = vbcast.lane.b32.xlu0 %v3917, 256
    %v3920 = vpop.permute.xlu0 %3919
    %s3922 = sor.u32 256, 8
    %3923 = vbcast.lane.b32.xlu0 %v3917, %s3922
    %v3924 = vpop.permute.xlu0 %3923
    %s3926 = sor.u32 256, 16
    %3927 = vbcast.lane.b32.xlu0 %v3917, %s3926
    %v3928 = vpop.permute.xlu0 %3927
    %v3929 = vadd.f32 %v3905, %v3784
    %v3930 = vadd.f32 %v3909, %v3785
    %v3931 = vadd.f32 %v3913, %v3786
    %v3932 = vadd.f32 %v3920, %v3787
    %v3933 = vadd.f32 %v3924, %v3788
    %v3934 = vadd.f32 %v3928, %v3789
    %v3935 = vsel %vm2029, %v3929, -inf
    %v3936 = vsel %vm2029, %v3930, -inf
    %v3937 = vsel %vm2255, %v3931, -inf
    %v3938 = vmax.f32 %v3935, %v3937
    %v3939 = vmax.f32 %v3938, %v3936
    %v3940 = vrot.slane %v3939, 4
    %v3941 = vmax.f32 %v3939, %v3940
    %v3942 = vrot.slane %v3941, 2
    %v3943 = vmax.f32 %v3941, %v3942
    %v3944 = vrot.slane %v3943, 1
    %v3945 = vmax.f32 %v3943, %v3944
    %v3946 = vsel %vm2029, %v3932, -inf
    %v3947 = vsel %vm2029, %v3933, -inf
    %v3948 = vsel %vm2255, %v3934, -inf
    %v3949 = vmax.f32 %v3946, %v3948
    %v3950 = vmax.f32 %v3949, %v3947
    %v3951 = vrot.slane %v3950, 4
    %v3952 = vmax.f32 %v3950, %v3951
    %v3953 = vrot.slane %v3952, 2
    %v3954 = vmax.f32 %v3952, %v3953
    %v3955 = vrot.slane %v3954, 1
    %v3956 = vmax.f32 %v3954, %v3955
    %vm3957 = vcmp.ge.f32.partialorder %v3929, %v3945
    %vm3958 = vcmp.ge.f32.partialorder %v3930, %v3945
    %vm3959 = vcmp.ge.f32.partialorder %v3931, %v3945
    %vm3960 = vcmp.ge.f32.partialorder %v3932, %v3956
    %vm3961 = vcmp.ge.f32.partialorder %v3933, %v3956
    %vm3962 = vcmp.ge.f32.partialorder %v3934, %v3956
    %v3963 = vsel %vm3957, %v2045, 19.0
    %v3964 = vsel %vm3958, %v2046, 19.0
    %v3965 = vsel %vm3959, %v2047, 19.0
    %v3966 = vsel %vm3960, %v2045, 19.0
    %v3967 = vsel %vm3961, %v2046, 19.0
    %v3968 = vsel %vm3962, %v2047, 19.0
    %v3969 = vsel %vm2029, %v3963, inf
    %v3970 = vsel %vm2029, %v3964, inf
    %v3971 = vsel %vm2255, %v3965, inf
    %v3972 = vmin.f32 %v3969, %v3971
    %v3973 = vmin.f32 %v3972, %v3970
    %v3974 = vrot.slane %v3973, 4
    %v3975 = vmin.f32 %v3973, %v3974
    %v3976 = vrot.slane %v3975, 2
    %v3977 = vmin.f32 %v3975, %v3976
    %v3978 = vrot.slane %v3977, 1
    %v3979 = vmin.f32 %v3977, %v3978
    %v3980 = vsel %vm2029, %v3966, inf
    %v3981 = vsel %vm2029, %v3967, inf
    %v3982 = vsel %vm2255, %v3968, inf
    %v3983 = vmin.f32 %v3980, %v3982
    %v3984 = vmin.f32 %v3983, %v3981
    %v3985 = vrot.slane %v3984, 4
    %v3986 = vmin.f32 %v3984, %v3985
    %v3987 = vrot.slane %v3986, 2
    %v3988 = vmin.f32 %v3986, %v3987
    %v3989 = vrot.slane %v3988, 1
    %v3990 = vmin.f32 %v3988, %v3989
    %v3993 = vsel %vm2077, %v3956, %v3945
    %v3995 = vsel %vm3774, %v3993, %v3669
    %v3998 = vsel %vm2077, %v3990, %v3979
    %v4000 = vsel %vm3774, %v3998, %v2040
    %v4001 = vsel %vm2029, %v3749, 0
    %4003 = vmatprep.subr.mxu0 0.0
    %4004 = vmatpush1.msra.mxu0 %v2035
    %4005 = vmatprep.subr.mxu0 0.0
    %4006 = vmatpush1.msra.mxu0 %v2036
    %4007 = vmatprep.subr.mxu0 0.0
    %4008 = vmatpush1.msra.mxu0 %v2096
    %4009 = vmatprep.subr.mxu0 0.0
    %4010 = vmatpush1.msra.mxu0 0.0
    %4011 = vmatprep.subr.mxu0 0.0
    %4012 = vmatpush1.msra.mxu0 0.0
    %4013 = vmatprep.subr.mxu0 0.0
    %4014 = vmatpush1.msra.mxu0 0.0
    %4015 = vmatprep.subr.mxu0 0.0
    %4016 = vmatpush1.msra.mxu0 0.0
    %4017 = vmatprep.subr.mxu0 0.0
    %4018 = vmatpush1.msra.mxu0 0.0
    %4019 = vmatprep.subr.mxu0 0.0
    %4020 = vmatpush1.msra.mxu0 0.0
    %4021 = vmatprep.subr.mxu0 0.0
    %4022 = vmatpush1.msra.mxu0 0.0
    %4023 = vmatprep.subr.mxu0 0.0
    %4024 = vmatpush1.msra.mxu0 0.0
    %4025 = vmatprep.subr.mxu0 0.0
    %4026 = vmatpush1.msra.mxu0 0.0
    %4027 = vmatprep.subr.mxu0 0.0
    %4028 = vmatpush1.msra.mxu0 0.0
    %4029 = vmatprep.subr.mxu0 0.0
    %4030 = vmatpush1.msra.mxu0 0.0
    %4031 = vmatprep.subr.mxu0 0.0
    %4032 = vmatpush1.msra.mxu0 0.0
    %4033 = vmatprep.subr.mxu0 0.0
    %4034 = vmatpush1.msra.mxu0 0.0
    %4035 = vmatprep.subr.mxu0 0.0
    %4036 = vmatpush1.msra.mxu0 0.0
    %4037 = vmatprep.subr.mxu0 0.0
    %4038 = vmatpush1.msra.mxu0 0.0
    %4039 = vmatprep.subr.mxu0 0.0
    %4040 = vmatpush1.msra.mxu0 0.0
    %4041 = vmatprep.subr.mxu0 0.0
    %4042 = vmatpush1.msra.mxu0 0.0
    %4043 = vmatprep.subr.mxu0 0.0
    %4044 = vmatpush1.msra.mxu0 0.0
    %4045 = vmatprep.subr.mxu0 0.0
    %4046 = vmatpush1.msra.mxu0 0.0
    %4047 = vmatprep.subr.mxu0 0.0
    %4048 = vmatpush1.msra.mxu0 0.0
    %4049 = vmatprep.subr.mxu0 0.0
    %4050 = vmatpush1.msra.mxu0 0.0
    %4051 = vmatprep.subr.mxu0 0.0
    %4052 = vmatpush1.msra.mxu0 0.0
    %4053 = vmatprep.subr.mxu0 0.0
    %4054 = vmatpush1.msra.mxu0 0.0
    %4055 = vmatprep.subr.mxu0 0.0
    %4056 = vmatpush1.msra.mxu0 0.0
    %4057 = vmatprep.subr.mxu0 0.0
    %4058 = vmatpush1.msra.mxu0 0.0
    %4059 = vmatprep.subr.mxu0 0.0
    %4060 = vmatpush1.msra.mxu0 0.0
    %4061 = vmatprep.subr.mxu0 0.0
    %4062 = vmatpush1.msra.mxu0 0.0
    %4063 = vmatprep.subr.mxu0 0.0
    %4064 = vmatpush1.msra.mxu0 0.0
    %4065 = vmatprep.subr.mxu0 0.0
    %4066 = vmatpush1.msra.mxu0 0.0
    %4067 = vmatprep.mubr.f32.mxu0 0.0
    %4068 = vmatmul.mubr.f32.gmra.mrb[0].mxu0 %v4001
    %v4069 = vpop.f32.mrb[0].mxu0
    %v4070 = vadd.f32 0.0, %v4069
    %v4071 = vpop.f32.mrb[0].mxu0
    %4072 = vdwg.mxu0
    %v4073 = vrot.slane %v2066, 7
    %v4074 = vrot.slane %v2067, 6
    %v4075 = vsel %vm2077, %v4074, %v4073
    %v4077 = vmul.f32 %v4070, %v4075
    %v4078 = vsel %vm2087, %v4077, 0.0
    %4079 = vadd.xlane.f32.xlu0 %v4078
    %v4080 = vpop.xlane.xlu0 %4079
    %vm4083 = vcmask 154631
    %v4084 = vsel %vm4083, %v2175, 0.0
    %4085 = vadd.xlane.f32.xlu0 %v4084
    %v4086 = vpop.xlane.xlu0 %4085
    %vm4087 = vcmask 147456
    %v4088 = vsel %vm4087, %v2179, 0.0
    %4089 = vadd.xlane.f32.xlu0 %v4088
    %v4090 = vpop.xlane.xlu0 %4089
    %vm4093 = vcmask 1040384
    %v4094 = vrot.slane %v4086, 7
    %v4095 = vrot.slane %v4090, 7
    %v4096 = vsel %vm4093, %v4094, %v4095
    %v4098 = vadd.f32 %v4080, %v4096
    %4099 = vrot.lane.b32.xlu0 %v77, 121
    %v4100 = vpop.permute.xlu0 %4099
    %v4102 = vmul.f32 %v4098, %v4100
    %v4103 = vadd.f32 %v3770, %v4102
    %4104 = vset.pattern.permute.xlu0 7
    %4105 = vperm.xlu0 %4104, %v2197
    %v4106 = vpop.permute.xlu0 %4105
    %vm4107 = vcmp.eq.s32.totalorder %v4106, 1
    %v4108 = vsel %vm4107, %v4075, %v3775
    %v4109 = vlaneseq
    %v4110 = vshrl.u32 %v4109, 7
    %v4111 = vsub.s32 7, %v4110
    %v4112 = vrot.slane %v2023, %v4111
    %v4113 = vlaneseq
    %v4114 = vshrl.u32 %v4113, 7
    %v4115 = vsub.s32 7, %v4114
    %v4116 = vrot.slane %v2026, %v4115
    %v4117 = vadd.f32 %v2035, %v4112
    %v4118 = vadd.f32 %v2036, %v4112
    %v4119 = vadd.f32 %v2037, %v4112
    %v4120 = vadd.f32 %v2035, %v4116
    %v4121 = vadd.f32 %v2036, %v4116
    %v4122 = vadd.f32 %v2037, %v4116
    %v4123 = vlaneseq
    %v4124 = vshrl.u32 %v4123, 7
    %v4125 = vsub.s32 0, %v4124
    %v4126 = vrot.slane %v3898, %v4125
    %4128 = vbcast.lane.b32.xlu0 %v4126, 256
    %v4129 = vpop.permute.xlu0 %4128
    %s4131 = sor.u32 256, 8
    %4132 = vbcast.lane.b32.xlu0 %v4126, %s4131
    %v4133 = vpop.permute.xlu0 %4132
    %s4135 = sor.u32 256, 16
    %4136 = vbcast.lane.b32.xlu0 %v4126, %s4135
    %v4137 = vpop.permute.xlu0 %4136
    %v4138 = vlaneseq
    %v4139 = vshrl.u32 %v4138, 7
    %v4140 = vsub.s32 1, %v4139
    %v4141 = vrot.slane %v3898, %v4140
    %4143 = vbcast.lane.b32.xlu0 %v4141, 256
    %v4144 = vpop.permute.xlu0 %4143
    %s4146 = sor.u32 256, 8
    %4147 = vbcast.lane.b32.xlu0 %v4141, %s4146
    %v4148 = vpop.permute.xlu0 %4147
    %s4150 = sor.u32 256, 16
    %4151 = vbcast.lane.b32.xlu0 %v4141, %s4150
    %v4152 = vpop.permute.xlu0 %4151
    %v4153 = vadd.f32 %v4129, %v4117
    %v4154 = vadd.f32 %v4133, %v4118
    %v4155 = vadd.f32 %v4137, %v4119
    %v4156 = vadd.f32 %v4144, %v4120
    %v4157 = vadd.f32 %v4148, %v4121
    %v4158 = vadd.f32 %v4152, %v4122
    %v4159 = vsel %vm2029, %v4153, -inf
    %v4160 = vsel %vm2029, %v4154, -inf
    %v4161 = vsel %vm2255, %v4155, -inf
    %v4162 = vmax.f32 %v4159, %v4161
    %v4163 = vmax.f32 %v4162, %v4160
    %v4164 = vrot.slane %v4163, 4
    %v4165 = vmax.f32 %v4163, %v4164
    %v4166 = vrot.slane %v4165, 2
    %v4167 = vmax.f32 %v4165, %v4166
    %v4168 = vrot.slane %v4167, 1
    %v4169 = vmax.f32 %v4167, %v4168
    %v4170 = vsel %vm2029, %v4156, -inf
    %v4171 = vsel %vm2029, %v4157, -inf
    %v4172 = vsel %vm2255, %v4158, -inf
    %v4173 = vmax.f32 %v4170, %v4172
    %v4174 = vmax.f32 %v4173, %v4171
    %v4175 = vrot.slane %v4174, 4
    %v4176 = vmax.f32 %v4174, %v4175
    %v4177 = vrot.slane %v4176, 2
    %v4178 = vmax.f32 %v4176, %v4177
    %v4179 = vrot.slane %v4178, 1
    %v4180 = vmax.f32 %v4178, %v4179
    %v4181 = vsub.f32 %v4153, %v4169
    %v4182 = vsub.f32 %v4154, %v4169
    %v4183 = vsub.f32 %v4155, %v4169
    %v4184 = vsub.f32 %v4156, %v4180
    %v4185 = vsub.f32 %v4157, %v4180
    %v4186 = vsub.f32 %v4158, %v4180
    %v4187 = vmul.f32 %v4181, 1.442695
    %v4188 = vpow.pop %v4187
    %v4189 = vmul.f32 %v4182, 1.442695
    %v4190 = vpow.pop %v4189
    %v4191 = vmul.f32 %v4183, 1.442695
    %v4192 = vpow.pop %v4191
    %v4193 = vmul.f32 %v4184, 1.442695
    %v4194 = vpow.pop %v4193
    %v4195 = vmul.f32 %v4185, 1.442695
    %v4196 = vpow.pop %v4195
    %v4197 = vmul.f32 %v4186, 1.442695
    %v4198 = vpow.pop %v4197
    %v4199 = vsel %vm2029, %v4188, 0.0
    %v4200 = vsel %vm2029, %v4190, 0.0
    %v4201 = vadd.f32 %v4199, %v4200
    %v4202 = vsel %vm2255, %v4192, 0.0
    %v4203 = vadd.f32 %v4201, %v4202
    %v4204 = vrot.slane %v4203, 4
    %v4205 = vadd.f32 %v4203, %v4204
    %v4206 = vrot.slane %v4205, 2
    %v4207 = vadd.f32 %v4205, %v4206
    %v4208 = vrot.slane %v4207, 1
    %v4209 = vadd.f32 %v4207, %v4208
    %v4210 = vsel %vm2029, %v4194, 0.0
    %v4211 = vsel %vm2029, %v4196, 0.0
    %v4212 = vadd.f32 %v4210, %v4211
    %v4213 = vsel %vm2255, %v4198, 0.0
    %v4214 = vadd.f32 %v4212, %v4213
    %v4215 = vrot.slane %v4214, 4
    %v4216 = vadd.f32 %v4214, %v4215
    %v4217 = vrot.slane %v4216, 2
    %v4218 = vadd.f32 %v4216, %v4217
    %v4219 = vrot.slane %v4218, 1
    %v4220 = vadd.f32 %v4218, %v4219
    %v4221 = vlog2.pop %v4209
    %v4222 = vmul.f32 %v4221, 0.6931472
    %v4223 = vlog2.pop %v4220
    %v4224 = vmul.f32 %v4223, 0.6931472
    %v4225 = vadd.f32 %v4222, %v4169
    %v4226 = vadd.f32 %v4224, %v4180
    %v4229 = vsel %vm2077, %v4226, %v4225
    %v4231 = vsel %vm4107, %v4229, %v3898
    %v4232 = vlaneseq
    %v4233 = vshrl.u32 %v4232, 7
    %v4234 = vsub.s32 0, %v4233
    %v4235 = vrot.slane %v3995, %v4234
    %4237 = vbcast.lane.b32.xlu0 %v4235, 256
    %v4238 = vpop.permute.xlu0 %4237
    %s4240 = sor.u32 256, 8
    %4241 = vbcast.lane.b32.xlu0 %v4235, %s4240
    %v4242 = vpop.permute.xlu0 %4241
    %s4244 = sor.u32 256, 16
    %4245 = vbcast.lane.b32.xlu0 %v4235, %s4244
    %v4246 = vpop.permute.xlu0 %4245
    %v4247 = vlaneseq
    %v4248 = vshrl.u32 %v4247, 7
    %v4249 = vsub.s32 1, %v4248
    %v4250 = vrot.slane %v3995, %v4249
    %4252 = vbcast.lane.b32.xlu0 %v4250, 256
    %v4253 = vpop.permute.xlu0 %4252
    %s4255 = sor.u32 256, 8
    %4256 = vbcast.lane.b32.xlu0 %v4250, %s4255
    %v4257 = vpop.permute.xlu0 %4256
    %s4259 = sor.u32 256, 16
    %4260 = vbcast.lane.b32.xlu0 %v4250, %s4259
    %v4261 = vpop.permute.xlu0 %4260
    %v4262 = vadd.f32 %v4238, %v4117
    %v4263 = vadd.f32 %v4242, %v4118
    %v4264 = vadd.f32 %v4246, %v4119
    %v4265 = vadd.f32 %v4253, %v4120
    %v4266 = vadd.f32 %v4257, %v4121
    %v4267 = vadd.f32 %v4261, %v4122
    %v4268 = vsel %vm2029, %v4262, -inf
    %v4269 = vsel %vm2029, %v4263, -inf
    %v4270 = vsel %vm2255, %v4264, -inf
    %v4271 = vmax.f32 %v4268, %v4270
    %v4272 = vmax.f32 %v4271, %v4269
    %v4273 = vrot.slane %v4272, 4
    %v4274 = vmax.f32 %v4272, %v4273
    %v4275 = vrot.slane %v4274, 2
    %v4276 = vmax.f32 %v4274, %v4275
    %v4277 = vrot.slane %v4276, 1
    %v4278 = vmax.f32 %v4276, %v4277
    %v4279 = vsel %vm2029, %v4265, -inf
    %v4280 = vsel %vm2029, %v4266, -inf
    %v4281 = vsel %vm2255, %v4267, -inf
    %v4282 = vmax.f32 %v4279, %v4281
    %v4283 = vmax.f32 %v4282, %v4280
    %v4284 = vrot.slane %v4283, 4
    %v4285 = vmax.f32 %v4283, %v4284
    %v4286 = vrot.slane %v4285, 2
    %v4287 = vmax.f32 %v4285, %v4286
    %v4288 = vrot.slane %v4287, 1
    %v4289 = vmax.f32 %v4287, %v4288
    %vm4290 = vcmp.ge.f32.partialorder %v4262, %v4278
    %vm4291 = vcmp.ge.f32.partialorder %v4263, %v4278
    %vm4292 = vcmp.ge.f32.partialorder %v4264, %v4278
    %vm4293 = vcmp.ge.f32.partialorder %v4265, %v4289
    %vm4294 = vcmp.ge.f32.partialorder %v4266, %v4289
    %vm4295 = vcmp.ge.f32.partialorder %v4267, %v4289
    %v4296 = vsel %vm4290, %v2045, 19.0
    %v4297 = vsel %vm4291, %v2046, 19.0
    %v4298 = vsel %vm4292, %v2047, 19.0
    %v4299 = vsel %vm4293, %v2045, 19.0
    %v4300 = vsel %vm4294, %v2046, 19.0
    %v4301 = vsel %vm4295, %v2047, 19.0
    %v4302 = vsel %vm2029, %v4296, inf
    %v4303 = vsel %vm2029, %v4297, inf
    %v4304 = vsel %vm2255, %v4298, inf
    %v4305 = vmin.f32 %v4302, %v4304
    %v4306 = vmin.f32 %v4305, %v4303
    %v4307 = vrot.slane %v4306, 4
    %v4308 = vmin.f32 %v4306, %v4307
    %v4309 = vrot.slane %v4308, 2
    %v4310 = vmin.f32 %v4308, %v4309
    %v4311 = vrot.slane %v4310, 1
    %v4312 = vmin.f32 %v4310, %v4311
    %v4313 = vsel %vm2029, %v4299, inf
    %v4314 = vsel %vm2029, %v4300, inf
    %v4315 = vsel %vm2255, %v4301, inf
    %v4316 = vmin.f32 %v4313, %v4315
    %v4317 = vmin.f32 %v4316, %v4314
    %v4318 = vrot.slane %v4317, 4
    %v4319 = vmin.f32 %v4317, %v4318
    %v4320 = vrot.slane %v4319, 2
    %v4321 = vmin.f32 %v4319, %v4320
    %v4322 = vrot.slane %v4321, 1
    %v4323 = vmin.f32 %v4321, %v4322
    %v4326 = vsel %vm2077, %v4289, %v4278
    %v4328 = vsel %vm4107, %v4326, %v3995
    %v4331 = vsel %vm2077, %v4323, %v4312
    %v4333 = vsel %vm4107, %v4331, %v2040
    %v4335 = vlaneseq
    %v4336 = vshrl.u32 %v4335, 7
    %v4337 = vsub.s32 0, %v4336
    %v4338 = vrot.slane %v2034, %v4337
    %v4340 = vmul.f32 %v4338, %v4108
    %v4341 = vsel %vm2087, %v4340, 0.0
    %4342 = vadd.xlane.f32.xlu0 %v4341
    %v4343 = vpop.xlane.xlu0 %4342
    %v4344 = vadd.f32 %v4103, %v4343
    %v4345 = vadd.f32 %v4231, %v4338
    %v4346 = vsel %vm2087, %v4345, -inf
    %4347 = vmax.xlane.f32.xlu0 %v4346
    %v4348 = vpop.xlane.xlu0 %4347
    %v4349 = vsub.f32 %v4345, %v4348
    %v4350 = vmul.f32 %v4349, 1.442695
    %v4351 = vpow.pop %v4350
    %v4352 = vsel %vm2087, %v4351, 0.0
    %4353 = vadd.xlane.f32.xlu0 %v4352
    %v4354 = vpop.xlane.xlu0 %4353
    %v4355 = vlog2.pop %v4354
    %v4356 = vmul.f32 %v4355, 0.6931472
    %v4357 = vadd.f32 %v4356, %v4348
    %v4358 = vsub.f32 %v4344, %v4357
    %vm4359 = vcmask 1024
    %4360 = vst.msk [vmem:[%s23] sm:$0x3] %vm4359, %v4358
    %v4361 = vadd.f32 %v4328, %v4338
    %v4362 = vsel %vm2087, %v4361, -inf
    %4363 = vmax.xlane.f32.xlu0 %v4362
    %v4364 = vpop.xlane.xlu0 %4363
    %vm4365 = vcmp.ge.f32.partialorder %v4361, %v4364
    %v4366 = vsel %vm4365, %v2040, 19.0
    %v4367 = vsel %vm2087, %v4366, inf
    %4368 = vmin.xlane.f32.xlu0 %v4367
    %v4369 = vpop.xlane.xlu0 %4368
    %vm4370 = vcmp.eq.f32.partialorder %v2040, %v4369
    %v4371 = vsel %vm4370, 1, 0
    %v4372 = vcvt.s32.f32 %v4371
    %v4373 = vmul.f32 %v4372, %v4333
    %v4374 = vsel %vm2087, %v4373, 0.0
    %4375 = vadd.xlane.f32.xlu0 %v4374
    %v4376 = vpop.xlane.xlu0 %4375
    %vm4377 = vcmp.eq.f32.partialorder %v2040, %v4376
    %v4378 = vsel %vm4377, 1, 0
    %v4379 = vcvt.s32.f32 %v4378
    %v4380 = vmul.f32 %v4379, %v4000
    %v4381 = vsel %vm2087, %v4380, 0.0
    %4382 = vadd.xlane.f32.xlu0 %v4381
    %v4383 = vpop.xlane.xlu0 %4382
    %vm4384 = vcmp.eq.f32.partialorder %v2040, %v4383
    %v4385 = vsel %vm4384, 1, 0
    %v4386 = vcvt.s32.f32 %v4385
    %v4387 = vmul.f32 %v4386, %v3674
    %v4388 = vsel %vm2087, %v4387, 0.0
    %4389 = vadd.xlane.f32.xlu0 %v4388
    %v4390 = vpop.xlane.xlu0 %4389
    %vm4391 = vcmp.eq.f32.partialorder %v2040, %v4390
    %v4392 = vsel %vm4391, 1, 0
    %v4393 = vcvt.s32.f32 %v4392
    %v4394 = vmul.f32 %v4393, %v3348
    %v4395 = vsel %vm2087, %v4394, 0.0
    %4396 = vadd.xlane.f32.xlu0 %v4395
    %v4397 = vpop.xlane.xlu0 %4396
    %vm4398 = vcmp.eq.f32.partialorder %v2040, %v4397
    %v4399 = vsel %vm4398, 1, 0
    %v4400 = vcvt.s32.f32 %v4399
    %v4401 = vmul.f32 %v4400, %v3022
    %v4402 = vsel %vm2087, %v4401, 0.0
    %4403 = vadd.xlane.f32.xlu0 %v4402
    %v4404 = vpop.xlane.xlu0 %4403
    %vm4405 = vcmp.eq.f32.partialorder %v2040, %v4404
    %v4406 = vsel %vm4405, 1, 0
    %v4407 = vcvt.s32.f32 %v4406
    %v4408 = vmul.f32 %v4407, %v2696
    %v4409 = vsel %vm2087, %v4408, 0.0
    %4410 = vadd.xlane.f32.xlu0 %v4409
    %v4411 = vpop.xlane.xlu0 %4410
    %vm4412 = vcmp.eq.f32.partialorder %v2040, %v4411
    %v4413 = vsel %vm4412, 1, 0
    %v4414 = vcvt.s32.f32 %v4413
    %v4415 = vmul.f32 %v4414, %v2370
    %v4416 = vsel %vm2087, %v4415, 0.0
    %4417 = vadd.xlane.f32.xlu0 %v4416
    %v4418 = vpop.xlane.xlu0 %4417
    %vm4419 = vcmask 7168
    %v4420 = vsel %vm4419, %v4418, %v4411
    %vm4421 = vcmask 15360
    %v4422 = vsel %vm4421, %v4420, %v4404
    %vm4423 = vcmask 23552
    %v4424 = vsel %vm4423, %v4422, %v4397
    %vm4425 = vcmask 31744
    %v4426 = vsel %vm4425, %v4424, %v4390
    %vm4427 = vcmask 39936
    %v4428 = vsel %vm4427, %v4426, %v4383
    %vm4429 = vcmask 48128
    %v4430 = vsel %vm4429, %v4428, %v4376
    %vm4431 = vcmask 56320
    %v4432 = vsel %vm4431, %v4430, %v4369
    %v4433 = vcvt.f32.s32.to.zero.pseudo %v4432
    %vm4434 = vcmask 58368
    %4435 = vst.msk [vmem:[#allocation4] sm:$0x3] %vm4434, %v4433
    // Predicated region
    $region90: #{_bert_ner_jit.1} parent=1 // pred_check
      _
    $region91: #{_bert_ner_jit.1} parent=1 // pred_check_branch
      %4437 = sbr.rel (0) target = $region93
    $region92: #{_bert_ner_jit.1} parent=1 // pred_region
      %s4439 = ssub.s32 256, 256
      %4440 = vsyncadd [#allocation3], %s4439
      %s4441 = sshll.u32 [#allocation2], 4
      %s4442 = int_to_ptr.vmem [resolvable:$true] %s4441
      %4447 = dma.vmem_to_hbm [thread:$0]  %s4442, 256, %s22, [#allocation3], 128, 128, 8
    $region93: #{_bert_ner_jit.1} parent=1 // pred_fallthru
      _
    // Predicated region
    $region94: #{_bert_ner_jit.1} parent=1 // pred_check
      _
    $region95: #{_bert_ner_jit.1} parent=1 // pred_check_branch
      %4449 = sbr.rel (0) target = $region97
    $region96: #{_bert_ner_jit.1} parent=1 // pred_region
      _
    $region97: #{_bert_ner_jit.1} parent=1 // pred_fallthru
      _
    // Predicated region
    $region98: #{_bert_ner_jit.1} parent=1 // pred_check
      _
    $region99: #{_bert_ner_jit.1} parent=1 // pred_check_branch
      %4451 = sbr.rel (0) target = $region101
    $region100: #{_bert_ner_jit.1} parent=1 // pred_region
      %s4453 = ssub.s32 32, 32
      %4454 = vsyncadd [#allocation5], %s4453
      %s4456 = sshll.u32 [#allocation4], 4
      %s4457 = int_to_ptr.vmem [resolvable:$true] %s4456
      %4459 = dma.vmem_to_hbm [thread:$0]  %s4457, 32, %s24, [#allocation5]
    $region101: #{_bert_ner_jit.1} parent=1 // pred_fallthru
      _
    // Predicated region
    $region102: #{_bert_ner_jit.1} parent=1 // pred_check
      _
    $region103: #{_bert_ner_jit.1} parent=1 // pred_check_branch
      %4461 = sbr.rel (0) target = $region105
    $region104: #{_bert_ner_jit.1} parent=1 // pred_region
      %4462 = dma.done [#allocation3], 256
    $region105: #{_bert_ner_jit.1} parent=1 // pred_fallthru
      _
    // Predicated region
    $region106: #{_bert_ner_jit.1} parent=1 // pred_check
      _
    $region107: #{_bert_ner_jit.1} parent=1 // pred_check_branch
      %4464 = sbr.rel (0) target = $region109
    $region108: #{_bert_ner_jit.1} parent=1 // pred_region
      _
    $region109: #{_bert_ner_jit.1} parent=1 // pred_fallthru
      _
    // Predicated region
    $region110: #{_bert_ner_jit.1} parent=1 // pred_check
      _
    $region111: #{_bert_ner_jit.1} parent=1 // pred_check_branch
      %4466 = sbr.rel (0) target = $region113
    $region112: #{_bert_ner_jit.1} parent=1 // pred_region
      %4467 = dma.done [#allocation5], 32
    $region113: #{_bert_ner_jit.1} parent=1 // pred_fallthru
      _
    %4468 = vsyncpa [#allocation3], 1
    %4469 = vsyncpa [#allocation5], 1

</llo_original>
